<compile_context>
chip_gen: v7x
topology: tpu7x:2x2x1
jax: 0.10.0
libtpu: 0.0.40
codegen_flags: <defaults>
</compile_context>

<pallas_src>
import functools

import jax
import jax.numpy as jnp
from jax.experimental import pallas as pl
from jax.experimental.pallas import tpu as pltpu

NEG_SLOPE = 0.01   # default negative_slope of F.leaky_relu_
CONV_DIMS = 8      # cfg.MODEL.INPAINTER.DISCRIMINATOR.CONV_DIMS (synthetic, small)
IN_CHANNELS = 4    # input_shape.channels (synthetic, small)
KSIZE = 5


def _fused_disc_kernel(x_ref, *refs, num_layers, slope):
    """Whole SNPatchDiscriminator forward for one batch element.

    x_ref : (1, H, W*Cin)                       lane-dense NHWC activation slab
    per layer l (3 refs each):
      rsel_ref : (5*Hout_l, H_l)                0/1 vertical stride-2/pad-2 gather
      wb_ref   : (5*W_l*C_l, Wout_l*Cout_l)     folded banded conv weight
      b_ref    : (1, Wout_l*Cout_l)             bias tiled over Wout
    o_ref : (1, Hout_last, Wout_last*Cout_last)
    """
    o_ref = refs[-1]
    layer_refs = refs[:-1]
    x = x_ref[0]                                          # (H, W*C)
    for l in range(num_layers):                           # static Python unroll
        rsel = layer_refs[3 * l][...]                     # (5*Hout, H)
        wb = layer_refs[3 * l + 1][...]                   # (5*W*C, Wout*Cout)
        b = layer_refs[3 * l + 2][...]                    # (1, Wout*Cout)
        hout = rsel.shape[0] // KSIZE
        # vertical gather: y[kh*Hout+oh, :] = x_pad[2*oh+kh, :] (zero rows == pad)
        y = jnp.dot(rsel, x, preferred_element_type=jnp.float32)
        # lay the 5 kh taps out along lanes -> (Hout, 5*W*C); slices for the
        # first three layers are (8,128)-tile aligned, so this is cheap vreg moves
        ycat = jnp.concatenate(
            [y[k * hout:(k + 1) * hout, :] for k in range(KSIZE)], axis=1)
        # horizontal stride-2/pad-2 1-D conv + channel contraction: one dense dot
        o = jnp.dot(ycat, wb, preferred_element_type=jnp.float32) + b
        x = jnp.where(o >= 0.0, o, slope * o)             # leaky_relu_(0.01)
    o_ref[0] = x.astype(o_ref.dtype)                      # (Hout_last, Wout_last*Cout_last)


def spectral_normalize(w_oihw, u, n_power_iterations=1, eps=1e-12):
    """torch.nn.utils.spectral_norm forward semantics (one power iteration)."""
    cout = w_oihw.shape[0]
    wm = w_oihw.reshape(cout, -1)
    v = None
    for _ in range(n_power_iterations):
        v = wm.T @ u
        v = v / (jnp.linalg.norm(v) + eps)
        u = wm @ v
        u = u / (jnp.linalg.norm(u) + eps)
    sigma = jnp.dot(u, wm @ v)
    return w_oihw / sigma


def init_params(key, in_channels, conv_dims):
    outs = [conv_dims, 2 * conv_dims, 4 * conv_dims,
            4 * conv_dims, 4 * conv_dims, 4 * conv_dims]
    params = []
    cin = in_channels
    for cout in outs:
        key, kw, kb, ku = jax.random.split(key, 4)
        w = jax.random.normal(kw, (cout, cin, KSIZE, KSIZE), jnp.float32) * 0.1  # OIHW
        b = jax.random.normal(kb, (cout,), jnp.float32) * 0.1
        u = jax.random.normal(ku, (cout,), jnp.float32)
        u = u / (jnp.linalg.norm(u) + 1e-12)
        params.append((spectral_normalize(w, u), b))
        cin = cout
    return params


def prepare_params(params, H, W):
    """One-time weight prep (hoisted out of the forward path).

    Returns [(rsel, wb, bias_row)] per layer plus the final (H, W, C)."""
    prepped = []
    h, w = H, W
    c_last = None
    for w_oihw, b in params:
        cout, cin, kh, kw = w_oihw.shape
        assert kh == KSIZE and kw == KSIZE
        assert h % 2 == 0 and w % 2 == 0, "even spatial sizes only"
        # TODO(synk): odd H/W (torch floor-division output sizes) not handled here.
        hout, wout = h // 2, w // 2
        w_hwio = jnp.transpose(w_oihw, (2, 3, 1, 0))              # (5,5,Cin,Cout)

        # rsel[kh*Hout+oh, hh] = 1  iff  hh == 2*oh + kh - 2   (stride 2, pad 2)
        khs = jnp.arange(KSIZE)[:, None, None]
        ohs = jnp.arange(hout)[None, :, None]
        hhs = jnp.arange(h)[None, None, :]
        rsel = (hhs == 2 * ohs + khs - 2).astype(jnp.float32).reshape(KSIZE * hout, h)

        # wb[(kh*W + ww)*Cin + ci, ow*Cout + co] = w[kh, ww - 2*ow + 2, ci, co]
        kws = jnp.arange(KSIZE)[:, None, None]
        wws = jnp.arange(w)[None, :, None]
        ows = jnp.arange(wout)[None, None, :]
        msel = (wws - 2 * ows + 2 == kws).astype(jnp.float32)     # (5, W, Wout)
        wb = jnp.einsum('hqic,qwo->hwioc', w_hwio, msel)          # (5, W, Cin, Wout, Cout)
        wb = wb.reshape(KSIZE * w * cin, wout * cout)

        bias_row = jnp.tile(b, (wout,)).reshape(1, wout * cout)
        prepped.append((rsel, wb, bias_row))
        h, w, c_last = hout, wout, cout
    return prepped, (h, w, c_last)


def sn_patch_discriminator(x_nchw, prepped, out_hwc):
    """Fused forward: one pallas_call for all 6 conv+leaky_relu layers + flatten."""
    N, Cin, H, W = x_nchw.shape
    h_l, w_l, c_l = out_hwc
    # NCHW -> lane-dense (N, H, W*Cin) slab: the only per-call glue.
    x_rows = jnp.transpose(x_nchw, (0, 2, 3, 1)).reshape(N, H, W * Cin)

    flat_inputs = [x_rows]
    in_specs = [pl.BlockSpec((1, H, W * Cin), lambda n: (n, 0, 0))]
    for rsel, wb, brow in prepped:
        for arr in (rsel, wb, brow):
            flat_inputs.append(arr)
            # Full-array block, constant index_map -> stays VMEM resident across
            # grid steps (Pallas skips the re-DMA when the block index repeats).
            in_specs.append(pl.BlockSpec(arr.shape, lambda n: (0, 0)))

    kernel = functools.partial(_fused_disc_kernel,
                               num_layers=len(prepped), slope=NEG_SLOPE)
    out = pl.pallas_call(
        kernel,
        out_shape=jax.ShapeDtypeStruct((N, h_l, w_l * c_l), x_nchw.dtype),
        grid=(N,),
        in_specs=in_specs,
        out_specs=pl.BlockSpec((1, h_l, w_l * c_l), lambda n: (n, 0, 0)),
        compiler_params=pltpu.CompilerParams(
            dimension_semantics=("parallel",),
            vmem_limit_bytes=32 * 1024 * 1024),
    )(*flat_inputs)

    # (N, H, W*C) -> NHWC -> NCHW -> flatten(start_dim=1)  (spatial is 1x1 here)
    out = out.reshape(N, h_l, w_l, c_l).transpose(0, 3, 1, 2)
    return out.reshape(N, -1)


def ref_forward(x_nchw, params):
    x = x_nchw
    for w, b in params:
        x = jax.lax.conv_general_dilated(
            x, w, (2, 2), ((2, 2), (2, 2)),
            dimension_numbers=('NCHW', 'OIHW', 'NCHW'))
        x = x + b[None, :, None, None]
        x = jnp.where(x >= 0, x, NEG_SLOPE * x)
    return x.reshape(x.shape[0], -1)


if __name__ == "__main__":
    key = jax.random.PRNGKey(0)
    kx, kp = jax.random.split(key)
    # 64x64 spatial so that six stride-2 convs end at 1x1 (like the real patch disc).
    x = jax.random.normal(kx, (2, IN_CHANNELS, 64, 64), jnp.float32)
    params = init_params(kp, IN_CHANNELS, CONV_DIMS)

    # Hoisted, one-time weight preparation (spectral norm + folding).
    prepped, out_hwc = prepare_params(params, 64, 64)

    fwd = jax.jit(functools.partial(sn_patch_discriminator, out_hwc=out_hwc))
    out = jax.block_until_ready(fwd(x, prepped))
    ref = jax.block_until_ready(ref_forward(x, params))

    assert out.shape == (2, 4 * CONV_DIMS), out.shape
    assert jnp.allclose(out, ref, rtol=2e-3, atol=2e-3), \
        float(jnp.max(jnp.abs(out - ref)))
    print("KERNEL_OK")
</pallas_src>

<mosaic_0001>
module attributes {stable_mosaic.version = 11 : i64} {
  func.func @_fused_disc_kernel(%arg0: i32, %arg1: memref<1x64x256xf32, #tpu.memory_space<vmem>>, %arg2: memref<160x64xf32, #tpu.memory_space<vmem>>, %arg3: memref<1280x256xf32, #tpu.memory_space<vmem>>, %arg4: memref<1x256xf32, #tpu.memory_space<vmem>>, %arg5: memref<80x32xf32, #tpu.memory_space<vmem>>, %arg6: memref<1280x256xf32, #tpu.memory_space<vmem>>, %arg7: memref<1x256xf32, #tpu.memory_space<vmem>>, %arg8: memref<40x16xf32, #tpu.memory_space<vmem>>, %arg9: memref<1280x256xf32, #tpu.memory_space<vmem>>, %arg10: memref<1x256xf32, #tpu.memory_space<vmem>>, %arg11: memref<20x8xf32, #tpu.memory_space<vmem>>, %arg12: memref<1280x128xf32, #tpu.memory_space<vmem>>, %arg13: memref<1x128xf32, #tpu.memory_space<vmem>>, %arg14: memref<10x4xf32, #tpu.memory_space<vmem>>, %arg15: memref<640x64xf32, #tpu.memory_space<vmem>>, %arg16: memref<1x64xf32, #tpu.memory_space<vmem>>, %arg17: memref<5x2xf32, #tpu.memory_space<vmem>>, %arg18: memref<320x32xf32, #tpu.memory_space<vmem>>, %arg19: memref<1x32xf32, #tpu.memory_space<vmem>>, %arg20: memref<1x1x32xf32, #tpu.memory_space<vmem>>) attributes {dimension_semantics = [#tpu.dimension_semantics<parallel>], iteration_bounds = array<i64: 2>, scalar_prefetch = 0 : i64, scratch_operands = 0 : i64, tpu.core_type = #tpu.core_type<tc>, window_params = [{transform_indices = @transform_0, window_bounds = array<i64: 1, 64, 256>}, {pipeline_mode = #tpu.pipeline_mode<synchronous>, transform_indices = @transform_1, window_bounds = array<i64: 160, 64>}, {pipeline_mode = #tpu.pipeline_mode<synchronous>, transform_indices = @transform_2, window_bounds = array<i64: 1280, 256>}, {pipeline_mode = #tpu.pipeline_mode<synchronous>, transform_indices = @transform_3, window_bounds = array<i64: 1, 256>}, {pipeline_mode = #tpu.pipeline_mode<synchronous>, transform_indices = @transform_4, window_bounds = array<i64: 80, 32>}, {pipeline_mode = #tpu.pipeline_mode<synchronous>, transform_indices = @transform_5, window_bounds = array<i64: 1280, 256>}, {pipeline_mode = #tpu.pipeline_mode<synchronous>, transform_indices = @transform_6, window_bounds = array<i64: 1, 256>}, {pipeline_mode = #tpu.pipeline_mode<synchronous>, transform_indices = @transform_7, window_bounds = array<i64: 40, 16>}, {pipeline_mode = #tpu.pipeline_mode<synchronous>, transform_indices = @transform_8, window_bounds = array<i64: 1280, 256>}, {pipeline_mode = #tpu.pipeline_mode<synchronous>, transform_indices = @transform_9, window_bounds = array<i64: 1, 256>}, {pipeline_mode = #tpu.pipeline_mode<synchronous>, transform_indices = @transform_10, window_bounds = array<i64: 20, 8>}, {pipeline_mode = #tpu.pipeline_mode<synchronous>, transform_indices = @transform_11, window_bounds = array<i64: 1280, 128>}, {pipeline_mode = #tpu.pipeline_mode<synchronous>, transform_indices = @transform_12, window_bounds = array<i64: 1, 128>}, {pipeline_mode = #tpu.pipeline_mode<synchronous>, transform_indices = @transform_13, window_bounds = array<i64: 10, 4>}, {pipeline_mode = #tpu.pipeline_mode<synchronous>, transform_indices = @transform_14, window_bounds = array<i64: 640, 64>}, {pipeline_mode = #tpu.pipeline_mode<synchronous>, transform_indices = @transform_15, window_bounds = array<i64: 1, 64>}, {pipeline_mode = #tpu.pipeline_mode<synchronous>, transform_indices = @transform_16, window_bounds = array<i64: 5, 2>}, {pipeline_mode = #tpu.pipeline_mode<synchronous>, transform_indices = @transform_17, window_bounds = array<i64: 320, 32>}, {pipeline_mode = #tpu.pipeline_mode<synchronous>, transform_indices = @transform_18, window_bounds = array<i64: 1, 32>}, {transform_indices = @transform_19, window_bounds = array<i64: 1, 1, 32>}]} {
    %c0 = arith.constant 0 : index
    %c0_0 = arith.constant 0 : index
    %c0_1 = arith.constant 0 : index
    %0 = vector.load %arg1[%c0, %c0_0, %c0_1] : memref<1x64x256xf32, #tpu.memory_space<vmem>>, vector<1x64x256xf32>
    %1 = vector.shape_cast %0 : vector<1x64x256xf32> to vector<64x256xf32>
    %c0_2 = arith.constant 0 : index
    %c0_3 = arith.constant 0 : index
    %2 = vector.load %arg2[%c0_2, %c0_3] : memref<160x64xf32, #tpu.memory_space<vmem>>, vector<160x64xf32>
    %c0_4 = arith.constant 0 : index
    %c0_5 = arith.constant 0 : index
    %3 = vector.load %arg3[%c0_4, %c0_5] : memref<1280x256xf32, #tpu.memory_space<vmem>>, vector<1280x256xf32>
    %c0_6 = arith.constant 0 : index
    %c0_7 = arith.constant 0 : index
    %4 = vector.load %arg4[%c0_6, %c0_7] : memref<1x256xf32, #tpu.memory_space<vmem>>, vector<1x256xf32>
    %cst = arith.constant dense<0.000000e+00> : vector<160x256xf32>
    %5 = tpu.matmul %2, %1, %cst {dimension_numbers = #tpu.dot_dimension_numbers<[1], [0], [0], [1], [0, 0, 1, 1], [], []>} : vector<160x64xf32>, vector<64x256xf32>, vector<160x256xf32> -> vector<160x256xf32>
    %6 = vector.extract_strided_slice %5 {offsets = [0, 0], sizes = [32, 256], strides = [1, 1]} : vector<160x256xf32> to vector<32x256xf32>
    %7 = vector.extract_strided_slice %5 {offsets = [32, 0], sizes = [32, 256], strides = [1, 1]} : vector<160x256xf32> to vector<32x256xf32>
    %8 = vector.extract_strided_slice %5 {offsets = [64, 0], sizes = [32, 256], strides = [1, 1]} : vector<160x256xf32> to vector<32x256xf32>
    %9 = vector.extract_strided_slice %5 {offsets = [96, 0], sizes = [32, 256], strides = [1, 1]} : vector<160x256xf32> to vector<32x256xf32>
    %10 = vector.extract_strided_slice %5 {offsets = [128, 0], sizes = [32, 256], strides = [1, 1]} : vector<160x256xf32> to vector<32x256xf32>
    %11 = tpu.concatenate %6, %7, %8, %9, %10 in 1 : vector<32x256xf32>, vector<32x256xf32>, vector<32x256xf32>, vector<32x256xf32>, vector<32x256xf32> -> vector<32x1280xf32>
    %cst_8 = arith.constant dense<0.000000e+00> : vector<32x256xf32>
    %12 = tpu.matmul %11, %3, %cst_8 {dimension_numbers = #tpu.dot_dimension_numbers<[1], [0], [0], [1], [0, 0, 1, 1], [], []>} : vector<32x1280xf32>, vector<1280x256xf32>, vector<32x256xf32> -> vector<32x256xf32>
    %13 = vector.broadcast %4 : vector<1x256xf32> to vector<32x256xf32>
    %14 = arith.addf %12, %13 : vector<32x256xf32>
    %cst_9 = arith.constant 0.000000e+00 : f32
    %15 = vector.broadcast %cst_9 : f32 to vector<32x256xf32>
    %16 = arith.cmpf oge, %14, %15 : vector<32x256xf32>
    %cst_10 = arith.constant 0.00999999977 : f32
    %17 = vector.broadcast %cst_10 : f32 to vector<32x256xf32>
    %18 = arith.mulf %17, %14 : vector<32x256xf32>
    %19 = arith.select %16, %14, %18 : vector<32x256xi1>, vector<32x256xf32>
    %c0_11 = arith.constant 0 : index
    %c0_12 = arith.constant 0 : index
    %20 = vector.load %arg5[%c0_11, %c0_12] : memref<80x32xf32, #tpu.memory_space<vmem>>, vector<80x32xf32>
    %c0_13 = arith.constant 0 : index
    %c0_14 = arith.constant 0 : index
    %21 = vector.load %arg6[%c0_13, %c0_14] : memref<1280x256xf32, #tpu.memory_space<vmem>>, vector<1280x256xf32>
    %c0_15 = arith.constant 0 : index
    %c0_16 = arith.constant 0 : index
    %22 = vector.load %arg7[%c0_15, %c0_16] : memref<1x256xf32, #tpu.memory_space<vmem>>, vector<1x256xf32>
    %cst_17 = arith.constant dense<0.000000e+00> : vector<80x256xf32>
    %23 = tpu.matmul %20, %19, %cst_17 {dimension_numbers = #tpu.dot_dimension_numbers<[1], [0], [0], [1], [0, 0, 1, 1], [], []>} : vector<80x32xf32>, vector<32x256xf32>, vector<80x256xf32> -> vector<80x256xf32>
    %24 = vector.extract_strided_slice %23 {offsets = [0, 0], sizes = [16, 256], strides = [1, 1]} : vector<80x256xf32> to vector<16x256xf32>
    %25 = vector.extract_strided_slice %23 {offsets = [16, 0], sizes = [16, 256], strides = [1, 1]} : vector<80x256xf32> to vector<16x256xf32>
    %26 = vector.extract_strided_slice %23 {offsets = [32, 0], sizes = [16, 256], strides = [1, 1]} : vector<80x256xf32> to vector<16x256xf32>
    %27 = vector.extract_strided_slice %23 {offsets = [48, 0], sizes = [16, 256], strides = [1, 1]} : vector<80x256xf32> to vector<16x256xf32>
    %28 = vector.extract_strided_slice %23 {offsets = [64, 0], sizes = [16, 256], strides = [1, 1]} : vector<80x256xf32> to vector<16x256xf32>
    %29 = tpu.concatenate %24, %25, %26, %27, %28 in 1 : vector<16x256xf32>, vector<16x256xf32>, vector<16x256xf32>, vector<16x256xf32>, vector<16x256xf32> -> vector<16x1280xf32>
    %cst_18 = arith.constant dense<0.000000e+00> : vector<16x256xf32>
    %30 = tpu.matmul %29, %21, %cst_18 {dimension_numbers = #tpu.dot_dimension_numbers<[1], [0], [0], [1], [0, 0, 1, 1], [], []>} : vector<16x1280xf32>, vector<1280x256xf32>, vector<16x256xf32> -> vector<16x256xf32>
    %31 = vector.broadcast %22 : vector<1x256xf32> to vector<16x256xf32>
    %32 = arith.addf %30, %31 : vector<16x256xf32>
    %cst_19 = arith.constant 0.000000e+00 : f32
    %33 = vector.broadcast %cst_19 : f32 to vector<16x256xf32>
    %34 = arith.cmpf oge, %32, %33 : vector<16x256xf32>
    %cst_20 = arith.constant 0.00999999977 : f32
    %35 = vector.broadcast %cst_20 : f32 to vector<16x256xf32>
    %36 = arith.mulf %35, %32 : vector<16x256xf32>
    %37 = arith.select %34, %32, %36 : vector<16x256xi1>, vector<16x256xf32>
    %c0_21 = arith.constant 0 : index
    %c0_22 = arith.constant 0 : index
    %38 = vector.load %arg8[%c0_21, %c0_22] : memref<40x16xf32, #tpu.memory_space<vmem>>, vector<40x16xf32>
    %c0_23 = arith.constant 0 : index
    %c0_24 = arith.constant 0 : index
    %39 = vector.load %arg9[%c0_23, %c0_24] : memref<1280x256xf32, #tpu.memory_space<vmem>>, vector<1280x256xf32>
    %c0_25 = arith.constant 0 : index
    %c0_26 = arith.constant 0 : index
    %40 = vector.load %arg10[%c0_25, %c0_26] : memref<1x256xf32, #tpu.memory_space<vmem>>, vector<1x256xf32>
    %cst_27 = arith.constant dense<0.000000e+00> : vector<40x256xf32>
    %41 = tpu.matmul %38, %37, %cst_27 {dimension_numbers = #tpu.dot_dimension_numbers<[1], [0], [0], [1], [0, 0, 1, 1], [], []>} : vector<40x16xf32>, vector<16x256xf32>, vector<40x256xf32> -> vector<40x256xf32>
    %42 = vector.extract_strided_slice %41 {offsets = [0, 0], sizes = [8, 256], strides = [1, 1]} : vector<40x256xf32> to vector<8x256xf32>
    %43 = vector.extract_strided_slice %41 {offsets = [8, 0], sizes = [8, 256], strides = [1, 1]} : vector<40x256xf32> to vector<8x256xf32>
    %44 = vector.extract_strided_slice %41 {offsets = [16, 0], sizes = [8, 256], strides = [1, 1]} : vector<40x256xf32> to vector<8x256xf32>
    %45 = vector.extract_strided_slice %41 {offsets = [24, 0], sizes = [8, 256], strides = [1, 1]} : vector<40x256xf32> to vector<8x256xf32>
    %46 = vector.extract_strided_slice %41 {offsets = [32, 0], sizes = [8, 256], strides = [1, 1]} : vector<40x256xf32> to vector<8x256xf32>
    %47 = tpu.concatenate %42, %43, %44, %45, %46 in 1 : vector<8x256xf32>, vector<8x256xf32>, vector<8x256xf32>, vector<8x256xf32>, vector<8x256xf32> -> vector<8x1280xf32>
    %cst_28 = arith.constant dense<0.000000e+00> : vector<8x256xf32>
    %48 = tpu.matmul %47, %39, %cst_28 {dimension_numbers = #tpu.dot_dimension_numbers<[1], [0], [0], [1], [0, 0, 1, 1], [], []>} : vector<8x1280xf32>, vector<1280x256xf32>, vector<8x256xf32> -> vector<8x256xf32>
    %49 = vector.broadcast %40 : vector<1x256xf32> to vector<8x256xf32>
    %50 = arith.addf %48, %49 : vector<8x256xf32>
    %cst_29 = arith.constant 0.000000e+00 : f32
    %51 = vector.broadcast %cst_29 : f32 to vector<8x256xf32>
    %52 = arith.cmpf oge, %50, %51 : vector<8x256xf32>
    %cst_30 = arith.constant 0.00999999977 : f32
    %53 = vector.broadcast %cst_30 : f32 to vector<8x256xf32>
    %54 = arith.mulf %53, %50 : vector<8x256xf32>
    %55 = arith.select %52, %50, %54 : vector<8x256xi1>, vector<8x256xf32>
    %c0_31 = arith.constant 0 : index
    %c0_32 = arith.constant 0 : index
    %56 = vector.load %arg11[%c0_31, %c0_32] : memref<20x8xf32, #tpu.memory_space<vmem>>, vector<20x8xf32>
    %c0_33 = arith.constant 0 : index
    %c0_34 = arith.constant 0 : index
    %57 = vector.load %arg12[%c0_33, %c0_34] : memref<1280x128xf32, #tpu.memory_space<vmem>>, vector<1280x128xf32>
    %c0_35 = arith.constant 0 : index
    %c0_36 = arith.constant 0 : index
    %58 = vector.load %arg13[%c0_35, %c0_36] : memref<1x128xf32, #tpu.memory_space<vmem>>, vector<1x128xf32>
    %cst_37 = arith.constant dense<0.000000e+00> : vector<20x256xf32>
    %59 = tpu.matmul %56, %55, %cst_37 {dimension_numbers = #tpu.dot_dimension_numbers<[1], [0], [0], [1], [0, 0, 1, 1], [], []>} : vector<20x8xf32>, vector<8x256xf32>, vector<20x256xf32> -> vector<20x256xf32>
    %60 = vector.extract_strided_slice %59 {offsets = [0, 0], sizes = [4, 256], strides = [1, 1]} : vector<20x256xf32> to vector<4x256xf32>
    %61 = vector.extract_strided_slice %59 {offsets = [4, 0], sizes = [4, 256], strides = [1, 1]} : vector<20x256xf32> to vector<4x256xf32>
    %62 = vector.extract_strided_slice %59 {offsets = [8, 0], sizes = [4, 256], strides = [1, 1]} : vector<20x256xf32> to vector<4x256xf32>
    %63 = vector.extract_strided_slice %59 {offsets = [12, 0], sizes = [4, 256], strides = [1, 1]} : vector<20x256xf32> to vector<4x256xf32>
    %64 = vector.extract_strided_slice %59 {offsets = [16, 0], sizes = [4, 256], strides = [1, 1]} : vector<20x256xf32> to vector<4x256xf32>
    %65 = tpu.concatenate %60, %61, %62, %63, %64 in 1 : vector<4x256xf32>, vector<4x256xf32>, vector<4x256xf32>, vector<4x256xf32>, vector<4x256xf32> -> vector<4x1280xf32>
    %cst_38 = arith.constant dense<0.000000e+00> : vector<4x128xf32>
    %66 = tpu.matmul %65, %57, %cst_38 {dimension_numbers = #tpu.dot_dimension_numbers<[1], [0], [0], [1], [0, 0, 1, 1], [], []>} : vector<4x1280xf32>, vector<1280x128xf32>, vector<4x128xf32> -> vector<4x128xf32>
    %67 = vector.broadcast %58 : vector<1x128xf32> to vector<4x128xf32>
    %68 = arith.addf %66, %67 : vector<4x128xf32>
    %cst_39 = arith.constant 0.000000e+00 : f32
    %69 = vector.broadcast %cst_39 : f32 to vector<4x128xf32>
    %70 = arith.cmpf oge, %68, %69 : vector<4x128xf32>
    %cst_40 = arith.constant 0.00999999977 : f32
    %71 = vector.broadcast %cst_40 : f32 to vector<4x128xf32>
    %72 = arith.mulf %71, %68 : vector<4x128xf32>
    %73 = arith.select %70, %68, %72 : vector<4x128xi1>, vector<4x128xf32>
    %c0_41 = arith.constant 0 : index
    %c0_42 = arith.constant 0 : index
    %74 = vector.load %arg14[%c0_41, %c0_42] : memref<10x4xf32, #tpu.memory_space<vmem>>, vector<10x4xf32>
    %c0_43 = arith.constant 0 : index
    %c0_44 = arith.constant 0 : index
    %75 = vector.load %arg15[%c0_43, %c0_44] : memref<640x64xf32, #tpu.memory_space<vmem>>, vector<640x64xf32>
    %c0_45 = arith.constant 0 : index
    %c0_46 = arith.constant 0 : index
    %76 = vector.load %arg16[%c0_45, %c0_46] : memref<1x64xf32, #tpu.memory_space<vmem>>, vector<1x64xf32>
    %cst_47 = arith.constant dense<0.000000e+00> : vector<10x128xf32>
    %77 = tpu.matmul %74, %73, %cst_47 {dimension_numbers = #tpu.dot_dimension_numbers<[1], [0], [0], [1], [0, 0, 1, 1], [], []>} : vector<10x4xf32>, vector<4x128xf32>, vector<10x128xf32> -> vector<10x128xf32>
    %78 = vector.extract_strided_slice %77 {offsets = [0, 0], sizes = [2, 128], strides = [1, 1]} : vector<10x128xf32> to vector<2x128xf32>
    %79 = vector.extract_strided_slice %77 {offsets = [2, 0], sizes = [2, 128], strides = [1, 1]} : vector<10x128xf32> to vector<2x128xf32>
    %80 = vector.extract_strided_slice %77 {offsets = [4, 0], sizes = [2, 128], strides = [1, 1]} : vector<10x128xf32> to vector<2x128xf32>
    %81 = vector.extract_strided_slice %77 {offsets = [6, 0], sizes = [2, 128], strides = [1, 1]} : vector<10x128xf32> to vector<2x128xf32>
    %82 = vector.extract_strided_slice %77 {offsets = [8, 0], sizes = [2, 128], strides = [1, 1]} : vector<10x128xf32> to vector<2x128xf32>
    %83 = tpu.concatenate %78, %79, %80, %81, %82 in 1 : vector<2x128xf32>, vector<2x128xf32>, vector<2x128xf32>, vector<2x128xf32>, vector<2x128xf32> -> vector<2x640xf32>
    %cst_48 = arith.constant dense<0.000000e+00> : vector<2x64xf32>
    %84 = tpu.matmul %83, %75, %cst_48 {dimension_numbers = #tpu.dot_dimension_numbers<[1], [0], [0], [1], [0, 0, 1, 1], [], []>} : vector<2x640xf32>, vector<640x64xf32>, vector<2x64xf32> -> vector<2x64xf32>
    %85 = vector.broadcast %76 : vector<1x64xf32> to vector<2x64xf32>
    %86 = arith.addf %84, %85 : vector<2x64xf32>
    %cst_49 = arith.constant 0.000000e+00 : f32
    %87 = vector.broadcast %cst_49 : f32 to vector<2x64xf32>
    %88 = arith.cmpf oge, %86, %87 : vector<2x64xf32>
    %cst_50 = arith.constant 0.00999999977 : f32
    %89 = vector.broadcast %cst_50 : f32 to vector<2x64xf32>
    %90 = arith.mulf %89, %86 : vector<2x64xf32>
    %91 = arith.select %88, %86, %90 : vector<2x64xi1>, vector<2x64xf32>
    %c0_51 = arith.constant 0 : index
    %c0_52 = arith.constant 0 : index
    %92 = vector.load %arg17[%c0_51, %c0_52] : memref<5x2xf32, #tpu.memory_space<vmem>>, vector<5x2xf32>
    %c0_53 = arith.constant 0 : index
    %c0_54 = arith.constant 0 : index
    %93 = vector.load %arg18[%c0_53, %c0_54] : memref<320x32xf32, #tpu.memory_space<vmem>>, vector<320x32xf32>
    %c0_55 = arith.constant 0 : index
    %c0_56 = arith.constant 0 : index
    %94 = vector.load %arg19[%c0_55, %c0_56] : memref<1x32xf32, #tpu.memory_space<vmem>>, vector<1x32xf32>
    %cst_57 = arith.constant dense<0.000000e+00> : vector<5x64xf32>
    %95 = tpu.matmul %92, %91, %cst_57 {dimension_numbers = #tpu.dot_dimension_numbers<[1], [0], [0], [1], [0, 0, 1, 1], [], []>} : vector<5x2xf32>, vector<2x64xf32>, vector<5x64xf32> -> vector<5x64xf32>
    %96 = vector.extract_strided_slice %95 {offsets = [0, 0], sizes = [1, 64], strides = [1, 1]} : vector<5x64xf32> to vector<1x64xf32>
    %97 = vector.extract_strided_slice %95 {offsets = [1, 0], sizes = [1, 64], strides = [1, 1]} : vector<5x64xf32> to vector<1x64xf32>
    %98 = vector.extract_strided_slice %95 {offsets = [2, 0], sizes = [1, 64], strides = [1, 1]} : vector<5x64xf32> to vector<1x64xf32>
    %99 = vector.extract_strided_slice %95 {offsets = [3, 0], sizes = [1, 64], strides = [1, 1]} : vector<5x64xf32> to vector<1x64xf32>
    %100 = vector.extract_strided_slice %95 {offsets = [4, 0], sizes = [1, 64], strides = [1, 1]} : vector<5x64xf32> to vector<1x64xf32>
    %101 = tpu.concatenate %96, %97, %98, %99, %100 in 1 : vector<1x64xf32>, vector<1x64xf32>, vector<1x64xf32>, vector<1x64xf32>, vector<1x64xf32> -> vector<1x320xf32>
    %cst_58 = arith.constant dense<0.000000e+00> : vector<1x32xf32>
    %102 = tpu.matmul %101, %93, %cst_58 {dimension_numbers = #tpu.dot_dimension_numbers<[1], [0], [0], [1], [0, 0, 1, 1], [], []>} : vector<1x320xf32>, vector<320x32xf32>, vector<1x32xf32> -> vector<1x32xf32>
    %103 = arith.addf %102, %94 : vector<1x32xf32>
    %cst_59 = arith.constant 0.000000e+00 : f32
    %104 = vector.broadcast %cst_59 : f32 to vector<1x32xf32>
    %105 = arith.cmpf oge, %103, %104 : vector<1x32xf32>
    %cst_60 = arith.constant 0.00999999977 : f32
    %106 = vector.broadcast %cst_60 : f32 to vector<1x32xf32>
    %107 = arith.mulf %106, %103 : vector<1x32xf32>
    %108 = arith.select %105, %103, %107 : vector<1x32xi1>, vector<1x32xf32>
    %c0_61 = arith.constant 0 : index
    %c0_62 = arith.constant 0 : index
    %c0_63 = arith.constant 0 : index
    %109 = vector.load %arg20[%c0_61, %c0_62, %c0_63] : memref<1x1x32xf32, #tpu.memory_space<vmem>>, vector<1x1x32xf32>
    %110 = vector.shape_cast %109 : vector<1x1x32xf32> to vector<1x32xf32>
    %111 = vector.shape_cast %108 : vector<1x32xf32> to vector<1x1x32xf32>
    tpu.vector_store %arg20[%c0_61, %c0_62, %c0_63], %111 {strides = array<i32>} : memref<1x1x32xf32, #tpu.memory_space<vmem>>, vector<1x1x32xf32>,
    return
  }
  func.func @transform_0(%arg0: i32) -> (i32, i32, i32) {
    %c0_i32 = arith.constant 0 : i32
    %c0_i32_0 = arith.constant 0 : i32
    %c0_i32_1 = arith.constant 0 : i32
    return %arg0, %c0_i32, %c0_i32_0 : i32, i32, i32
  }
  func.func @transform_1(%arg0: i32) -> (i32, i32) {
    %c0_i32 = arith.constant 0 : i32
    %c0_i32_0 = arith.constant 0 : i32
    %c0_i32_1 = arith.constant 0 : i32
    return %c0_i32, %c0_i32_0 : i32, i32
  }
  func.func @transform_2(%arg0: i32) -> (i32, i32) {
    %c0_i32 = arith.constant 0 : i32
    %c0_i32_0 = arith.constant 0 : i32
    %c0_i32_1 = arith.constant 0 : i32
    return %c0_i32, %c0_i32_0 : i32, i32
  }
  func.func @transform_3(%arg0: i32) -> (i32, i32) {
    %c0_i32 = arith.constant 0 : i32
    %c0_i32_0 = arith.constant 0 : i32
    %c0_i32_1 = arith.constant 0 : i32
    return %c0_i32, %c0_i32_0 : i32, i32
  }
  func.func @transform_4(%arg0: i32) -> (i32, i32) {
    %c0_i32 = arith.constant 0 : i32
    %c0_i32_0 = arith.constant 0 : i32
    %c0_i32_1 = arith.constant 0 : i32
    return %c0_i32, %c0_i32_0 : i32, i32
  }
  func.func @transform_5(%arg0: i32) -> (i32, i32) {
    %c0_i32 = arith.constant 0 : i32
    %c0_i32_0 = arith.constant 0 : i32
    %c0_i32_1 = arith.constant 0 : i32
    return %c0_i32, %c0_i32_0 : i32, i32
  }
  func.func @transform_6(%arg0: i32) -> (i32, i32) {
    %c0_i32 = arith.constant 0 : i32
    %c0_i32_0 = arith.constant 0 : i32
    %c0_i32_1 = arith.constant 0 : i32
    return %c0_i32, %c0_i32_0 : i32, i32
  }
  func.func @transform_7(%arg0: i32) -> (i32, i32) {
    %c0_i32 = arith.constant 0 : i32
    %c0_i32_0 = arith.constant 0 : i32
    %c0_i32_1 = arith.constant 0 : i32
    return %c0_i32, %c0_i32_0 : i32, i32
  }
  func.func @transform_8(%arg0: i32) -> (i32, i32) {
    %c0_i32 = arith.constant 0 : i32
    %c0_i32_0 = arith.constant 0 : i32
    %c0_i32_1 = arith.constant 0 : i32
    return %c0_i32, %c0_i32_0 : i32, i32
  }
  func.func @transform_9(%arg0: i32) -> (i32, i32) {
    %c0_i32 = arith.constant 0 : i32
    %c0_i32_0 = arith.constant 0 : i32
    %c0_i32_1 = arith.constant 0 : i32
    return %c0_i32, %c0_i32_0 : i32, i32
  }
  func.func @transform_10(%arg0: i32) -> (i32, i32) {
    %c0_i32 = arith.constant 0 : i32
    %c0_i32_0 = arith.constant 0 : i32
    %c0_i32_1 = arith.constant 0 : i32
    return %c0_i32, %c0_i32_0 : i32, i32
  }
  func.func @transform_11(%arg0: i32) -> (i32, i32) {
    %c0_i32 = arith.constant 0 : i32
    %c0_i32_0 = arith.constant 0 : i32
    %c0_i32_1 = arith.constant 0 : i32
    return %c0_i32, %c0_i32_0 : i32, i32
  }
  func.func @transform_12(%arg0: i32) -> (i32, i32) {
    %c0_i32 = arith.constant 0 : i32
    %c0_i32_0 = arith.constant 0 : i32
    %c0_i32_1 = arith.constant 0 : i32
    return %c0_i32, %c0_i32_0 : i32, i32
  }
  func.func @transform_13(%arg0: i32) -> (i32, i32) {
    %c0_i32 = arith.constant 0 : i32
    %c0_i32_0 = arith.constant 0 : i32
    %c0_i32_1 = arith.constant 0 : i32
    return %c0_i32, %c0_i32_0 : i32, i32
  }
  func.func @transform_14(%arg0: i32) -> (i32, i32) {
    %c0_i32 = arith.constant 0 : i32
    %c0_i32_0 = arith.constant 0 : i32
    %c0_i32_1 = arith.constant 0 : i32
    return %c0_i32, %c0_i32_0 : i32, i32
  }
  func.func @transform_15(%arg0: i32) -> (i32, i32) {
    %c0_i32 = arith.constant 0 : i32
    %c0_i32_0 = arith.constant 0 : i32
    %c0_i32_1 = arith.constant 0 : i32
    return %c0_i32, %c0_i32_0 : i32, i32
  }
  func.func @transform_16(%arg0: i32) -> (i32, i32) {
    %c0_i32 = arith.constant 0 : i32
    %c0_i32_0 = arith.constant 0 : i32
    %c0_i32_1 = arith.constant 0 : i32
    return %c0_i32, %c0_i32_0 : i32, i32
  }
  func.func @transform_17(%arg0: i32) -> (i32, i32) {
    %c0_i32 = arith.constant 0 : i32
    %c0_i32_0 = arith.constant 0 : i32
    %c0_i32_1 = arith.constant 0 : i32
    return %c0_i32, %c0_i32_0 : i32, i32
  }
  func.func @transform_18(%arg0: i32) -> (i32, i32) {
    %c0_i32 = arith.constant 0 : i32
    %c0_i32_0 = arith.constant 0 : i32
    %c0_i32_1 = arith.constant 0 : i32
    return %c0_i32, %c0_i32_0 : i32, i32
  }
  func.func @transform_19(%arg0: i32) -> (i32, i32, i32) {
    %c0_i32 = arith.constant 0 : i32
    %c0_i32_0 = arith.constant 0 : i32
    %c0_i32_1 = arith.constant 0 : i32
    return %arg0, %c0_i32, %c0_i32_0 : i32, i32, i32
  }
}

</mosaic_0001>

<llo_original>
// kernel: sn_patch_discriminator.1
$region0: #{sn_patch_discriminator.1}
  #allocation0 [shape = 'u32[]', space=smem, size = 0x4, offset = 0x4, fixed_abs, tag = 'smem constant byte address 0x4 - core index']
  #allocation1 [shape = 'u32[144,128]{1,0:T(1,128)}', space=vmem, size = 0x12000, scoped, tag = 'internal scratch']
  %s0 = inlined_call_operand.vmem [shape: f32[2,64,256], index: 0, kind: input, shape index: {}]
  %s1 = inlined_call_operand.vmem [shape: f32[160,64], index: 1, kind: input, shape index: {}]
  %s2 = inlined_call_operand.vmem [shape: f32[1280,256], index: 2, kind: input, shape index: {}]
  %s3 = inlined_call_operand.vmem [shape: f32[1,256], index: 3, kind: input, shape index: {}]
  %s4 = inlined_call_operand.vmem [shape: f32[80,32], index: 4, kind: input, shape index: {}]
  %s5 = inlined_call_operand.hbm [shape: f32[1280,256], index: 5, kind: input, shape index: {}]
  %s6 = inlined_call_operand.vmem [shape: f32[1,256], index: 6, kind: input, shape index: {}]
  %s7 = inlined_call_operand.vmem [shape: f32[40,16], index: 7, kind: input, shape index: {}]
  %s8 = inlined_call_operand.hbm [shape: f32[1280,256], index: 8, kind: input, shape index: {}]
  %s9 = inlined_call_operand.vmem [shape: f32[1,256], index: 9, kind: input, shape index: {}]
  %s10 = inlined_call_operand.vmem [shape: f32[20,8], index: 10, kind: input, shape index: {}]
  %s11 = inlined_call_operand.hbm [shape: f32[1280,128], index: 11, kind: input, shape index: {}]
  %s12 = inlined_call_operand.vmem [shape: f32[1,128], index: 12, kind: input, shape index: {}]
  %s13 = inlined_call_operand.vmem [shape: f32[10,4], index: 13, kind: input, shape index: {}]
  %s14 = inlined_call_operand.vmem [shape: f32[640,64], index: 14, kind: input, shape index: {}]
  %s15 = inlined_call_operand.vmem [shape: f32[1,64], index: 15, kind: input, shape index: {}]
  %s16 = inlined_call_operand.vmem [shape: f32[5,2], index: 16, kind: input, shape index: {}]
  %s17 = inlined_call_operand.vmem [shape: f32[320,32], index: 17, kind: input, shape index: {}]
  %s18 = inlined_call_operand.vmem [shape: f32[1,32], index: 18, kind: input, shape index: {}]
  %s19 = inlined_call_operand.hbm [shape: f32[2,1,32], index: 19, kind: output, shape index: {}]
  %s20 = sld [smem:[#allocation0]]
  $region121: #{sn_patch_discriminator.1} parent=0
    _
  %s22 = ssub.s32 1, %s20
  %s23 = scalar_select 0, %s22, %s20
  $region1: #{sn_patch_discriminator.1} parent=0
    #allocation2 [shape = 'u8[1310720]{0}', space=vmem, size = 0x140000, scoped, tag = 'input window, operand 5, single buffered']
    #allocation3 [shape = 's32[2]{0}', space=sflag, size = 0x8, scoped, tag = 'scoped memory for sn_patch_discriminator.1']
    #allocation4 [shape = 's32[2]{0}', space=sflag, size = 0x8, scoped, tag = 'scoped memory for sn_patch_discriminator.1']
    #allocation5 [shape = 'u8[1310720]{0}', space=vmem, size = 0x140000, scoped, tag = 'input window, operand 8, single buffered']
    #allocation6 [shape = 's32[1]{0}', space=sflag, size = 0x4, scoped, tag = 'scoped memory for sn_patch_discriminator.1']
    #allocation7 [shape = 'u8[655360]{0}', space=vmem, size = 0xa0000, scoped, tag = 'input window, operand 11, single buffered']
    #allocation8 [shape = 'u8[1024]{0}', space=vmem, size = 0x400, scoped, tag = 'output window, operand 0']
    %24 = vsyncpa [#allocation3], 0
    %25 = vsyncpa [#allocation6], 0
    %26 = vsyncpa [#allocation4], 0
    %s27 = scalar_lea.sflag [#allocation4], 1
    %28 = vsyncpa %s27, 0
    loop: start=0, step=1, limit=4
    $region2: #{sn_patch_discriminator.1} parent=1 // loop_pre_header
      _
    $region3: #{sn_patch_discriminator.1} parent=1 // loop_header
      %s30 = sphi 0, %s34
      %p31 = scmp.ge.s32.totalorder %s30, 4
      %s40 = sphi 0, %s42
      %s43 = sphi 0, %s40
      %s44 = sphi 0, %s43
      %s60 = sphi 0, %s44
      %s64 = sphi 0, %s64
      %s66 = sphi 0, %s64
      %s67 = sphi 0, %s66
      %s81 = sphi 0, %s67
      %s85 = sphi 0, %s85
      %s87 = sphi 0, %s85
      %s88 = sphi 0, %s87
      %s102 = sphi 0, %s88
      %s106 = sphi 0, %s106
      %s108 = sphi 0, %s106
      %s109 = sphi 0, %s108
      %s123 = sphi 0, %s109
      %s127 = sphi 0, %s127
      %s129 = sphi 0, %s127
      %s130 = sphi 0, %s129
      %s144 = sphi 0, %s130
      %s148 = sphi 0, %s148
      %s150 = sphi 0, %s148
      %s151 = sphi 0, %s150
      %s165 = sphi 0, %s151
      %s169 = sphi 0, %s169
      %s171 = sphi 0, %s169
      %s172 = sphi 0, %s171
      %s186 = sphi 0, %s172
      %s190 = sphi 0, %s190
      %s192 = sphi 0, %s190
      %s193 = sphi 0, %s192
      %s207 = sphi 0, %s193
      %s211 = sphi 0, %s211
      %s213 = sphi 0, %s211
      %s214 = sphi 0, %s213
      %s228 = sphi 0, %s214
      %s232 = sphi 0, %s232
      %s234 = sphi 0, %s232
      %s235 = sphi 0, %s234
      %s249 = sphi 0, %s235
      %s253 = sphi 0, %s253
      %s255 = sphi 0, %s253
      %s256 = sphi 0, %s255
      %s270 = sphi 0, %s256
      %s274 = sphi 0, %s274
      %s276 = sphi 0, %s274
      %s277 = sphi 0, %s276
      %s291 = sphi 0, %s277
      %s295 = sphi 0, %s295
      %s297 = sphi 0, %s295
      %s298 = sphi 0, %s297
      %s312 = sphi 0, %s298
      %s316 = sphi 0, %s316
      %s318 = sphi 0, %s316
      %s319 = sphi 0, %s318
      %s333 = sphi 0, %s319
      %s337 = sphi 0, %s337
      %s339 = sphi 0, %s337
      %s340 = sphi 0, %s339
      %s354 = sphi 0, %s340
      %s358 = sphi 0, %s358
      %s360 = sphi 0, %s358
      %s361 = sphi 0, %s360
      %s375 = sphi 0, %s361
      %s379 = sphi 0, %s379
      %s381 = sphi 0, %s379
      %s382 = sphi 0, %s381
      %s396 = sphi 0, %s382
      %s400 = sphi 0, %s400
      %s402 = sphi 0, %s400
      %s403 = sphi 0, %s402
      %s417 = sphi 0, %s403
      %s421 = sphi 0, %s421
      %s423 = sphi 0, %s421
      %s424 = sphi 0, %s423
      %s438 = sphi 0, %s424
      %s444 = sphi 0, %s446
      %s447 = sphi 0, %s444
      %s448 = sphi 0, %s447
      %s464 = sphi 0, %s448
    $region4: #{sn_patch_discriminator.1} parent=1 // loop_header_branch
      %33 = sbr.rel (%p31) target = $region8
    $region5: #{sn_patch_discriminator.1} parent=1 // loop_body
      %s35 = ssub.s32 %s30, 1
      %s36 = ssub.s32 %s30, 2
      %s37 = sadd.s32 %s30, 1
      %s38 = ssub.s32 %s30, %s37
      %p39 = scmp.eq.s32.totalorder %s38, 0
      %s41 = sadd.s32 %s40, 1
      %s42 = scalar_select %p39, %s40, %s41
      %p45 = pneg %p39
      %p46 = scmp.eq.s32.totalorder %s30, 1
      %p47 = por %p45, %p46
      %p48 = scmp.ne.s32.totalorder %s40, %s43
      %p49 = scmp.eq.s32.totalorder %s30, 0
      %p50 = por %p48, %p49
      %p51 = scmp.ne.s32.totalorder %s40, %s43
      %p52 = scmp.eq.s32.totalorder %s35, 1
      %p53 = por %p51, %p52
      %p54 = scmp.ne.s32.totalorder %s43, %s44
      %p55 = scmp.eq.s32.totalorder %s35, 0
      %p56 = por %p54, %p55
      %p57 = scmp.ne.s32.totalorder %s43, %s44
      %p58 = scmp.eq.s32.totalorder %s36, 1
      %p59 = por %p57, %p58
      %p61 = scmp.ne.s32.totalorder %s44, %s60
      %p62 = scmp.eq.s32.totalorder %s36, 0
      %p63 = por %p61, %p62
      %s65 = sadd.s32 %s64, 1
      %p68 = scmp.eq.s32.totalorder %s30, 1
      %p69 = scmp.ne.s32.totalorder %s64, %s66
      %p70 = scmp.eq.s32.totalorder %s30, 0
      %p71 = por %p69, %p70
      %p72 = scmp.ne.s32.totalorder %s64, %s66
      %p73 = scmp.eq.s32.totalorder %s35, 1
      %p74 = por %p72, %p73
      %p75 = scmp.ne.s32.totalorder %s66, %s67
      %p76 = scmp.eq.s32.totalorder %s35, 0
      %p77 = por %p75, %p76
      %p78 = scmp.ne.s32.totalorder %s66, %s67
      %p79 = scmp.eq.s32.totalorder %s36, 1
      %p80 = por %p78, %p79
      %p82 = scmp.ne.s32.totalorder %s67, %s81
      %p83 = scmp.eq.s32.totalorder %s36, 0
      %p84 = por %p82, %p83
      %s86 = sadd.s32 %s85, 1
      %p89 = scmp.eq.s32.totalorder %s30, 1
      %p90 = scmp.ne.s32.totalorder %s85, %s87
      %p91 = scmp.eq.s32.totalorder %s30, 0
      %p92 = por %p90, %p91
      %p93 = scmp.ne.s32.totalorder %s85, %s87
      %p94 = scmp.eq.s32.totalorder %s35, 1
      %p95 = por %p93, %p94
      %p96 = scmp.ne.s32.totalorder %s87, %s88
      %p97 = scmp.eq.s32.totalorder %s35, 0
      %p98 = por %p96, %p97
      %p99 = scmp.ne.s32.totalorder %s87, %s88
      %p100 = scmp.eq.s32.totalorder %s36, 1
      %p101 = por %p99, %p100
      %p103 = scmp.ne.s32.totalorder %s88, %s102
      %p104 = scmp.eq.s32.totalorder %s36, 0
      %p105 = por %p103, %p104
      %s107 = sadd.s32 %s106, 1
      %p110 = scmp.eq.s32.totalorder %s30, 1
      %p111 = scmp.ne.s32.totalorder %s106, %s108
      %p112 = scmp.eq.s32.totalorder %s30, 0
      %p113 = por %p111, %p112
      %p114 = scmp.ne.s32.totalorder %s106, %s108
      %p115 = scmp.eq.s32.totalorder %s35, 1
      %p116 = por %p114, %p115
      %p117 = scmp.ne.s32.totalorder %s108, %s109
      %p118 = scmp.eq.s32.totalorder %s35, 0
      %p119 = por %p117, %p118
      %p120 = scmp.ne.s32.totalorder %s108, %s109
      %p121 = scmp.eq.s32.totalorder %s36, 1
      %p122 = por %p120, %p121
      %p124 = scmp.ne.s32.totalorder %s109, %s123
      %p125 = scmp.eq.s32.totalorder %s36, 0
      %p126 = por %p124, %p125
      %s128 = sadd.s32 %s127, 1
      %p131 = scmp.eq.s32.totalorder %s30, 1
      %p132 = scmp.ne.s32.totalorder %s127, %s129
      %p133 = scmp.eq.s32.totalorder %s30, 0
      %p134 = por %p132, %p133
      %p135 = scmp.ne.s32.totalorder %s127, %s129
      %p136 = scmp.eq.s32.totalorder %s35, 1
      %p137 = por %p135, %p136
      %p138 = scmp.ne.s32.totalorder %s129, %s130
      %p139 = scmp.eq.s32.totalorder %s35, 0
      %p140 = por %p138, %p139
      %p141 = scmp.ne.s32.totalorder %s129, %s130
      %p142 = scmp.eq.s32.totalorder %s36, 1
      %p143 = por %p141, %p142
      %p145 = scmp.ne.s32.totalorder %s130, %s144
      %p146 = scmp.eq.s32.totalorder %s36, 0
      %p147 = por %p145, %p146
      %s149 = sadd.s32 %s148, 1
      %p152 = scmp.eq.s32.totalorder %s30, 1
      %p153 = scmp.ne.s32.totalorder %s148, %s150
      %p154 = scmp.eq.s32.totalorder %s30, 0
      %p155 = por %p153, %p154
      %p156 = scmp.ne.s32.totalorder %s148, %s150
      %p157 = scmp.eq.s32.totalorder %s35, 1
      %p158 = por %p156, %p157
      %p159 = scmp.ne.s32.totalorder %s150, %s151
      %p160 = scmp.eq.s32.totalorder %s35, 0
      %p161 = por %p159, %p160
      %p162 = scmp.ne.s32.totalorder %s150, %s151
      %p163 = scmp.eq.s32.totalorder %s36, 1
      %p164 = por %p162, %p163
      %p166 = scmp.ne.s32.totalorder %s151, %s165
      %p167 = scmp.eq.s32.totalorder %s36, 0
      %p168 = por %p166, %p167
      %s170 = sadd.s32 %s169, 1
      %p173 = scmp.eq.s32.totalorder %s30, 1
      %p174 = scmp.ne.s32.totalorder %s169, %s171
      %p175 = scmp.eq.s32.totalorder %s30, 0
      %p176 = por %p174, %p175
      %p177 = scmp.ne.s32.totalorder %s169, %s171
      %p178 = scmp.eq.s32.totalorder %s35, 1
      %p179 = por %p177, %p178
      %p180 = scmp.ne.s32.totalorder %s171, %s172
      %p181 = scmp.eq.s32.totalorder %s35, 0
      %p182 = por %p180, %p181
      %p183 = scmp.ne.s32.totalorder %s171, %s172
      %p184 = scmp.eq.s32.totalorder %s36, 1
      %p185 = por %p183, %p184
      %p187 = scmp.ne.s32.totalorder %s172, %s186
      %p188 = scmp.eq.s32.totalorder %s36, 0
      %p189 = por %p187, %p188
      %s191 = sadd.s32 %s190, 1
      %p194 = scmp.eq.s32.totalorder %s30, 1
      %p195 = scmp.ne.s32.totalorder %s190, %s192
      %p196 = scmp.eq.s32.totalorder %s30, 0
      %p197 = por %p195, %p196
      %p198 = scmp.ne.s32.totalorder %s190, %s192
      %p199 = scmp.eq.s32.totalorder %s35, 1
      %p200 = por %p198, %p199
      %p201 = scmp.ne.s32.totalorder %s192, %s193
      %p202 = scmp.eq.s32.totalorder %s35, 0
      %p203 = por %p201, %p202
      %p204 = scmp.ne.s32.totalorder %s192, %s193
      %p205 = scmp.eq.s32.totalorder %s36, 1
      %p206 = por %p204, %p205
      %p208 = scmp.ne.s32.totalorder %s193, %s207
      %p209 = scmp.eq.s32.totalorder %s36, 0
      %p210 = por %p208, %p209
      %s212 = sadd.s32 %s211, 1
      %p215 = scmp.eq.s32.totalorder %s30, 1
      %p216 = scmp.ne.s32.totalorder %s211, %s213
      %p217 = scmp.eq.s32.totalorder %s30, 0
      %p218 = por %p216, %p217
      %p219 = scmp.ne.s32.totalorder %s211, %s213
      %p220 = scmp.eq.s32.totalorder %s35, 1
      %p221 = por %p219, %p220
      %p222 = scmp.ne.s32.totalorder %s213, %s214
      %p223 = scmp.eq.s32.totalorder %s35, 0
      %p224 = por %p222, %p223
      %p225 = scmp.ne.s32.totalorder %s213, %s214
      %p226 = scmp.eq.s32.totalorder %s36, 1
      %p227 = por %p225, %p226
      %p229 = scmp.ne.s32.totalorder %s214, %s228
      %p230 = scmp.eq.s32.totalorder %s36, 0
      %p231 = por %p229, %p230
      %s233 = sadd.s32 %s232, 1
      %p236 = scmp.eq.s32.totalorder %s30, 1
      %p237 = scmp.ne.s32.totalorder %s232, %s234
      %p238 = scmp.eq.s32.totalorder %s30, 0
      %p239 = por %p237, %p238
      %p240 = scmp.ne.s32.totalorder %s232, %s234
      %p241 = scmp.eq.s32.totalorder %s35, 1
      %p242 = por %p240, %p241
      %p243 = scmp.ne.s32.totalorder %s234, %s235
      %p244 = scmp.eq.s32.totalorder %s35, 0
      %p245 = por %p243, %p244
      %p246 = scmp.ne.s32.totalorder %s234, %s235
      %p247 = scmp.eq.s32.totalorder %s36, 1
      %p248 = por %p246, %p247
      %p250 = scmp.ne.s32.totalorder %s235, %s249
      %p251 = scmp.eq.s32.totalorder %s36, 0
      %p252 = por %p250, %p251
      %s254 = sadd.s32 %s253, 1
      %p257 = scmp.eq.s32.totalorder %s30, 1
      %p258 = scmp.ne.s32.totalorder %s253, %s255
      %p259 = scmp.eq.s32.totalorder %s30, 0
      %p260 = por %p258, %p259
      %p261 = scmp.ne.s32.totalorder %s253, %s255
      %p262 = scmp.eq.s32.totalorder %s35, 1
      %p263 = por %p261, %p262
      %p264 = scmp.ne.s32.totalorder %s255, %s256
      %p265 = scmp.eq.s32.totalorder %s35, 0
      %p266 = por %p264, %p265
      %p267 = scmp.ne.s32.totalorder %s255, %s256
      %p268 = scmp.eq.s32.totalorder %s36, 1
      %p269 = por %p267, %p268
      %p271 = scmp.ne.s32.totalorder %s256, %s270
      %p272 = scmp.eq.s32.totalorder %s36, 0
      %p273 = por %p271, %p272
      %s275 = sadd.s32 %s274, 1
      %p278 = scmp.eq.s32.totalorder %s30, 1
      %p279 = scmp.ne.s32.totalorder %s274, %s276
      %p280 = scmp.eq.s32.totalorder %s30, 0
      %p281 = por %p279, %p280
      %p282 = scmp.ne.s32.totalorder %s274, %s276
      %p283 = scmp.eq.s32.totalorder %s35, 1
      %p284 = por %p282, %p283
      %p285 = scmp.ne.s32.totalorder %s276, %s277
      %p286 = scmp.eq.s32.totalorder %s35, 0
      %p287 = por %p285, %p286
      %p288 = scmp.ne.s32.totalorder %s276, %s277
      %p289 = scmp.eq.s32.totalorder %s36, 1
      %p290 = por %p288, %p289
      %p292 = scmp.ne.s32.totalorder %s277, %s291
      %p293 = scmp.eq.s32.totalorder %s36, 0
      %p294 = por %p292, %p293
      %s296 = sadd.s32 %s295, 1
      %p299 = scmp.eq.s32.totalorder %s30, 1
      %p300 = scmp.ne.s32.totalorder %s295, %s297
      %p301 = scmp.eq.s32.totalorder %s30, 0
      %p302 = por %p300, %p301
      %p303 = scmp.ne.s32.totalorder %s295, %s297
      %p304 = scmp.eq.s32.totalorder %s35, 1
      %p305 = por %p303, %p304
      %p306 = scmp.ne.s32.totalorder %s297, %s298
      %p307 = scmp.eq.s32.totalorder %s35, 0
      %p308 = por %p306, %p307
      %p309 = scmp.ne.s32.totalorder %s297, %s298
      %p310 = scmp.eq.s32.totalorder %s36, 1
      %p311 = por %p309, %p310
      %p313 = scmp.ne.s32.totalorder %s298, %s312
      %p314 = scmp.eq.s32.totalorder %s36, 0
      %p315 = por %p313, %p314
      %s317 = sadd.s32 %s316, 1
      %p320 = scmp.eq.s32.totalorder %s30, 1
      %p321 = scmp.ne.s32.totalorder %s316, %s318
      %p322 = scmp.eq.s32.totalorder %s30, 0
      %p323 = por %p321, %p322
      %p324 = scmp.ne.s32.totalorder %s316, %s318
      %p325 = scmp.eq.s32.totalorder %s35, 1
      %p326 = por %p324, %p325
      %p327 = scmp.ne.s32.totalorder %s318, %s319
      %p328 = scmp.eq.s32.totalorder %s35, 0
      %p329 = por %p327, %p328
      %p330 = scmp.ne.s32.totalorder %s318, %s319
      %p331 = scmp.eq.s32.totalorder %s36, 1
      %p332 = por %p330, %p331
      %p334 = scmp.ne.s32.totalorder %s319, %s333
      %p335 = scmp.eq.s32.totalorder %s36, 0
      %p336 = por %p334, %p335
      %s338 = sadd.s32 %s337, 1
      %p341 = scmp.eq.s32.totalorder %s30, 1
      %p342 = scmp.ne.s32.totalorder %s337, %s339
      %p343 = scmp.eq.s32.totalorder %s30, 0
      %p344 = por %p342, %p343
      %p345 = scmp.ne.s32.totalorder %s337, %s339
      %p346 = scmp.eq.s32.totalorder %s35, 1
      %p347 = por %p345, %p346
      %p348 = scmp.ne.s32.totalorder %s339, %s340
      %p349 = scmp.eq.s32.totalorder %s35, 0
      %p350 = por %p348, %p349
      %p351 = scmp.ne.s32.totalorder %s339, %s340
      %p352 = scmp.eq.s32.totalorder %s36, 1
      %p353 = por %p351, %p352
      %p355 = scmp.ne.s32.totalorder %s340, %s354
      %p356 = scmp.eq.s32.totalorder %s36, 0
      %p357 = por %p355, %p356
      %s359 = sadd.s32 %s358, 1
      %p362 = scmp.eq.s32.totalorder %s30, 1
      %p363 = scmp.ne.s32.totalorder %s358, %s360
      %p364 = scmp.eq.s32.totalorder %s30, 0
      %p365 = por %p363, %p364
      %p366 = scmp.ne.s32.totalorder %s358, %s360
      %p367 = scmp.eq.s32.totalorder %s35, 1
      %p368 = por %p366, %p367
      %p369 = scmp.ne.s32.totalorder %s360, %s361
      %p370 = scmp.eq.s32.totalorder %s35, 0
      %p371 = por %p369, %p370
      %p372 = scmp.ne.s32.totalorder %s360, %s361
      %p373 = scmp.eq.s32.totalorder %s36, 1
      %p374 = por %p372, %p373
      %p376 = scmp.ne.s32.totalorder %s361, %s375
      %p377 = scmp.eq.s32.totalorder %s36, 0
      %p378 = por %p376, %p377
      %s380 = sadd.s32 %s379, 1
      %p383 = scmp.eq.s32.totalorder %s30, 1
      %p384 = scmp.ne.s32.totalorder %s379, %s381
      %p385 = scmp.eq.s32.totalorder %s30, 0
      %p386 = por %p384, %p385
      %p387 = scmp.ne.s32.totalorder %s379, %s381
      %p388 = scmp.eq.s32.totalorder %s35, 1
      %p389 = por %p387, %p388
      %p390 = scmp.ne.s32.totalorder %s381, %s382
      %p391 = scmp.eq.s32.totalorder %s35, 0
      %p392 = por %p390, %p391
      %p393 = scmp.ne.s32.totalorder %s381, %s382
      %p394 = scmp.eq.s32.totalorder %s36, 1
      %p395 = por %p393, %p394
      %p397 = scmp.ne.s32.totalorder %s382, %s396
      %p398 = scmp.eq.s32.totalorder %s36, 0
      %p399 = por %p397, %p398
      %s401 = sadd.s32 %s400, 1
      %p404 = scmp.eq.s32.totalorder %s30, 1
      %p405 = scmp.ne.s32.totalorder %s400, %s402
      %p406 = scmp.eq.s32.totalorder %s30, 0
      %p407 = por %p405, %p406
      %p408 = scmp.ne.s32.totalorder %s400, %s402
      %p409 = scmp.eq.s32.totalorder %s35, 1
      %p410 = por %p408, %p409
      %p411 = scmp.ne.s32.totalorder %s402, %s403
      %p412 = scmp.eq.s32.totalorder %s35, 0
      %p413 = por %p411, %p412
      %p414 = scmp.ne.s32.totalorder %s402, %s403
      %p415 = scmp.eq.s32.totalorder %s36, 1
      %p416 = por %p414, %p415
      %p418 = scmp.ne.s32.totalorder %s403, %s417
      %p419 = scmp.eq.s32.totalorder %s36, 0
      %p420 = por %p418, %p419
      %s422 = sadd.s32 %s421, 1
      %p425 = scmp.eq.s32.totalorder %s30, 1
      %p426 = scmp.ne.s32.totalorder %s421, %s423
      %p427 = scmp.eq.s32.totalorder %s30, 0
      %p428 = por %p426, %p427
      %p429 = scmp.ne.s32.totalorder %s421, %s423
      %p430 = scmp.eq.s32.totalorder %s35, 1
      %p431 = por %p429, %p430
      %p432 = scmp.ne.s32.totalorder %s423, %s424
      %p433 = scmp.eq.s32.totalorder %s35, 0
      %p434 = por %p432, %p433
      %p435 = scmp.ne.s32.totalorder %s423, %s424
      %p436 = scmp.eq.s32.totalorder %s36, 1
      %p437 = por %p435, %p436
      %p439 = scmp.ne.s32.totalorder %s424, %s438
      %p440 = scmp.eq.s32.totalorder %s36, 0
      %p441 = por %p439, %p440
      %s442 = ssub.s32 %s30, %s37
      %p443 = scmp.eq.s32.totalorder %s442, 0
      %s445 = sadd.s32 %s444, 1
      %s446 = scalar_select %p443, %s444, %s445
      %p449 = pneg %p443
      %p450 = scmp.eq.s32.totalorder %s30, 1
      %p451 = por %p449, %p450
      %p452 = scmp.ne.s32.totalorder %s444, %s447
      %p453 = scmp.eq.s32.totalorder %s30, 0
      %p454 = por %p452, %p453
      %p455 = scmp.ne.s32.totalorder %s444, %s447
      %p456 = scmp.eq.s32.totalorder %s35, 1
      %p457 = por %p455, %p456
      %p458 = scmp.ne.s32.totalorder %s447, %s448
      %p459 = scmp.eq.s32.totalorder %s35, 0
      %p460 = por %p458, %p459
      %p461 = scmp.ne.s32.totalorder %s447, %s448
      %p462 = scmp.eq.s32.totalorder %s36, 1
      %p463 = por %p461, %p462
      %p465 = scmp.ne.s32.totalorder %s448, %s464
      %p466 = scmp.eq.s32.totalorder %s36, 0
      %p467 = por %p465, %p466
      %p468 = scmp.le.s32.totalorder 1, %s30
      %p469 = scmp.lt.s32.totalorder %s30, 3
      %p470 = pnand %p468, %p469
      %p471 = pneg %p470
      // Predicated region
      $region9: #{sn_patch_discriminator.1} parent=5 // pred_check
        _
      $region10: #{sn_patch_discriminator.1} parent=5 // pred_check_branch
        %473 = sbr.rel (%p470) target = $region12
      $region11: #{sn_patch_discriminator.1} parent=5 // pred_region
        %s474 = ssub.s32 %s30, 1
        // Predicated region
        $region13: #{sn_patch_discriminator.1} parent=11 // pred_check
          %p475 = pneg %p77
        $region14: #{sn_patch_discriminator.1} parent=11 // pred_check_branch
          %477 = sbr.rel (%p475) target = $region16
        $region15: #{sn_patch_discriminator.1} parent=11 // pred_region
          _
        $region16: #{sn_patch_discriminator.1} parent=11 // pred_fallthru
          _
        // Predicated region
        $region17: #{sn_patch_discriminator.1} parent=11 // pred_check
          %p478 = pneg %p98
        $region18: #{sn_patch_discriminator.1} parent=11 // pred_check_branch
          %480 = sbr.rel (%p478) target = $region20
        $region19: #{sn_patch_discriminator.1} parent=11 // pred_region
          _
        $region20: #{sn_patch_discriminator.1} parent=11 // pred_fallthru
          _
        // Predicated region
        $region21: #{sn_patch_discriminator.1} parent=11 // pred_check
          %p481 = pneg %p119
        $region22: #{sn_patch_discriminator.1} parent=11 // pred_check_branch
          %483 = sbr.rel (%p481) target = $region24
        $region23: #{sn_patch_discriminator.1} parent=11 // pred_region
          _
        $region24: #{sn_patch_discriminator.1} parent=11 // pred_fallthru
          _
        // Predicated region
        $region25: #{sn_patch_discriminator.1} parent=11 // pred_check
          %p484 = pneg %p140
        $region26: #{sn_patch_discriminator.1} parent=11 // pred_check_branch
          %486 = sbr.rel (%p484) target = $region28
        $region27: #{sn_patch_discriminator.1} parent=11 // pred_region
          _
        $region28: #{sn_patch_discriminator.1} parent=11 // pred_fallthru
          _
        // Predicated region
        $region29: #{sn_patch_discriminator.1} parent=11 // pred_check
          %p487 = pneg %p161
        $region30: #{sn_patch_discriminator.1} parent=11 // pred_check_branch
          %489 = sbr.rel (%p487) target = $region32
        $region31: #{sn_patch_discriminator.1} parent=11 // pred_region
          %s491 = ssub.s32 40960, 40960
          %492 = vsyncadd [#allocation3], %s491
          %s493 = sshll.u32 [#allocation2], 4
          %s494 = int_to_ptr.vmem [resolvable:$true] %s493
          %499 = dma.hbm_to_vmem [thread:$0]  %s5, 40960, %s494, [#allocation3], 256, 256, 16
        $region32: #{sn_patch_discriminator.1} parent=11 // pred_fallthru
          _
        // Predicated region
        $region33: #{sn_patch_discriminator.1} parent=11 // pred_check
          %p500 = pneg %p182
        $region34: #{sn_patch_discriminator.1} parent=11 // pred_check_branch
          %502 = sbr.rel (%p500) target = $region36
        $region35: #{sn_patch_discriminator.1} parent=11 // pred_region
          _
        $region36: #{sn_patch_discriminator.1} parent=11 // pred_fallthru
          _
        // Predicated region
        $region37: #{sn_patch_discriminator.1} parent=11 // pred_check
          %p503 = pneg %p203
        $region38: #{sn_patch_discriminator.1} parent=11 // pred_check_branch
          %505 = sbr.rel (%p503) target = $region40
        $region39: #{sn_patch_discriminator.1} parent=11 // pred_region
          _
        $region40: #{sn_patch_discriminator.1} parent=11 // pred_fallthru
          _
        // Predicated region
        $region41: #{sn_patch_discriminator.1} parent=11 // pred_check
          %p506 = pneg %p224
        $region42: #{sn_patch_discriminator.1} parent=11 // pred_check_branch
          %508 = sbr.rel (%p506) target = $region44
        $region43: #{sn_patch_discriminator.1} parent=11 // pred_region
          %s510 = ssub.s32 40960, 40960
          %511 = vsyncadd [#allocation6], %s510
          %s512 = sshll.u32 [#allocation5], 4
          %s513 = int_to_ptr.vmem [resolvable:$true] %s512
          %518 = dma.hbm_to_vmem [thread:$0]  %s8, 40960, %s513, [#allocation6], 256, 256, 16
        $region44: #{sn_patch_discriminator.1} parent=11 // pred_fallthru
          _
        // Predicated region
        $region45: #{sn_patch_discriminator.1} parent=11 // pred_check
          %p519 = pneg %p245
        $region46: #{sn_patch_discriminator.1} parent=11 // pred_check_branch
          %521 = sbr.rel (%p519) target = $region48
        $region47: #{sn_patch_discriminator.1} parent=11 // pred_region
          _
        $region48: #{sn_patch_discriminator.1} parent=11 // pred_fallthru
          _
        // Predicated region
        $region49: #{sn_patch_discriminator.1} parent=11 // pred_check
          %p522 = pneg %p266
        $region50: #{sn_patch_discriminator.1} parent=11 // pred_check_branch
          %524 = sbr.rel (%p522) target = $region52
        $region51: #{sn_patch_discriminator.1} parent=11 // pred_region
          _
        $region52: #{sn_patch_discriminator.1} parent=11 // pred_fallthru
          _
        // Predicated region
        $region53: #{sn_patch_discriminator.1} parent=11 // pred_check
          %p525 = pneg %p287
        $region54: #{sn_patch_discriminator.1} parent=11 // pred_check_branch
          %527 = sbr.rel (%p525) target = $region56
        $region55: #{sn_patch_discriminator.1} parent=11 // pred_region
          %s529 = ssub.s32 20480, 20480
          %530 = vsyncadd [#allocation6], %s529
          %s531 = sshll.u32 [#allocation7], 4
          %s532 = int_to_ptr.vmem [resolvable:$true] %s531
          %537 = dma.hbm_to_vmem [thread:$0]  %s11, 20480, %s532, [#allocation6], 128, 128, 8
        $region56: #{sn_patch_discriminator.1} parent=11 // pred_fallthru
          _
        // Predicated region
        $region57: #{sn_patch_discriminator.1} parent=11 // pred_check
          %p538 = pneg %p308
        $region58: #{sn_patch_discriminator.1} parent=11 // pred_check_branch
          %540 = sbr.rel (%p538) target = $region60
        $region59: #{sn_patch_discriminator.1} parent=11 // pred_region
          _
        $region60: #{sn_patch_discriminator.1} parent=11 // pred_fallthru
          _
        // Predicated region
        $region61: #{sn_patch_discriminator.1} parent=11 // pred_check
          %p541 = pneg %p329
        $region62: #{sn_patch_discriminator.1} parent=11 // pred_check_branch
          %543 = sbr.rel (%p541) target = $region64
        $region63: #{sn_patch_discriminator.1} parent=11 // pred_region
          _
        $region64: #{sn_patch_discriminator.1} parent=11 // pred_fallthru
          _
        // Predicated region
        $region65: #{sn_patch_discriminator.1} parent=11 // pred_check
          %p544 = pneg %p350
        $region66: #{sn_patch_discriminator.1} parent=11 // pred_check_branch
          %546 = sbr.rel (%p544) target = $region68
        $region67: #{sn_patch_discriminator.1} parent=11 // pred_region
          _
        $region68: #{sn_patch_discriminator.1} parent=11 // pred_fallthru
          _
        // Predicated region
        $region69: #{sn_patch_discriminator.1} parent=11 // pred_check
          %p547 = pneg %p371
        $region70: #{sn_patch_discriminator.1} parent=11 // pred_check_branch
          %549 = sbr.rel (%p547) target = $region72
        $region71: #{sn_patch_discriminator.1} parent=11 // pred_region
          _
        $region72: #{sn_patch_discriminator.1} parent=11 // pred_fallthru
          _
        // Predicated region
        $region73: #{sn_patch_discriminator.1} parent=11 // pred_check
          %p550 = pneg %p392
        $region74: #{sn_patch_discriminator.1} parent=11 // pred_check_branch
          %552 = sbr.rel (%p550) target = $region76
        $region75: #{sn_patch_discriminator.1} parent=11 // pred_region
          _
        $region76: #{sn_patch_discriminator.1} parent=11 // pred_fallthru
          _
        // Predicated region
        $region77: #{sn_patch_discriminator.1} parent=11 // pred_check
          %p553 = pneg %p413
        $region78: #{sn_patch_discriminator.1} parent=11 // pred_check_branch
          %555 = sbr.rel (%p553) target = $region80
        $region79: #{sn_patch_discriminator.1} parent=11 // pred_region
          _
        $region80: #{sn_patch_discriminator.1} parent=11 // pred_fallthru
          _
        // Predicated region
        $region81: #{sn_patch_discriminator.1} parent=11 // pred_check
          %p556 = pneg %p434
        $region82: #{sn_patch_discriminator.1} parent=11 // pred_check_branch
          %558 = sbr.rel (%p556) target = $region84
        $region83: #{sn_patch_discriminator.1} parent=11 // pred_region
          _
        $region84: #{sn_patch_discriminator.1} parent=11 // pred_fallthru
          _
      $region12: #{sn_patch_discriminator.1} parent=5 // pred_fallthru
        _
      %p559 = scmp.lt.s32.totalorder %s30, 2
      // Predicated region
      $region85: #{sn_patch_discriminator.1} parent=5 // pred_check
        %p560 = pneg %p559
      $region86: #{sn_patch_discriminator.1} parent=5 // pred_check_branch
        %562 = sbr.rel (%p560) target = $region88
      $region87: #{sn_patch_discriminator.1} parent=5 // pred_region
        // Predicated region
        $region89: #{sn_patch_discriminator.1} parent=87 // pred_check
          %p563 = pneg %p50
        $region90: #{sn_patch_discriminator.1} parent=87 // pred_check_branch
          %565 = sbr.rel (%p563) target = $region92
        $region91: #{sn_patch_discriminator.1} parent=87 // pred_region
          %p566 = scmp.lt.s32.totalorder %s30, 1
          %s567 = scalar_select %p566, %s30, 1
          %s568 = smul.addr %s567, 16
          %s569 = smul.addr %s568, 8
          %s570 = scalar_lea.vmem %s0, %s569
        $region92: #{sn_patch_discriminator.1} parent=87 // pred_fallthru
          _
      $region88: #{sn_patch_discriminator.1} parent=5 // pred_fallthru
        _
      %p571 = scmp.le.s32.totalorder 1, %s30
      %p572 = scmp.lt.s32.totalorder %s30, 3
      %p573 = pnand %p571, %p572
      %p574 = pneg %p573
      // Predicated region
      $region93: #{sn_patch_discriminator.1} parent=5 // pred_check
        _
      $region94: #{sn_patch_discriminator.1} parent=5 // pred_check_branch
        %576 = sbr.rel (%p573) target = $region96
      $region95: #{sn_patch_discriminator.1} parent=5 // pred_region
        %s577 = ssub.s32 %s30, 1
        // Predicated region
        $region97: #{sn_patch_discriminator.1} parent=95 // pred_check
          %p578 = pneg %p161
        $region98: #{sn_patch_discriminator.1} parent=95 // pred_check_branch
          %580 = sbr.rel (%p578) target = $region100
        $region99: #{sn_patch_discriminator.1} parent=95 // pred_region
          %581 = dma.done [#allocation3], 40960
        $region100: #{sn_patch_discriminator.1} parent=95 // pred_fallthru
          _
        // Predicated region
        $region101: #{sn_patch_discriminator.1} parent=95 // pred_check
          %p582 = pneg %p224
        $region102: #{sn_patch_discriminator.1} parent=95 // pred_check_branch
          %584 = sbr.rel (%p582) target = $region104
        $region103: #{sn_patch_discriminator.1} parent=95 // pred_region
          %585 = dma.done [#allocation6], 40960
        $region104: #{sn_patch_discriminator.1} parent=95 // pred_fallthru
          _
        // Predicated region
        $region105: #{sn_patch_discriminator.1} parent=95 // pred_check
          %p586 = pneg %p287
        $region106: #{sn_patch_discriminator.1} parent=95 // pred_check_branch
          %588 = sbr.rel (%p586) target = $region108
        $region107: #{sn_patch_discriminator.1} parent=95 // pred_region
          %589 = dma.done [#allocation6], 20480
        $region108: #{sn_patch_discriminator.1} parent=95 // pred_fallthru
          _
        %p590 = scmp.lt.s32.totalorder %s35, 1
        %s591 = scalar_select %p590, %s35, 1
        %s592 = smul.addr %s591, 16
        %s593 = smul.addr %s592, 8
        %s594 = scalar_lea.vmem %s0, %s593
        %p595 = pneg %p56
        %p596 = pneg %p53
        %p597 = pneg %p77
        %p598 = pneg %p74
        %p599 = pneg %p98
        %p600 = pneg %p95
        %p601 = pneg %p119
        %p602 = pneg %p116
        %p603 = pneg %p140
        %p604 = pneg %p137
        %p605 = pneg %p161
        %p606 = pneg %p158
        %p607 = pneg %p182
        %p608 = pneg %p179
        %p609 = pneg %p203
        %p610 = pneg %p200
        %p611 = pneg %p224
        %p612 = pneg %p221
        %p613 = pneg %p245
        %p614 = pneg %p242
        %p615 = pneg %p266
        %p616 = pneg %p263
        %p617 = pneg %p287
        %p618 = pneg %p284
        %p619 = pneg %p308
        %p620 = pneg %p305
        %p621 = pneg %p329
        %p622 = pneg %p326
        %p623 = pneg %p350
        %p624 = pneg %p347
        %p625 = pneg %p371
        %p626 = pneg %p368
        %p627 = pneg %p392
        %p628 = pneg %p389
        %p629 = pneg %p413
        %p630 = pneg %p410
        %p631 = pneg %p434
        %p632 = pneg %p431
        %p633 = pneg %p460
        %p634 = pneg %p457
        %s635 = sand.u32 %s447, 1
        %s636 = scalar_lea.sflag [#allocation4], %s635
        %s637 = sand.u32 %s447, 1
        %s638 = scalar_lea.vmem [#allocation8], %s637
        %p639 = scmp.lt.s32.totalorder %s35, 1
        %s640 = scalar_select %p639, %s35, 1
        %s641 = smul.addr %s640, 16
        %s642 = smul.addr %s641, 8
        %s643 = scalar_lea.vmem %s0, %s642
        %v644 = vld [vmem:[%s643] sm:$0xff]
        %v645 = vld [vmem:[%s643 + $0x8] sm:$0xff]
        %v646 = vld [vmem:[%s643 + $0x10] sm:$0xff]
        %v647 = vld [vmem:[%s643 + $0x18] sm:$0xff]
        %v648 = vld [vmem:[%s643 + $0x20] sm:$0xff]
        %v649 = vld [vmem:[%s643 + $0x28] sm:$0xff]
        %v650 = vld [vmem:[%s643 + $0x30] sm:$0xff]
        %v651 = vld [vmem:[%s643 + $0x38] sm:$0xff]
        %v652 = vld [vmem:[%s643 + $0x40] sm:$0xff]
        %v653 = vld [vmem:[%s643 + $0x48] sm:$0xff]
        %v654 = vld [vmem:[%s643 + $0x50] sm:$0xff]
        %v655 = vld [vmem:[%s643 + $0x58] sm:$0xff]
        %v656 = vld [vmem:[%s643 + $0x60] sm:$0xff]
        %v657 = vld [vmem:[%s643 + $0x68] sm:$0xff]
        %v658 = vld [vmem:[%s643 + $0x70] sm:$0xff]
        %v659 = vld [vmem:[%s643 + $0x78] sm:$0xff]
        %v660 = vld [vmem:[%s1] sm:$0xff]
        %v661 = vld [vmem:[%s1 + $0x8] sm:$0xff]
        %v662 = vld [vmem:[%s1 + $0x10] sm:$0xff]
        %v663 = vld [vmem:[%s1 + $0x18] sm:$0xff]
        %v664 = vld [vmem:[%s1 + $0x20] sm:$0xff]
        %v665 = vld [vmem:[%s1 + $0x28] sm:$0xff]
        %v666 = vld [vmem:[%s1 + $0x30] sm:$0xff]
        %v667 = vld [vmem:[%s1 + $0x38] sm:$0xff]
        %v668 = vld [vmem:[%s1 + $0x40] sm:$0xff]
        %v669 = vld [vmem:[%s1 + $0x48] sm:$0xff]
        %v670 = vld [vmem:[%s1 + $0x50] sm:$0xff]
        %v671 = vld [vmem:[%s1 + $0x58] sm:$0xff]
        %v672 = vld [vmem:[%s1 + $0x60] sm:$0xff]
        %v673 = vld [vmem:[%s1 + $0x68] sm:$0xff]
        %v674 = vld [vmem:[%s1 + $0x70] sm:$0xff]
        %v675 = vld [vmem:[%s1 + $0x78] sm:$0xff]
        %v676 = vld [vmem:[%s1 + $0x80] sm:$0xff]
        %v677 = vld [vmem:[%s1 + $0x88] sm:$0xff]
        %v678 = vld [vmem:[%s1 + $0x90] sm:$0xff]
        %v679 = vld [vmem:[%s1 + $0x98] sm:$0xff]
        %v680 = vld [vmem:[%s2] sm:$0xff]
        %v681 = vld [vmem:[%s2 + $0x8] sm:$0xff]
        %v682 = vld [vmem:[%s2 + $0x10] sm:$0xff]
        %v683 = vld [vmem:[%s2 + $0x18] sm:$0xff]
        %v684 = vld [vmem:[%s2 + $0x20] sm:$0xff]
        %v685 = vld [vmem:[%s2 + $0x28] sm:$0xff]
        %v686 = vld [vmem:[%s2 + $0x30] sm:$0xff]
        %v687 = vld [vmem:[%s2 + $0x38] sm:$0xff]
        %v688 = vld [vmem:[%s2 + $0x40] sm:$0xff]
        %v689 = vld [vmem:[%s2 + $0x48] sm:$0xff]
        %v690 = vld [vmem:[%s2 + $0x50] sm:$0xff]
        %v691 = vld [vmem:[%s2 + $0x58] sm:$0xff]
        %v692 = vld [vmem:[%s2 + $0x60] sm:$0xff]
        %v693 = vld [vmem:[%s2 + $0x68] sm:$0xff]
        %v694 = vld [vmem:[%s2 + $0x70] sm:$0xff]
        %v695 = vld [vmem:[%s2 + $0x78] sm:$0xff]
        %v696 = vld [vmem:[%s2 + $0x80] sm:$0xff]
        %v697 = vld [vmem:[%s2 + $0x88] sm:$0xff]
        %v698 = vld [vmem:[%s2 + $0x90] sm:$0xff]
        %v699 = vld [vmem:[%s2 + $0x98] sm:$0xff]
        %v700 = vld [vmem:[%s2 + $0xa0] sm:$0xff]
        %v701 = vld [vmem:[%s2 + $0xa8] sm:$0xff]
        %v702 = vld [vmem:[%s2 + $0xb0] sm:$0xff]
        %v703 = vld [vmem:[%s2 + $0xb8] sm:$0xff]
        %v704 = vld [vmem:[%s2 + $0xc0] sm:$0xff]
        %v705 = vld [vmem:[%s2 + $0xc8] sm:$0xff]
        %v706 = vld [vmem:[%s2 + $0xd0] sm:$0xff]
        %v707 = vld [vmem:[%s2 + $0xd8] sm:$0xff]
        %v708 = vld [vmem:[%s2 + $0xe0] sm:$0xff]
        %v709 = vld [vmem:[%s2 + $0xe8] sm:$0xff]
        %v710 = vld [vmem:[%s2 + $0xf0] sm:$0xff]
        %v711 = vld [vmem:[%s2 + $0xf8] sm:$0xff]
        %v712 = vld [vmem:[%s2 + $0x100] sm:$0xff]
        %v713 = vld [vmem:[%s2 + $0x108] sm:$0xff]
        %v714 = vld [vmem:[%s2 + $0x110] sm:$0xff]
        %v715 = vld [vmem:[%s2 + $0x118] sm:$0xff]
        %v716 = vld [vmem:[%s2 + $0x120] sm:$0xff]
        %v717 = vld [vmem:[%s2 + $0x128] sm:$0xff]
        %v718 = vld [vmem:[%s2 + $0x130] sm:$0xff]
        %v719 = vld [vmem:[%s2 + $0x138] sm:$0xff]
        %v720 = vld [vmem:[%s2 + $0x140] sm:$0xff]
        %v721 = vld [vmem:[%s2 + $0x148] sm:$0xff]
        %v722 = vld [vmem:[%s2 + $0x150] sm:$0xff]
        %v723 = vld [vmem:[%s2 + $0x158] sm:$0xff]
        %v724 = vld [vmem:[%s2 + $0x160] sm:$0xff]
        %v725 = vld [vmem:[%s2 + $0x168] sm:$0xff]
        %v726 = vld [vmem:[%s2 + $0x170] sm:$0xff]
        %v727 = vld [vmem:[%s2 + $0x178] sm:$0xff]
        %v728 = vld [vmem:[%s2 + $0x180] sm:$0xff]
        %v729 = vld [vmem:[%s2 + $0x188] sm:$0xff]
        %v730 = vld [vmem:[%s2 + $0x190] sm:$0xff]
        %v731 = vld [vmem:[%s2 + $0x198] sm:$0xff]
        %v732 = vld [vmem:[%s2 + $0x1a0] sm:$0xff]
        %v733 = vld [vmem:[%s2 + $0x1a8] sm:$0xff]
        %v734 = vld [vmem:[%s2 + $0x1b0] sm:$0xff]
        %v735 = vld [vmem:[%s2 + $0x1b8] sm:$0xff]
        %v736 = vld [vmem:[%s2 + $0x1c0] sm:$0xff]
        %v737 = vld [vmem:[%s2 + $0x1c8] sm:$0xff]
        %v738 = vld [vmem:[%s2 + $0x1d0] sm:$0xff]
        %v739 = vld [vmem:[%s2 + $0x1d8] sm:$0xff]
        %v740 = vld [vmem:[%s2 + $0x1e0] sm:$0xff]
        %v741 = vld [vmem:[%s2 + $0x1e8] sm:$0xff]
        %v742 = vld [vmem:[%s2 + $0x1f0] sm:$0xff]
        %v743 = vld [vmem:[%s2 + $0x1f8] sm:$0xff]
        %v744 = vld [vmem:[%s2 + $0x200] sm:$0xff]
        %v745 = vld [vmem:[%s2 + $0x208] sm:$0xff]
        %v746 = vld [vmem:[%s2 + $0x210] sm:$0xff]
        %v747 = vld [vmem:[%s2 + $0x218] sm:$0xff]
        %v748 = vld [vmem:[%s2 + $0x220] sm:$0xff]
        %v749 = vld [vmem:[%s2 + $0x228] sm:$0xff]
        %v750 = vld [vmem:[%s2 + $0x230] sm:$0xff]
        %v751 = vld [vmem:[%s2 + $0x238] sm:$0xff]
        %v752 = vld [vmem:[%s2 + $0x240] sm:$0xff]
        %v753 = vld [vmem:[%s2 + $0x248] sm:$0xff]
        %v754 = vld [vmem:[%s2 + $0x250] sm:$0xff]
        %v755 = vld [vmem:[%s2 + $0x258] sm:$0xff]
        %v756 = vld [vmem:[%s2 + $0x260] sm:$0xff]
        %v757 = vld [vmem:[%s2 + $0x268] sm:$0xff]
        %v758 = vld [vmem:[%s2 + $0x270] sm:$0xff]
        %v759 = vld [vmem:[%s2 + $0x278] sm:$0xff]
        %v760 = vld [vmem:[%s2 + $0x280] sm:$0xff]
        %v761 = vld [vmem:[%s2 + $0x288] sm:$0xff]
        %v762 = vld [vmem:[%s2 + $0x290] sm:$0xff]
        %v763 = vld [vmem:[%s2 + $0x298] sm:$0xff]
        %v764 = vld [vmem:[%s2 + $0x2a0] sm:$0xff]
        %v765 = vld [vmem:[%s2 + $0x2a8] sm:$0xff]
        %v766 = vld [vmem:[%s2 + $0x2b0] sm:$0xff]
        %v767 = vld [vmem:[%s2 + $0x2b8] sm:$0xff]
        %v768 = vld [vmem:[%s2 + $0x2c0] sm:$0xff]
        %v769 = vld [vmem:[%s2 + $0x2c8] sm:$0xff]
        %v770 = vld [vmem:[%s2 + $0x2d0] sm:$0xff]
        %v771 = vld [vmem:[%s2 + $0x2d8] sm:$0xff]
        %v772 = vld [vmem:[%s2 + $0x2e0] sm:$0xff]
        %v773 = vld [vmem:[%s2 + $0x2e8] sm:$0xff]
        %v774 = vld [vmem:[%s2 + $0x2f0] sm:$0xff]
        %v775 = vld [vmem:[%s2 + $0x2f8] sm:$0xff]
        %v776 = vld [vmem:[%s2 + $0x300] sm:$0xff]
        %v777 = vld [vmem:[%s2 + $0x308] sm:$0xff]
        %v778 = vld [vmem:[%s2 + $0x310] sm:$0xff]
        %v779 = vld [vmem:[%s2 + $0x318] sm:$0xff]
        %v780 = vld [vmem:[%s2 + $0x320] sm:$0xff]
        %v781 = vld [vmem:[%s2 + $0x328] sm:$0xff]
        %v782 = vld [vmem:[%s2 + $0x330] sm:$0xff]
        %v783 = vld [vmem:[%s2 + $0x338] sm:$0xff]
        %v784 = vld [vmem:[%s2 + $0x340] sm:$0xff]
        %v785 = vld [vmem:[%s2 + $0x348] sm:$0xff]
        %v786 = vld [vmem:[%s2 + $0x350] sm:$0xff]
        %v787 = vld [vmem:[%s2 + $0x358] sm:$0xff]
        %v788 = vld [vmem:[%s2 + $0x360] sm:$0xff]
        %v789 = vld [vmem:[%s2 + $0x368] sm:$0xff]
        %v790 = vld [vmem:[%s2 + $0x370] sm:$0xff]
        %v791 = vld [vmem:[%s2 + $0x378] sm:$0xff]
        %v792 = vld [vmem:[%s2 + $0x380] sm:$0xff]
        %v793 = vld [vmem:[%s2 + $0x388] sm:$0xff]
        %v794 = vld [vmem:[%s2 + $0x390] sm:$0xff]
        %v795 = vld [vmem:[%s2 + $0x398] sm:$0xff]
        %v796 = vld [vmem:[%s2 + $0x3a0] sm:$0xff]
        %v797 = vld [vmem:[%s2 + $0x3a8] sm:$0xff]
        %v798 = vld [vmem:[%s2 + $0x3b0] sm:$0xff]
        %v799 = vld [vmem:[%s2 + $0x3b8] sm:$0xff]
        %v800 = vld [vmem:[%s2 + $0x3c0] sm:$0xff]
        %v801 = vld [vmem:[%s2 + $0x3c8] sm:$0xff]
        %v802 = vld [vmem:[%s2 + $0x3d0] sm:$0xff]
        %v803 = vld [vmem:[%s2 + $0x3d8] sm:$0xff]
        %v804 = vld [vmem:[%s2 + $0x3e0] sm:$0xff]
        %v805 = vld [vmem:[%s2 + $0x3e8] sm:$0xff]
        %v806 = vld [vmem:[%s2 + $0x3f0] sm:$0xff]
        %v807 = vld [vmem:[%s2 + $0x3f8] sm:$0xff]
        %v808 = vld [vmem:[%s2 + $0x400] sm:$0xff]
        %v809 = vld [vmem:[%s2 + $0x408] sm:$0xff]
        %v810 = vld [vmem:[%s2 + $0x410] sm:$0xff]
        %v811 = vld [vmem:[%s2 + $0x418] sm:$0xff]
        %v812 = vld [vmem:[%s2 + $0x420] sm:$0xff]
        %v813 = vld [vmem:[%s2 + $0x428] sm:$0xff]
        %v814 = vld [vmem:[%s2 + $0x430] sm:$0xff]
        %v815 = vld [vmem:[%s2 + $0x438] sm:$0xff]
        %v816 = vld [vmem:[%s2 + $0x440] sm:$0xff]
        %v817 = vld [vmem:[%s2 + $0x448] sm:$0xff]
        %v818 = vld [vmem:[%s2 + $0x450] sm:$0xff]
        %v819 = vld [vmem:[%s2 + $0x458] sm:$0xff]
        %v820 = vld [vmem:[%s2 + $0x460] sm:$0xff]
        %v821 = vld [vmem:[%s2 + $0x468] sm:$0xff]
        %v822 = vld [vmem:[%s2 + $0x470] sm:$0xff]
        %v823 = vld [vmem:[%s2 + $0x478] sm:$0xff]
        %v824 = vld [vmem:[%s2 + $0x480] sm:$0xff]
        %v825 = vld [vmem:[%s2 + $0x488] sm:$0xff]
        %v826 = vld [vmem:[%s2 + $0x490] sm:$0xff]
        %v827 = vld [vmem:[%s2 + $0x498] sm:$0xff]
        %v828 = vld [vmem:[%s2 + $0x4a0] sm:$0xff]
        %v829 = vld [vmem:[%s2 + $0x4a8] sm:$0xff]
        %v830 = vld [vmem:[%s2 + $0x4b0] sm:$0xff]
        %v831 = vld [vmem:[%s2 + $0x4b8] sm:$0xff]
        %v832 = vld [vmem:[%s2 + $0x4c0] sm:$0xff]
        %v833 = vld [vmem:[%s2 + $0x4c8] sm:$0xff]
        %v834 = vld [vmem:[%s2 + $0x4d0] sm:$0xff]
        %v835 = vld [vmem:[%s2 + $0x4d8] sm:$0xff]
        %v836 = vld [vmem:[%s2 + $0x4e0] sm:$0xff]
        %v837 = vld [vmem:[%s2 + $0x4e8] sm:$0xff]
        %v838 = vld [vmem:[%s2 + $0x4f0] sm:$0xff]
        %v839 = vld [vmem:[%s2 + $0x4f8] sm:$0xff]
        %v840 = vld [vmem:[%s2 + $0x500] sm:$0xff]
        %v841 = vld [vmem:[%s2 + $0x508] sm:$0xff]
        %v842 = vld [vmem:[%s2 + $0x510] sm:$0xff]
        %v843 = vld [vmem:[%s2 + $0x518] sm:$0xff]
        %v844 = vld [vmem:[%s2 + $0x520] sm:$0xff]
        %v845 = vld [vmem:[%s2 + $0x528] sm:$0xff]
        %v846 = vld [vmem:[%s2 + $0x530] sm:$0xff]
        %v847 = vld [vmem:[%s2 + $0x538] sm:$0xff]
        %v848 = vld [vmem:[%s2 + $0x540] sm:$0xff]
        %v849 = vld [vmem:[%s2 + $0x548] sm:$0xff]
        %v850 = vld [vmem:[%s2 + $0x550] sm:$0xff]
        %v851 = vld [vmem:[%s2 + $0x558] sm:$0xff]
        %v852 = vld [vmem:[%s2 + $0x560] sm:$0xff]
        %v853 = vld [vmem:[%s2 + $0x568] sm:$0xff]
        %v854 = vld [vmem:[%s2 + $0x570] sm:$0xff]
        %v855 = vld [vmem:[%s2 + $0x578] sm:$0xff]
        %v856 = vld [vmem:[%s2 + $0x580] sm:$0xff]
        %v857 = vld [vmem:[%s2 + $0x588] sm:$0xff]
        %v858 = vld [vmem:[%s2 + $0x590] sm:$0xff]
        %v859 = vld [vmem:[%s2 + $0x598] sm:$0xff]
        %v860 = vld [vmem:[%s2 + $0x5a0] sm:$0xff]
        %v861 = vld [vmem:[%s2 + $0x5a8] sm:$0xff]
        %v862 = vld [vmem:[%s2 + $0x5b0] sm:$0xff]
        %v863 = vld [vmem:[%s2 + $0x5b8] sm:$0xff]
        %v864 = vld [vmem:[%s2 + $0x5c0] sm:$0xff]
        %v865 = vld [vmem:[%s2 + $0x5c8] sm:$0xff]
        %v866 = vld [vmem:[%s2 + $0x5d0] sm:$0xff]
        %v867 = vld [vmem:[%s2 + $0x5d8] sm:$0xff]
        %v868 = vld [vmem:[%s2 + $0x5e0] sm:$0xff]
        %v869 = vld [vmem:[%s2 + $0x5e8] sm:$0xff]
        %v870 = vld [vmem:[%s2 + $0x5f0] sm:$0xff]
        %v871 = vld [vmem:[%s2 + $0x5f8] sm:$0xff]
        %v872 = vld [vmem:[%s2 + $0x600] sm:$0xff]
        %v873 = vld [vmem:[%s2 + $0x608] sm:$0xff]
        %v874 = vld [vmem:[%s2 + $0x610] sm:$0xff]
        %v875 = vld [vmem:[%s2 + $0x618] sm:$0xff]
        %v876 = vld [vmem:[%s2 + $0x620] sm:$0xff]
        %v877 = vld [vmem:[%s2 + $0x628] sm:$0xff]
        %v878 = vld [vmem:[%s2 + $0x630] sm:$0xff]
        %v879 = vld [vmem:[%s2 + $0x638] sm:$0xff]
        %v880 = vld [vmem:[%s2 + $0x640] sm:$0xff]
        %v881 = vld [vmem:[%s2 + $0x648] sm:$0xff]
        %v882 = vld [vmem:[%s2 + $0x650] sm:$0xff]
        %v883 = vld [vmem:[%s2 + $0x658] sm:$0xff]
        %v884 = vld [vmem:[%s2 + $0x660] sm:$0xff]
        %v885 = vld [vmem:[%s2 + $0x668] sm:$0xff]
        %v886 = vld [vmem:[%s2 + $0x670] sm:$0xff]
        %v887 = vld [vmem:[%s2 + $0x678] sm:$0xff]
        %v888 = vld [vmem:[%s2 + $0x680] sm:$0xff]
        %v889 = vld [vmem:[%s2 + $0x688] sm:$0xff]
        %v890 = vld [vmem:[%s2 + $0x690] sm:$0xff]
        %v891 = vld [vmem:[%s2 + $0x698] sm:$0xff]
        %v892 = vld [vmem:[%s2 + $0x6a0] sm:$0xff]
        %v893 = vld [vmem:[%s2 + $0x6a8] sm:$0xff]
        %v894 = vld [vmem:[%s2 + $0x6b0] sm:$0xff]
        %v895 = vld [vmem:[%s2 + $0x6b8] sm:$0xff]
        %v896 = vld [vmem:[%s2 + $0x6c0] sm:$0xff]
        %v897 = vld [vmem:[%s2 + $0x6c8] sm:$0xff]
        %v898 = vld [vmem:[%s2 + $0x6d0] sm:$0xff]
        %v899 = vld [vmem:[%s2 + $0x6d8] sm:$0xff]
        %v900 = vld [vmem:[%s2 + $0x6e0] sm:$0xff]
        %v901 = vld [vmem:[%s2 + $0x6e8] sm:$0xff]
        %v902 = vld [vmem:[%s2 + $0x6f0] sm:$0xff]
        %v903 = vld [vmem:[%s2 + $0x6f8] sm:$0xff]
        %v904 = vld [vmem:[%s2 + $0x700] sm:$0xff]
        %v905 = vld [vmem:[%s2 + $0x708] sm:$0xff]
        %v906 = vld [vmem:[%s2 + $0x710] sm:$0xff]
        %v907 = vld [vmem:[%s2 + $0x718] sm:$0xff]
        %v908 = vld [vmem:[%s2 + $0x720] sm:$0xff]
        %v909 = vld [vmem:[%s2 + $0x728] sm:$0xff]
        %v910 = vld [vmem:[%s2 + $0x730] sm:$0xff]
        %v911 = vld [vmem:[%s2 + $0x738] sm:$0xff]
        %v912 = vld [vmem:[%s2 + $0x740] sm:$0xff]
        %v913 = vld [vmem:[%s2 + $0x748] sm:$0xff]
        %v914 = vld [vmem:[%s2 + $0x750] sm:$0xff]
        %v915 = vld [vmem:[%s2 + $0x758] sm:$0xff]
        %v916 = vld [vmem:[%s2 + $0x760] sm:$0xff]
        %v917 = vld [vmem:[%s2 + $0x768] sm:$0xff]
        %v918 = vld [vmem:[%s2 + $0x770] sm:$0xff]
        %v919 = vld [vmem:[%s2 + $0x778] sm:$0xff]
        %v920 = vld [vmem:[%s2 + $0x780] sm:$0xff]
        %v921 = vld [vmem:[%s2 + $0x788] sm:$0xff]
        %v922 = vld [vmem:[%s2 + $0x790] sm:$0xff]
        %v923 = vld [vmem:[%s2 + $0x798] sm:$0xff]
        %v924 = vld [vmem:[%s2 + $0x7a0] sm:$0xff]
        %v925 = vld [vmem:[%s2 + $0x7a8] sm:$0xff]
        %v926 = vld [vmem:[%s2 + $0x7b0] sm:$0xff]
        %v927 = vld [vmem:[%s2 + $0x7b8] sm:$0xff]
        %v928 = vld [vmem:[%s2 + $0x7c0] sm:$0xff]
        %v929 = vld [vmem:[%s2 + $0x7c8] sm:$0xff]
        %v930 = vld [vmem:[%s2 + $0x7d0] sm:$0xff]
        %v931 = vld [vmem:[%s2 + $0x7d8] sm:$0xff]
        %v932 = vld [vmem:[%s2 + $0x7e0] sm:$0xff]
        %v933 = vld [vmem:[%s2 + $0x7e8] sm:$0xff]
        %v934 = vld [vmem:[%s2 + $0x7f0] sm:$0xff]
        %v935 = vld [vmem:[%s2 + $0x7f8] sm:$0xff]
        %v936 = vld [vmem:[%s2 + $0x800] sm:$0xff]
        %v937 = vld [vmem:[%s2 + $0x808] sm:$0xff]
        %v938 = vld [vmem:[%s2 + $0x810] sm:$0xff]
        %v939 = vld [vmem:[%s2 + $0x818] sm:$0xff]
        %v940 = vld [vmem:[%s2 + $0x820] sm:$0xff]
        %v941 = vld [vmem:[%s2 + $0x828] sm:$0xff]
        %v942 = vld [vmem:[%s2 + $0x830] sm:$0xff]
        %v943 = vld [vmem:[%s2 + $0x838] sm:$0xff]
        %v944 = vld [vmem:[%s2 + $0x840] sm:$0xff]
        %v945 = vld [vmem:[%s2 + $0x848] sm:$0xff]
        %v946 = vld [vmem:[%s2 + $0x850] sm:$0xff]
        %v947 = vld [vmem:[%s2 + $0x858] sm:$0xff]
        %v948 = vld [vmem:[%s2 + $0x860] sm:$0xff]
        %v949 = vld [vmem:[%s2 + $0x868] sm:$0xff]
        %v950 = vld [vmem:[%s2 + $0x870] sm:$0xff]
        %v951 = vld [vmem:[%s2 + $0x878] sm:$0xff]
        %v952 = vld [vmem:[%s2 + $0x880] sm:$0xff]
        %v953 = vld [vmem:[%s2 + $0x888] sm:$0xff]
        %v954 = vld [vmem:[%s2 + $0x890] sm:$0xff]
        %v955 = vld [vmem:[%s2 + $0x898] sm:$0xff]
        %v956 = vld [vmem:[%s2 + $0x8a0] sm:$0xff]
        %v957 = vld [vmem:[%s2 + $0x8a8] sm:$0xff]
        %v958 = vld [vmem:[%s2 + $0x8b0] sm:$0xff]
        %v959 = vld [vmem:[%s2 + $0x8b8] sm:$0xff]
        %v960 = vld [vmem:[%s2 + $0x8c0] sm:$0xff]
        %v961 = vld [vmem:[%s2 + $0x8c8] sm:$0xff]
        %v962 = vld [vmem:[%s2 + $0x8d0] sm:$0xff]
        %v963 = vld [vmem:[%s2 + $0x8d8] sm:$0xff]
        %v964 = vld [vmem:[%s2 + $0x8e0] sm:$0xff]
        %v965 = vld [vmem:[%s2 + $0x8e8] sm:$0xff]
        %v966 = vld [vmem:[%s2 + $0x8f0] sm:$0xff]
        %v967 = vld [vmem:[%s2 + $0x8f8] sm:$0xff]
        %v968 = vld [vmem:[%s2 + $0x900] sm:$0xff]
        %v969 = vld [vmem:[%s2 + $0x908] sm:$0xff]
        %v970 = vld [vmem:[%s2 + $0x910] sm:$0xff]
        %v971 = vld [vmem:[%s2 + $0x918] sm:$0xff]
        %v972 = vld [vmem:[%s2 + $0x920] sm:$0xff]
        %v973 = vld [vmem:[%s2 + $0x928] sm:$0xff]
        %v974 = vld [vmem:[%s2 + $0x930] sm:$0xff]
        %v975 = vld [vmem:[%s2 + $0x938] sm:$0xff]
        %v976 = vld [vmem:[%s2 + $0x940] sm:$0xff]
        %v977 = vld [vmem:[%s2 + $0x948] sm:$0xff]
        %v978 = vld [vmem:[%s2 + $0x950] sm:$0xff]
        %v979 = vld [vmem:[%s2 + $0x958] sm:$0xff]
        %v980 = vld [vmem:[%s2 + $0x960] sm:$0xff]
        %v981 = vld [vmem:[%s2 + $0x968] sm:$0xff]
        %v982 = vld [vmem:[%s2 + $0x970] sm:$0xff]
        %v983 = vld [vmem:[%s2 + $0x978] sm:$0xff]
        %v984 = vld [vmem:[%s2 + $0x980] sm:$0xff]
        %v985 = vld [vmem:[%s2 + $0x988] sm:$0xff]
        %v986 = vld [vmem:[%s2 + $0x990] sm:$0xff]
        %v987 = vld [vmem:[%s2 + $0x998] sm:$0xff]
        %v988 = vld [vmem:[%s2 + $0x9a0] sm:$0xff]
        %v989 = vld [vmem:[%s2 + $0x9a8] sm:$0xff]
        %v990 = vld [vmem:[%s2 + $0x9b0] sm:$0xff]
        %v991 = vld [vmem:[%s2 + $0x9b8] sm:$0xff]
        %v992 = vld [vmem:[%s2 + $0x9c0] sm:$0xff]
        %v993 = vld [vmem:[%s2 + $0x9c8] sm:$0xff]
        %v994 = vld [vmem:[%s2 + $0x9d0] sm:$0xff]
        %v995 = vld [vmem:[%s2 + $0x9d8] sm:$0xff]
        %v996 = vld [vmem:[%s2 + $0x9e0] sm:$0xff]
        %v997 = vld [vmem:[%s2 + $0x9e8] sm:$0xff]
        %v998 = vld [vmem:[%s2 + $0x9f0] sm:$0xff]
        %v999 = vld [vmem:[%s2 + $0x9f8] sm:$0xff]
        %v1000 = vld [vmem:[%s3] sm:$0x3]
        %vm1001 = vcmask 523264
        %v1003 = vsel %vm1001, %v660, 0
        %v1006 = vsel %vm1001, %v661, 0
        %v1009 = vsel %vm1001, %v662, 0
        %v1012 = vsel %vm1001, %v663, 0
        %v1015 = vsel %vm1001, %v664, 0
        %v1018 = vsel %vm1001, %v665, 0
        %v1021 = vsel %vm1001, %v666, 0
        %v1024 = vsel %vm1001, %v667, 0
        %v1027 = vsel %vm1001, %v668, 0
        %v1030 = vsel %vm1001, %v669, 0
        %v1033 = vsel %vm1001, %v670, 0
        %v1036 = vsel %vm1001, %v671, 0
        %v1039 = vsel %vm1001, %v672, 0
        %v1042 = vsel %vm1001, %v673, 0
        %v1045 = vsel %vm1001, %v674, 0
        %v1048 = vsel %vm1001, %v675, 0
        %v1051 = vsel %vm1001, %v676, 0
        %v1054 = vsel %vm1001, %v677, 0
        %v1057 = vsel %vm1001, %v678, 0
        %v1060 = vsel %vm1001, %v679, 0
        %1062 = vmatprep.subr.mxu0 %v645
        %1063 = vmatpush1.msra.mxu0 %v644
        %1064 = vmatprep.subr.mxu0 %v647
        %1065 = vmatpush1.msra.mxu0 %v646
        %1066 = vmatprep.subr.mxu0 %v649
        %1067 = vmatpush1.msra.mxu0 %v648
        %1068 = vmatprep.subr.mxu0 %v651
        %1069 = vmatpush1.msra.mxu0 %v650
        %1070 = vmatprep.subr.mxu0 %v653
        %1071 = vmatpush1.msra.mxu0 %v652
        %1072 = vmatprep.subr.mxu0 %v655
        %1073 = vmatpush1.msra.mxu0 %v654
        %1074 = vmatprep.subr.mxu0 %v657
        %1075 = vmatpush1.msra.mxu0 %v656
        %1076 = vmatprep.subr.mxu0 %v659
        %1077 = vmatpush1.msra.mxu0 %v658
        %1078 = vmatprep.subr.mxu0 0.0
        %1079 = vmatpush1.msra.mxu0 0.0
        %1080 = vmatprep.subr.mxu0 0.0
        %1081 = vmatpush1.msra.mxu0 0.0
        %1082 = vmatprep.subr.mxu0 0.0
        %1083 = vmatpush1.msra.mxu0 0.0
        %1084 = vmatprep.subr.mxu0 0.0
        %1085 = vmatpush1.msra.mxu0 0.0
        %1086 = vmatprep.subr.mxu0 0.0
        %1087 = vmatpush1.msra.mxu0 0.0
        %1088 = vmatprep.subr.mxu0 0.0
        %1089 = vmatpush1.msra.mxu0 0.0
        %1090 = vmatprep.subr.mxu0 0.0
        %1091 = vmatpush1.msra.mxu0 0.0
        %1092 = vmatprep.subr.mxu0 0.0
        %1093 = vmatpush1.msra.mxu0 0.0
        %1094 = vmatprep.subr.mxu0 0.0
        %1095 = vmatpush1.msra.mxu0 0.0
        %1096 = vmatprep.subr.mxu0 0.0
        %1097 = vmatpush1.msra.mxu0 0.0
        %1098 = vmatprep.subr.mxu0 0.0
        %1099 = vmatpush1.msra.mxu0 0.0
        %1100 = vmatprep.subr.mxu0 0.0
        %1101 = vmatpush1.msra.mxu0 0.0
        %1102 = vmatprep.subr.mxu0 0.0
        %1103 = vmatpush1.msra.mxu0 0.0
        %1104 = vmatprep.subr.mxu0 0.0
        %1105 = vmatpush1.msra.mxu0 0.0
        %1106 = vmatprep.subr.mxu0 0.0
        %1107 = vmatpush1.msra.mxu0 0.0
        %1108 = vmatprep.subr.mxu0 0.0
        %1109 = vmatpush1.msra.mxu0 0.0
        %1110 = vmatprep.subr.mxu0 0.0
        %1111 = vmatpush1.msra.mxu0 0.0
        %1112 = vmatprep.subr.mxu0 0.0
        %1113 = vmatpush1.msra.mxu0 0.0
        %1114 = vmatprep.subr.mxu0 0.0
        %1115 = vmatpush1.msra.mxu0 0.0
        %1116 = vmatprep.subr.mxu0 0.0
        %1117 = vmatpush1.msra.mxu0 0.0
        %1118 = vmatprep.subr.mxu0 0.0
        %1119 = vmatpush1.msra.mxu0 0.0
        %1120 = vmatprep.subr.mxu0 0.0
        %1121 = vmatpush1.msra.mxu0 0.0
        %1122 = vmatprep.subr.mxu0 0.0
        %1123 = vmatpush1.msra.mxu0 0.0
        %1124 = vmatprep.subr.mxu0 0.0
        %1125 = vmatpush1.msra.mxu0 0.0
        %1126 = vmatprep.mubr.f32.mxu0 0.0
        %1127 = vmatmul.mubr.f32.gmra.mrb[0].mxu0 %v1003
        %v1128 = vpop.f32.mrb[0].mxu0
        %v1129 = vadd.f32 0.0, %v1128
        %v1130 = vpop.f32.mrb[0].mxu0
        %v1131 = vadd.f32 0.0, %v1130
        %1132 = vmatprep.mubr.f32.mxu0 0.0
        %1133 = vmatmul.mubr.f32.gmra.mrb[0].mxu0 %v1006
        %v1134 = vpop.f32.mrb[0].mxu0
        %v1135 = vadd.f32 0.0, %v1134
        %v1136 = vpop.f32.mrb[0].mxu0
        %v1137 = vadd.f32 0.0, %v1136
        %1138 = vmatprep.mubr.f32.mxu0 0.0
        %1139 = vmatmul.mubr.f32.gmra.mrb[0].mxu0 %v1009
        %v1140 = vpop.f32.mrb[0].mxu0
        %v1141 = vadd.f32 0.0, %v1140
        %v1142 = vpop.f32.mrb[0].mxu0
        %v1143 = vadd.f32 0.0, %v1142
        %1144 = vmatprep.mubr.f32.mxu0 0.0
        %1145 = vmatmul.mubr.f32.gmra.mrb[0].mxu0 %v1012
        %v1146 = vpop.f32.mrb[0].mxu0
        %v1147 = vadd.f32 0.0, %v1146
        %v1148 = vpop.f32.mrb[0].mxu0
        %v1149 = vadd.f32 0.0, %v1148
        %1150 = vmatprep.mubr.f32.mxu0 0.0
        %1151 = vmatmul.mubr.f32.gmra.mrb[0].mxu0 %v1015
        %v1152 = vpop.f32.mrb[0].mxu0
        %v1153 = vadd.f32 0.0, %v1152
        %v1154 = vpop.f32.mrb[0].mxu0
        %v1155 = vadd.f32 0.0, %v1154
        %1156 = vmatprep.mubr.f32.mxu0 0.0
        %1157 = vmatmul.mubr.f32.gmra.mrb[0].mxu0 %v1018
        %v1158 = vpop.f32.mrb[0].mxu0
        %v1159 = vadd.f32 0.0, %v1158
        %v1160 = vpop.f32.mrb[0].mxu0
        %v1161 = vadd.f32 0.0, %v1160
        %1162 = vmatprep.mubr.f32.mxu0 0.0
        %1163 = vmatmul.mubr.f32.gmra.mrb[0].mxu0 %v1021
        %v1164 = vpop.f32.mrb[0].mxu0
        %v1165 = vadd.f32 0.0, %v1164
        %v1166 = vpop.f32.mrb[0].mxu0
        %v1167 = vadd.f32 0.0, %v1166
        %1168 = vmatprep.mubr.f32.mxu0 0.0
        %1169 = vmatmul.mubr.f32.gmra.mrb[0].mxu0 %v1024
        %v1170 = vpop.f32.mrb[0].mxu0
        %v1171 = vadd.f32 0.0, %v1170
        %v1172 = vpop.f32.mrb[0].mxu0
        %v1173 = vadd.f32 0.0, %v1172
        %1174 = vmatprep.mubr.f32.mxu0 0.0
        %1175 = vmatmul.mubr.f32.gmra.mrb[0].mxu0 %v1027
        %v1176 = vpop.f32.mrb[0].mxu0
        %v1177 = vadd.f32 0.0, %v1176
        %v1178 = vpop.f32.mrb[0].mxu0
        %v1179 = vadd.f32 0.0, %v1178
        %1180 = vmatprep.mubr.f32.mxu0 0.0
        %1181 = vmatmul.mubr.f32.gmra.mrb[0].mxu0 %v1030
        %v1182 = vpop.f32.mrb[0].mxu0
        %v1183 = vadd.f32 0.0, %v1182
        %v1184 = vpop.f32.mrb[0].mxu0
        %v1185 = vadd.f32 0.0, %v1184
        %1186 = vmatprep.mubr.f32.mxu0 0.0
        %1187 = vmatmul.mubr.f32.gmra.mrb[0].mxu0 %v1033
        %v1188 = vpop.f32.mrb[0].mxu0
        %v1189 = vadd.f32 0.0, %v1188
        %v1190 = vpop.f32.mrb[0].mxu0
        %v1191 = vadd.f32 0.0, %v1190
        %1192 = vmatprep.mubr.f32.mxu0 0.0
        %1193 = vmatmul.mubr.f32.gmra.mrb[0].mxu0 %v1036
        %v1194 = vpop.f32.mrb[0].mxu0
        %v1195 = vadd.f32 0.0, %v1194
        %v1196 = vpop.f32.mrb[0].mxu0
        %v1197 = vadd.f32 0.0, %v1196
        %1198 = vmatprep.mubr.f32.mxu0 0.0
        %1199 = vmatmul.mubr.f32.gmra.mrb[0].mxu0 %v1039
        %v1200 = vpop.f32.mrb[0].mxu0
        %v1201 = vadd.f32 0.0, %v1200
        %v1202 = vpop.f32.mrb[0].mxu0
        %v1203 = vadd.f32 0.0, %v1202
        %1204 = vmatprep.mubr.f32.mxu0 0.0
        %1205 = vmatmul.mubr.f32.gmra.mrb[0].mxu0 %v1042
        %v1206 = vpop.f32.mrb[0].mxu0
        %v1207 = vadd.f32 0.0, %v1206
        %v1208 = vpop.f32.mrb[0].mxu0
        %v1209 = vadd.f32 0.0, %v1208
        %1210 = vmatprep.mubr.f32.mxu0 0.0
        %1211 = vmatmul.mubr.f32.gmra.mrb[0].mxu0 %v1045
        %v1212 = vpop.f32.mrb[0].mxu0
        %v1213 = vadd.f32 0.0, %v1212
        %v1214 = vpop.f32.mrb[0].mxu0
        %v1215 = vadd.f32 0.0, %v1214
        %1216 = vmatprep.mubr.f32.mxu0 0.0
        %1217 = vmatmul.mubr.f32.gmra.mrb[0].mxu0 %v1048
        %v1218 = vpop.f32.mrb[0].mxu0
        %v1219 = vadd.f32 0.0, %v1218
        %v1220 = vpop.f32.mrb[0].mxu0
        %v1221 = vadd.f32 0.0, %v1220
        %1222 = vmatprep.mubr.f32.mxu0 0.0
        %1223 = vmatmul.mubr.f32.gmra.mrb[0].mxu0 %v1051
        %v1224 = vpop.f32.mrb[0].mxu0
        %v1225 = vadd.f32 0.0, %v1224
        %v1226 = vpop.f32.mrb[0].mxu0
        %v1227 = vadd.f32 0.0, %v1226
        %1228 = vmatprep.mubr.f32.mxu0 0.0
        %1229 = vmatmul.mubr.f32.gmra.mrb[0].mxu0 %v1054
        %v1230 = vpop.f32.mrb[0].mxu0
        %v1231 = vadd.f32 0.0, %v1230
        %v1232 = vpop.f32.mrb[0].mxu0
        %v1233 = vadd.f32 0.0, %v1232
        %1234 = vmatprep.mubr.f32.mxu0 0.0
        %1235 = vmatmul.mubr.f32.gmra.mrb[0].mxu0 %v1057
        %v1236 = vpop.f32.mrb[0].mxu0
        %v1237 = vadd.f32 0.0, %v1236
        %v1238 = vpop.f32.mrb[0].mxu0
        %v1239 = vadd.f32 0.0, %v1238
        %1240 = vmatprep.mubr.f32.mxu0 0.0
        %1241 = vmatmul.mubr.f32.gmra.mrb[0].mxu0 %v1060
        %v1242 = vpop.f32.mrb[0].mxu0
        %v1243 = vadd.f32 0.0, %v1242
        %v1244 = vpop.f32.mrb[0].mxu0
        %v1245 = vadd.f32 0.0, %v1244
        %1246 = vdwg.mxu0
        %v1248 = vlaneseq
        %v1249 = vshrl.u32 %v1248, 7
        %v1250 = vsub.s32 0, %v1249
        %v1251 = vrot.slane %v1000, %v1250
        %v1252 = vlaneseq
        %v1253 = vshrl.u32 %v1252, 7
        %v1254 = vsub.s32 1, %v1253
        %v1255 = vrot.slane %v1000, %v1254
        %1258 = vmatprep.subr.mxu0 %v681
        %1259 = vmatpush1.msra.mxu0 %v680
        %1260 = vmatprep.subr.mxu0 %v683
        %1261 = vmatpush1.msra.mxu0 %v682
        %1262 = vmatprep.subr.mxu0 %v685
        %1263 = vmatpush1.msra.mxu0 %v684
        %1264 = vmatprep.subr.mxu0 %v687
        %1265 = vmatpush1.msra.mxu0 %v686
        %1266 = vmatprep.subr.mxu0 %v689
        %1267 = vmatpush1.msra.mxu0 %v688
        %1268 = vmatprep.subr.mxu0 %v691
        %1269 = vmatpush1.msra.mxu0 %v690
        %1270 = vmatprep.subr.mxu0 %v693
        %1271 = vmatpush1.msra.mxu0 %v692
        %1272 = vmatprep.subr.mxu0 %v695
        %1273 = vmatpush1.msra.mxu0 %v694
        %1274 = vmatprep.subr.mxu0 %v697
        %1275 = vmatpush1.msra.mxu0 %v696
        %1276 = vmatprep.subr.mxu0 %v699
        %1277 = vmatpush1.msra.mxu0 %v698
        %1278 = vmatprep.subr.mxu0 %v701
        %1279 = vmatpush1.msra.mxu0 %v700
        %1280 = vmatprep.subr.mxu0 %v703
        %1281 = vmatpush1.msra.mxu0 %v702
        %1282 = vmatprep.subr.mxu0 %v705
        %1283 = vmatpush1.msra.mxu0 %v704
        %1284 = vmatprep.subr.mxu0 %v707
        %1285 = vmatpush1.msra.mxu0 %v706
        %1286 = vmatprep.subr.mxu0 %v709
        %1287 = vmatpush1.msra.mxu0 %v708
        %1288 = vmatprep.subr.mxu0 %v711
        %1289 = vmatpush1.msra.mxu0 %v710
        %1290 = vmatprep.subr.mxu0 %v713
        %1291 = vmatpush1.msra.mxu0 %v712
        %1292 = vmatprep.subr.mxu0 %v715
        %1293 = vmatpush1.msra.mxu0 %v714
        %1294 = vmatprep.subr.mxu0 %v717
        %1295 = vmatpush1.msra.mxu0 %v716
        %1296 = vmatprep.subr.mxu0 %v719
        %1297 = vmatpush1.msra.mxu0 %v718
        %1298 = vmatprep.subr.mxu0 %v721
        %1299 = vmatpush1.msra.mxu0 %v720
        %1300 = vmatprep.subr.mxu0 %v723
        %1301 = vmatpush1.msra.mxu0 %v722
        %1302 = vmatprep.subr.mxu0 %v725
        %1303 = vmatpush1.msra.mxu0 %v724
        %1304 = vmatprep.subr.mxu0 %v727
        %1305 = vmatpush1.msra.mxu0 %v726
        %1306 = vmatprep.subr.mxu0 %v729
        %1307 = vmatpush1.msra.mxu0 %v728
        %1308 = vmatprep.subr.mxu0 %v731
        %1309 = vmatpush1.msra.mxu0 %v730
        %1310 = vmatprep.subr.mxu0 %v733
        %1311 = vmatpush1.msra.mxu0 %v732
        %1312 = vmatprep.subr.mxu0 %v735
        %1313 = vmatpush1.msra.mxu0 %v734
        %1314 = vmatprep.subr.mxu0 %v737
        %1315 = vmatpush1.msra.mxu0 %v736
        %1316 = vmatprep.subr.mxu0 %v739
        %1317 = vmatpush1.msra.mxu0 %v738
        %1318 = vmatprep.subr.mxu0 %v741
        %1319 = vmatpush1.msra.mxu0 %v740
        %1320 = vmatprep.subr.mxu0 %v743
        %1321 = vmatpush1.msra.mxu0 %v742
        %1322 = vmatprep.mubr.f32.mxu0 %v1131
        %1323 = vmatmul.mubr.f32.gmra.mrb[0].mxu0 %v1129
        %v1324 = vpop.f32.mrb[0].mxu0
        %v1325 = vadd.f32 %v1251, %v1324
        %v1326 = vpop.f32.mrb[0].mxu0
        %v1327 = vadd.f32 %v1255, %v1326
        %1328 = vmatprep.mubr.f32.mxu0 %v1137
        %1329 = vmatmul.mubr.f32.gmra.mrb[0].mxu0 %v1135
        %v1330 = vpop.f32.mrb[0].mxu0
        %v1331 = vadd.f32 %v1251, %v1330
        %v1332 = vpop.f32.mrb[0].mxu0
        %v1333 = vadd.f32 %v1255, %v1332
        %1334 = vmatprep.mubr.f32.mxu0 %v1143
        %1335 = vmatmul.mubr.f32.gmra.mrb[0].mxu0 %v1141
        %v1336 = vpop.f32.mrb[0].mxu0
        %v1337 = vadd.f32 %v1251, %v1336
        %v1338 = vpop.f32.mrb[0].mxu0
        %v1339 = vadd.f32 %v1255, %v1338
        %1340 = vmatprep.mubr.f32.mxu0 %v1149
        %1341 = vmatmul.mubr.f32.gmra.mrb[0].mxu0 %v1147
        %v1342 = vpop.f32.mrb[0].mxu0
        %v1343 = vadd.f32 %v1251, %v1342
        %v1344 = vpop.f32.mrb[0].mxu0
        %v1345 = vadd.f32 %v1255, %v1344
        %1346 = vdwg.mxu0
        %1347 = vmatprep.subr.mxu0 %v745
        %1348 = vmatpush1.msra.mxu0 %v744
        %1349 = vmatprep.subr.mxu0 %v747
        %1350 = vmatpush1.msra.mxu0 %v746
        %1351 = vmatprep.subr.mxu0 %v749
        %1352 = vmatpush1.msra.mxu0 %v748
        %1353 = vmatprep.subr.mxu0 %v751
        %1354 = vmatpush1.msra.mxu0 %v750
        %1355 = vmatprep.subr.mxu0 %v753
        %1356 = vmatpush1.msra.mxu0 %v752
        %1357 = vmatprep.subr.mxu0 %v755
        %1358 = vmatpush1.msra.mxu0 %v754
        %1359 = vmatprep.subr.mxu0 %v757
        %1360 = vmatpush1.msra.mxu0 %v756
        %1361 = vmatprep.subr.mxu0 %v759
        %1362 = vmatpush1.msra.mxu0 %v758
        %1363 = vmatprep.subr.mxu0 %v761
        %1364 = vmatpush1.msra.mxu0 %v760
        %1365 = vmatprep.subr.mxu0 %v763
        %1366 = vmatpush1.msra.mxu0 %v762
        %1367 = vmatprep.subr.mxu0 %v765
        %1368 = vmatpush1.msra.mxu0 %v764
        %1369 = vmatprep.subr.mxu0 %v767
        %1370 = vmatpush1.msra.mxu0 %v766
        %1371 = vmatprep.subr.mxu0 %v769
        %1372 = vmatpush1.msra.mxu0 %v768
        %1373 = vmatprep.subr.mxu0 %v771
        %1374 = vmatpush1.msra.mxu0 %v770
        %1375 = vmatprep.subr.mxu0 %v773
        %1376 = vmatpush1.msra.mxu0 %v772
        %1377 = vmatprep.subr.mxu0 %v775
        %1378 = vmatpush1.msra.mxu0 %v774
        %1379 = vmatprep.subr.mxu0 %v777
        %1380 = vmatpush1.msra.mxu0 %v776
        %1381 = vmatprep.subr.mxu0 %v779
        %1382 = vmatpush1.msra.mxu0 %v778
        %1383 = vmatprep.subr.mxu0 %v781
        %1384 = vmatpush1.msra.mxu0 %v780
        %1385 = vmatprep.subr.mxu0 %v783
        %1386 = vmatpush1.msra.mxu0 %v782
        %1387 = vmatprep.subr.mxu0 %v785
        %1388 = vmatpush1.msra.mxu0 %v784
        %1389 = vmatprep.subr.mxu0 %v787
        %1390 = vmatpush1.msra.mxu0 %v786
        %1391 = vmatprep.subr.mxu0 %v789
        %1392 = vmatpush1.msra.mxu0 %v788
        %1393 = vmatprep.subr.mxu0 %v791
        %1394 = vmatpush1.msra.mxu0 %v790
        %1395 = vmatprep.subr.mxu0 %v793
        %1396 = vmatpush1.msra.mxu0 %v792
        %1397 = vmatprep.subr.mxu0 %v795
        %1398 = vmatpush1.msra.mxu0 %v794
        %1399 = vmatprep.subr.mxu0 %v797
        %1400 = vmatpush1.msra.mxu0 %v796
        %1401 = vmatprep.subr.mxu0 %v799
        %1402 = vmatpush1.msra.mxu0 %v798
        %1403 = vmatprep.subr.mxu0 %v801
        %1404 = vmatpush1.msra.mxu0 %v800
        %1405 = vmatprep.subr.mxu0 %v803
        %1406 = vmatpush1.msra.mxu0 %v802
        %1407 = vmatprep.subr.mxu0 %v805
        %1408 = vmatpush1.msra.mxu0 %v804
        %1409 = vmatprep.subr.mxu0 %v807
        %1410 = vmatpush1.msra.mxu0 %v806
        %1411 = vmatprep.mubr.f32.mxu0 %v1155
        %1412 = vmatmul.mubr.f32.gmra.mrb[0].mxu0 %v1153
        %v1413 = vpop.f32.mrb[0].mxu0
        %v1414 = vadd.f32 %v1325, %v1413
        %v1415 = vpop.f32.mrb[0].mxu0
        %v1416 = vadd.f32 %v1327, %v1415
        %1417 = vmatprep.mubr.f32.mxu0 %v1161
        %1418 = vmatmul.mubr.f32.gmra.mrb[0].mxu0 %v1159
        %v1419 = vpop.f32.mrb[0].mxu0
        %v1420 = vadd.f32 %v1331, %v1419
        %v1421 = vpop.f32.mrb[0].mxu0
        %v1422 = vadd.f32 %v1333, %v1421
        %1423 = vmatprep.mubr.f32.mxu0 %v1167
        %1424 = vmatmul.mubr.f32.gmra.mrb[0].mxu0 %v1165
        %v1425 = vpop.f32.mrb[0].mxu0
        %v1426 = vadd.f32 %v1337, %v1425
        %v1427 = vpop.f32.mrb[0].mxu0
        %v1428 = vadd.f32 %v1339, %v1427
        %1429 = vmatprep.mubr.f32.mxu0 %v1173
        %1430 = vmatmul.mubr.f32.gmra.mrb[0].mxu0 %v1171
        %v1431 = vpop.f32.mrb[0].mxu0
        %v1432 = vadd.f32 %v1343, %v1431
        %v1433 = vpop.f32.mrb[0].mxu0
        %v1434 = vadd.f32 %v1345, %v1433
        %1435 = vdwg.mxu0
        %1436 = vmatprep.subr.mxu0 %v809
        %1437 = vmatpush1.msra.mxu0 %v808
        %1438 = vmatprep.subr.mxu0 %v811
        %1439 = vmatpush1.msra.mxu0 %v810
        %1440 = vmatprep.subr.mxu0 %v813
        %1441 = vmatpush1.msra.mxu0 %v812
        %1442 = vmatprep.subr.mxu0 %v815
        %1443 = vmatpush1.msra.mxu0 %v814
        %1444 = vmatprep.subr.mxu0 %v817
        %1445 = vmatpush1.msra.mxu0 %v816
        %1446 = vmatprep.subr.mxu0 %v819
        %1447 = vmatpush1.msra.mxu0 %v818
        %1448 = vmatprep.subr.mxu0 %v821
        %1449 = vmatpush1.msra.mxu0 %v820
        %1450 = vmatprep.subr.mxu0 %v823
        %1451 = vmatpush1.msra.mxu0 %v822
        %1452 = vmatprep.subr.mxu0 %v825
        %1453 = vmatpush1.msra.mxu0 %v824
        %1454 = vmatprep.subr.mxu0 %v827
        %1455 = vmatpush1.msra.mxu0 %v826
        %1456 = vmatprep.subr.mxu0 %v829
        %1457 = vmatpush1.msra.mxu0 %v828
        %1458 = vmatprep.subr.mxu0 %v831
        %1459 = vmatpush1.msra.mxu0 %v830
        %1460 = vmatprep.subr.mxu0 %v833
        %1461 = vmatpush1.msra.mxu0 %v832
        %1462 = vmatprep.subr.mxu0 %v835
        %1463 = vmatpush1.msra.mxu0 %v834
        %1464 = vmatprep.subr.mxu0 %v837
        %1465 = vmatpush1.msra.mxu0 %v836
        %1466 = vmatprep.subr.mxu0 %v839
        %1467 = vmatpush1.msra.mxu0 %v838
        %1468 = vmatprep.subr.mxu0 %v841
        %1469 = vmatpush1.msra.mxu0 %v840
        %1470 = vmatprep.subr.mxu0 %v843
        %1471 = vmatpush1.msra.mxu0 %v842
        %1472 = vmatprep.subr.mxu0 %v845
        %1473 = vmatpush1.msra.mxu0 %v844
        %1474 = vmatprep.subr.mxu0 %v847
        %1475 = vmatpush1.msra.mxu0 %v846
        %1476 = vmatprep.subr.mxu0 %v849
        %1477 = vmatpush1.msra.mxu0 %v848
        %1478 = vmatprep.subr.mxu0 %v851
        %1479 = vmatpush1.msra.mxu0 %v850
        %1480 = vmatprep.subr.mxu0 %v853
        %1481 = vmatpush1.msra.mxu0 %v852
        %1482 = vmatprep.subr.mxu0 %v855
        %1483 = vmatpush1.msra.mxu0 %v854
        %1484 = vmatprep.subr.mxu0 %v857
        %1485 = vmatpush1.msra.mxu0 %v856
        %1486 = vmatprep.subr.mxu0 %v859
        %1487 = vmatpush1.msra.mxu0 %v858
        %1488 = vmatprep.subr.mxu0 %v861
        %1489 = vmatpush1.msra.mxu0 %v860
        %1490 = vmatprep.subr.mxu0 %v863
        %1491 = vmatpush1.msra.mxu0 %v862
        %1492 = vmatprep.subr.mxu0 %v865
        %1493 = vmatpush1.msra.mxu0 %v864
        %1494 = vmatprep.subr.mxu0 %v867
        %1495 = vmatpush1.msra.mxu0 %v866
        %1496 = vmatprep.subr.mxu0 %v869
        %1497 = vmatpush1.msra.mxu0 %v868
        %1498 = vmatprep.subr.mxu0 %v871
        %1499 = vmatpush1.msra.mxu0 %v870
        %1500 = vmatprep.mubr.f32.mxu0 %v1179
        %1501 = vmatmul.mubr.f32.gmra.mrb[0].mxu0 %v1177
        %v1502 = vpop.f32.mrb[0].mxu0
        %v1503 = vadd.f32 %v1414, %v1502
        %v1504 = vpop.f32.mrb[0].mxu0
        %v1505 = vadd.f32 %v1416, %v1504
        %1506 = vmatprep.mubr.f32.mxu0 %v1185
        %1507 = vmatmul.mubr.f32.gmra.mrb[0].mxu0 %v1183
        %v1508 = vpop.f32.mrb[0].mxu0
        %v1509 = vadd.f32 %v1420, %v1508
        %v1510 = vpop.f32.mrb[0].mxu0
        %v1511 = vadd.f32 %v1422, %v1510
        %1512 = vmatprep.mubr.f32.mxu0 %v1191
        %1513 = vmatmul.mubr.f32.gmra.mrb[0].mxu0 %v1189
        %v1514 = vpop.f32.mrb[0].mxu0
        %v1515 = vadd.f32 %v1426, %v1514
        %v1516 = vpop.f32.mrb[0].mxu0
        %v1517 = vadd.f32 %v1428, %v1516
        %1518 = vmatprep.mubr.f32.mxu0 %v1197
        %1519 = vmatmul.mubr.f32.gmra.mrb[0].mxu0 %v1195
        %v1520 = vpop.f32.mrb[0].mxu0
        %v1521 = vadd.f32 %v1432, %v1520
        %v1522 = vpop.f32.mrb[0].mxu0
        %v1523 = vadd.f32 %v1434, %v1522
        %1524 = vdwg.mxu0
        %1525 = vmatprep.subr.mxu0 %v873
        %1526 = vmatpush1.msra.mxu0 %v872
        %1527 = vmatprep.subr.mxu0 %v875
        %1528 = vmatpush1.msra.mxu0 %v874
        %1529 = vmatprep.subr.mxu0 %v877
        %1530 = vmatpush1.msra.mxu0 %v876
        %1531 = vmatprep.subr.mxu0 %v879
        %1532 = vmatpush1.msra.mxu0 %v878
        %1533 = vmatprep.subr.mxu0 %v881
        %1534 = vmatpush1.msra.mxu0 %v880
        %1535 = vmatprep.subr.mxu0 %v883
        %1536 = vmatpush1.msra.mxu0 %v882
        %1537 = vmatprep.subr.mxu0 %v885
        %1538 = vmatpush1.msra.mxu0 %v884
        %1539 = vmatprep.subr.mxu0 %v887
        %1540 = vmatpush1.msra.mxu0 %v886
        %1541 = vmatprep.subr.mxu0 %v889
        %1542 = vmatpush1.msra.mxu0 %v888
        %1543 = vmatprep.subr.mxu0 %v891
        %1544 = vmatpush1.msra.mxu0 %v890
        %1545 = vmatprep.subr.mxu0 %v893
        %1546 = vmatpush1.msra.mxu0 %v892
        %1547 = vmatprep.subr.mxu0 %v895
        %1548 = vmatpush1.msra.mxu0 %v894
        %1549 = vmatprep.subr.mxu0 %v897
        %1550 = vmatpush1.msra.mxu0 %v896
        %1551 = vmatprep.subr.mxu0 %v899
        %1552 = vmatpush1.msra.mxu0 %v898
        %1553 = vmatprep.subr.mxu0 %v901
        %1554 = vmatpush1.msra.mxu0 %v900
        %1555 = vmatprep.subr.mxu0 %v903
        %1556 = vmatpush1.msra.mxu0 %v902
        %1557 = vmatprep.subr.mxu0 %v905
        %1558 = vmatpush1.msra.mxu0 %v904
        %1559 = vmatprep.subr.mxu0 %v907
        %1560 = vmatpush1.msra.mxu0 %v906
        %1561 = vmatprep.subr.mxu0 %v909
        %1562 = vmatpush1.msra.mxu0 %v908
        %1563 = vmatprep.subr.mxu0 %v911
        %1564 = vmatpush1.msra.mxu0 %v910
        %1565 = vmatprep.subr.mxu0 %v913
        %1566 = vmatpush1.msra.mxu0 %v912
        %1567 = vmatprep.subr.mxu0 %v915
        %1568 = vmatpush1.msra.mxu0 %v914
        %1569 = vmatprep.subr.mxu0 %v917
        %1570 = vmatpush1.msra.mxu0 %v916
        %1571 = vmatprep.subr.mxu0 %v919
        %1572 = vmatpush1.msra.mxu0 %v918
        %1573 = vmatprep.subr.mxu0 %v921
        %1574 = vmatpush1.msra.mxu0 %v920
        %1575 = vmatprep.subr.mxu0 %v923
        %1576 = vmatpush1.msra.mxu0 %v922
        %1577 = vmatprep.subr.mxu0 %v925
        %1578 = vmatpush1.msra.mxu0 %v924
        %1579 = vmatprep.subr.mxu0 %v927
        %1580 = vmatpush1.msra.mxu0 %v926
        %1581 = vmatprep.subr.mxu0 %v929
        %1582 = vmatpush1.msra.mxu0 %v928
        %1583 = vmatprep.subr.mxu0 %v931
        %1584 = vmatpush1.msra.mxu0 %v930
        %1585 = vmatprep.subr.mxu0 %v933
        %1586 = vmatpush1.msra.mxu0 %v932
        %1587 = vmatprep.subr.mxu0 %v935
        %1588 = vmatpush1.msra.mxu0 %v934
        %1589 = vmatprep.mubr.f32.mxu0 %v1203
        %1590 = vmatmul.mubr.f32.gmra.mrb[0].mxu0 %v1201
        %v1591 = vpop.f32.mrb[0].mxu0
        %v1592 = vadd.f32 %v1503, %v1591
        %v1593 = vpop.f32.mrb[0].mxu0
        %v1594 = vadd.f32 %v1505, %v1593
        %1595 = vmatprep.mubr.f32.mxu0 %v1209
        %1596 = vmatmul.mubr.f32.gmra.mrb[0].mxu0 %v1207
        %v1597 = vpop.f32.mrb[0].mxu0
        %v1598 = vadd.f32 %v1509, %v1597
        %v1599 = vpop.f32.mrb[0].mxu0
        %v1600 = vadd.f32 %v1511, %v1599
        %1601 = vmatprep.mubr.f32.mxu0 %v1215
        %1602 = vmatmul.mubr.f32.gmra.mrb[0].mxu0 %v1213
        %v1603 = vpop.f32.mrb[0].mxu0
        %v1604 = vadd.f32 %v1515, %v1603
        %v1605 = vpop.f32.mrb[0].mxu0
        %v1606 = vadd.f32 %v1517, %v1605
        %1607 = vmatprep.mubr.f32.mxu0 %v1221
        %1608 = vmatmul.mubr.f32.gmra.mrb[0].mxu0 %v1219
        %v1609 = vpop.f32.mrb[0].mxu0
        %v1610 = vadd.f32 %v1521, %v1609
        %v1611 = vpop.f32.mrb[0].mxu0
        %v1612 = vadd.f32 %v1523, %v1611
        %1613 = vdwg.mxu0
        %1614 = vmatprep.subr.mxu0 %v937
        %1615 = vmatpush1.msra.mxu0 %v936
        %1616 = vmatprep.subr.mxu0 %v939
        %1617 = vmatpush1.msra.mxu0 %v938
        %1618 = vmatprep.subr.mxu0 %v941
        %1619 = vmatpush1.msra.mxu0 %v940
        %1620 = vmatprep.subr.mxu0 %v943
        %1621 = vmatpush1.msra.mxu0 %v942
        %1622 = vmatprep.subr.mxu0 %v945
        %1623 = vmatpush1.msra.mxu0 %v944
        %1624 = vmatprep.subr.mxu0 %v947
        %1625 = vmatpush1.msra.mxu0 %v946
        %1626 = vmatprep.subr.mxu0 %v949
        %1627 = vmatpush1.msra.mxu0 %v948
        %1628 = vmatprep.subr.mxu0 %v951
        %1629 = vmatpush1.msra.mxu0 %v950
        %1630 = vmatprep.subr.mxu0 %v953
        %1631 = vmatpush1.msra.mxu0 %v952
        %1632 = vmatprep.subr.mxu0 %v955
        %1633 = vmatpush1.msra.mxu0 %v954
        %1634 = vmatprep.subr.mxu0 %v957
        %1635 = vmatpush1.msra.mxu0 %v956
        %1636 = vmatprep.subr.mxu0 %v959
        %1637 = vmatpush1.msra.mxu0 %v958
        %1638 = vmatprep.subr.mxu0 %v961
        %1639 = vmatpush1.msra.mxu0 %v960
        %1640 = vmatprep.subr.mxu0 %v963
        %1641 = vmatpush1.msra.mxu0 %v962
        %1642 = vmatprep.subr.mxu0 %v965
        %1643 = vmatpush1.msra.mxu0 %v964
        %1644 = vmatprep.subr.mxu0 %v967
        %1645 = vmatpush1.msra.mxu0 %v966
        %1646 = vmatprep.subr.mxu0 %v969
        %1647 = vmatpush1.msra.mxu0 %v968
        %1648 = vmatprep.subr.mxu0 %v971
        %1649 = vmatpush1.msra.mxu0 %v970
        %1650 = vmatprep.subr.mxu0 %v973
        %1651 = vmatpush1.msra.mxu0 %v972
        %1652 = vmatprep.subr.mxu0 %v975
        %1653 = vmatpush1.msra.mxu0 %v974
        %1654 = vmatprep.subr.mxu0 %v977
        %1655 = vmatpush1.msra.mxu0 %v976
        %1656 = vmatprep.subr.mxu0 %v979
        %1657 = vmatpush1.msra.mxu0 %v978
        %1658 = vmatprep.subr.mxu0 %v981
        %1659 = vmatpush1.msra.mxu0 %v980
        %1660 = vmatprep.subr.mxu0 %v983
        %1661 = vmatpush1.msra.mxu0 %v982
        %1662 = vmatprep.subr.mxu0 %v985
        %1663 = vmatpush1.msra.mxu0 %v984
        %1664 = vmatprep.subr.mxu0 %v987
        %1665 = vmatpush1.msra.mxu0 %v986
        %1666 = vmatprep.subr.mxu0 %v989
        %1667 = vmatpush1.msra.mxu0 %v988
        %1668 = vmatprep.subr.mxu0 %v991
        %1669 = vmatpush1.msra.mxu0 %v990
        %1670 = vmatprep.subr.mxu0 %v993
        %1671 = vmatpush1.msra.mxu0 %v992
        %1672 = vmatprep.subr.mxu0 %v995
        %1673 = vmatpush1.msra.mxu0 %v994
        %1674 = vmatprep.subr.mxu0 %v997
        %1675 = vmatpush1.msra.mxu0 %v996
        %1676 = vmatprep.subr.mxu0 %v999
        %1677 = vmatpush1.msra.mxu0 %v998
        %1678 = vmatprep.mubr.f32.mxu0 %v1227
        %1679 = vmatmul.mubr.f32.gmra.mrb[0].mxu0 %v1225
        %v1680 = vpop.f32.mrb[0].mxu0
        %v1681 = vadd.f32 %v1592, %v1680
        %v1682 = vpop.f32.mrb[0].mxu0
        %v1683 = vadd.f32 %v1594, %v1682
        %1684 = vmatprep.mubr.f32.mxu0 %v1233
        %1685 = vmatmul.mubr.f32.gmra.mrb[0].mxu0 %v1231
        %v1686 = vpop.f32.mrb[0].mxu0
        %v1687 = vadd.f32 %v1598, %v1686
        %v1688 = vpop.f32.mrb[0].mxu0
        %v1689 = vadd.f32 %v1600, %v1688
        %1690 = vmatprep.mubr.f32.mxu0 %v1239
        %1691 = vmatmul.mubr.f32.gmra.mrb[0].mxu0 %v1237
        %v1692 = vpop.f32.mrb[0].mxu0
        %v1693 = vadd.f32 %v1604, %v1692
        %v1694 = vpop.f32.mrb[0].mxu0
        %v1695 = vadd.f32 %v1606, %v1694
        %1696 = vmatprep.mubr.f32.mxu0 %v1245
        %1697 = vmatmul.mubr.f32.gmra.mrb[0].mxu0 %v1243
        %v1698 = vpop.f32.mrb[0].mxu0
        %v1699 = vadd.f32 %v1610, %v1698
        %v1700 = vpop.f32.mrb[0].mxu0
        %v1701 = vadd.f32 %v1612, %v1700
        %1702 = vdwg.mxu0
        %vm1703 = vcmp.ge.f32.partialorder %v1681, 0.0
        %vm1704 = vcmp.ge.f32.partialorder %v1683, 0.0
        %vm1705 = vcmp.ge.f32.partialorder %v1687, 0.0
        %vm1706 = vcmp.ge.f32.partialorder %v1689, 0.0
        %vm1707 = vcmp.ge.f32.partialorder %v1693, 0.0
        %vm1708 = vcmp.ge.f32.partialorder %v1695, 0.0
        %vm1709 = vcmp.ge.f32.partialorder %v1699, 0.0
        %vm1710 = vcmp.ge.f32.partialorder %v1701, 0.0
        %v1711 = vmul.f32 %v1681, 0.01
        %v1712 = vmul.f32 %v1683, 0.01
        %v1713 = vmul.f32 %v1687, 0.01
        %v1714 = vmul.f32 %v1689, 0.01
        %v1715 = vmul.f32 %v1693, 0.01
        %v1716 = vmul.f32 %v1695, 0.01
        %v1717 = vmul.f32 %v1699, 0.01
        %v1718 = vmul.f32 %v1701, 0.01
        %v1719 = vsel %vm1703, %v1681, %v1711
        %v1720 = vsel %vm1704, %v1683, %v1712
        %v1721 = vsel %vm1705, %v1687, %v1713
        %v1722 = vsel %vm1706, %v1689, %v1714
        %v1723 = vsel %vm1707, %v1693, %v1715
        %v1724 = vsel %vm1708, %v1695, %v1716
        %v1725 = vsel %vm1709, %v1699, %v1717
        %v1726 = vsel %vm1710, %v1701, %v1718
        %v1727 = vld [vmem:[%s4] sm:$0xff]
        %v1728 = vld [vmem:[%s4 + $0x8] sm:$0xff]
        %v1729 = vld [vmem:[%s4 + $0x10] sm:$0xff]
        %v1730 = vld [vmem:[%s4 + $0x18] sm:$0xff]
        %v1731 = vld [vmem:[%s4 + $0x20] sm:$0xff]
        %v1732 = vld [vmem:[%s4 + $0x28] sm:$0xff]
        %v1733 = vld [vmem:[%s4 + $0x30] sm:$0xff]
        %v1734 = vld [vmem:[%s4 + $0x38] sm:$0xff]
        %v1735 = vld [vmem:[%s4 + $0x40] sm:$0xff]
        %v1736 = vld [vmem:[%s4 + $0x48] sm:$0xff]
        %v1737 = vld [vmem:[#allocation2] sm:$0xff]
        %v1738 = vld [vmem:[#allocation2 + $0x8] sm:$0xff]
        %v1739 = vld [vmem:[#allocation2 + $0x10] sm:$0xff]
        %v1740 = vld [vmem:[#allocation2 + $0x18] sm:$0xff]
        %v1741 = vld [vmem:[#allocation2 + $0x20] sm:$0xff]
        %v1742 = vld [vmem:[#allocation2 + $0x28] sm:$0xff]
        %v1743 = vld [vmem:[#allocation2 + $0x30] sm:$0xff]
        %v1744 = vld [vmem:[#allocation2 + $0x38] sm:$0xff]
        %v1745 = vld [vmem:[#allocation2 + $0x40] sm:$0xff]
        %v1746 = vld [vmem:[#allocation2 + $0x48] sm:$0xff]
        %v1747 = vld [vmem:[#allocation2 + $0x50] sm:$0xff]
        %v1748 = vld [vmem:[#allocation2 + $0x58] sm:$0xff]
        %v1749 = vld [vmem:[#allocation2 + $0x60] sm:$0xff]
        %v1750 = vld [vmem:[#allocation2 + $0x68] sm:$0xff]
        %v1751 = vld [vmem:[#allocation2 + $0x70] sm:$0xff]
        %v1752 = vld [vmem:[#allocation2 + $0x78] sm:$0xff]
        %v1753 = vld [vmem:[#allocation2 + $0x80] sm:$0xff]
        %v1754 = vld [vmem:[#allocation2 + $0x88] sm:$0xff]
        %v1755 = vld [vmem:[#allocation2 + $0x90] sm:$0xff]
        %v1756 = vld [vmem:[#allocation2 + $0x98] sm:$0xff]
        %v1757 = vld [vmem:[#allocation2 + $0xa0] sm:$0xff]
        %v1758 = vld [vmem:[#allocation2 + $0xa8] sm:$0xff]
        %v1759 = vld [vmem:[#allocation2 + $0xb0] sm:$0xff]
        %v1760 = vld [vmem:[#allocation2 + $0xb8] sm:$0xff]
        %v1761 = vld [vmem:[#allocation2 + $0xc0] sm:$0xff]
        %v1762 = vld [vmem:[#allocation2 + $0xc8] sm:$0xff]
        %v1763 = vld [vmem:[#allocation2 + $0xd0] sm:$0xff]
        %v1764 = vld [vmem:[#allocation2 + $0xd8] sm:$0xff]
        %v1765 = vld [vmem:[#allocation2 + $0xe0] sm:$0xff]
        %v1766 = vld [vmem:[#allocation2 + $0xe8] sm:$0xff]
        %v1767 = vld [vmem:[#allocation2 + $0xf0] sm:$0xff]
        %v1768 = vld [vmem:[#allocation2 + $0xf8] sm:$0xff]
        %v1769 = vld [vmem:[#allocation2 + $0x100] sm:$0xff]
        %v1770 = vld [vmem:[#allocation2 + $0x108] sm:$0xff]
        %v1771 = vld [vmem:[#allocation2 + $0x110] sm:$0xff]
        %v1772 = vld [vmem:[#allocation2 + $0x118] sm:$0xff]
        %v1773 = vld [vmem:[#allocation2 + $0x120] sm:$0xff]
        %v1774 = vld [vmem:[#allocation2 + $0x128] sm:$0xff]
        %v1775 = vld [vmem:[#allocation2 + $0x130] sm:$0xff]
        %v1776 = vld [vmem:[#allocation2 + $0x138] sm:$0xff]
        %v1777 = vld [vmem:[#allocation2 + $0x140] sm:$0xff]
        %v1778 = vld [vmem:[#allocation2 + $0x148] sm:$0xff]
        %v1779 = vld [vmem:[#allocation2 + $0x150] sm:$0xff]
        %v1780 = vld [vmem:[#allocation2 + $0x158] sm:$0xff]
        %v1781 = vld [vmem:[#allocation2 + $0x160] sm:$0xff]
        %v1782 = vld [vmem:[#allocation2 + $0x168] sm:$0xff]
        %v1783 = vld [vmem:[#allocation2 + $0x170] sm:$0xff]
        %v1784 = vld [vmem:[#allocation2 + $0x178] sm:$0xff]
        %v1785 = vld [vmem:[#allocation2 + $0x180] sm:$0xff]
        %v1786 = vld [vmem:[#allocation2 + $0x188] sm:$0xff]
        %v1787 = vld [vmem:[#allocation2 + $0x190] sm:$0xff]
        %v1788 = vld [vmem:[#allocation2 + $0x198] sm:$0xff]
        %v1789 = vld [vmem:[#allocation2 + $0x1a0] sm:$0xff]
        %v1790 = vld [vmem:[#allocation2 + $0x1a8] sm:$0xff]
        %v1791 = vld [vmem:[#allocation2 + $0x1b0] sm:$0xff]
        %v1792 = vld [vmem:[#allocation2 + $0x1b8] sm:$0xff]
        %v1793 = vld [vmem:[#allocation2 + $0x1c0] sm:$0xff]
        %v1794 = vld [vmem:[#allocation2 + $0x1c8] sm:$0xff]
        %v1795 = vld [vmem:[#allocation2 + $0x1d0] sm:$0xff]
        %v1796 = vld [vmem:[#allocation2 + $0x1d8] sm:$0xff]
        %v1797 = vld [vmem:[#allocation2 + $0x1e0] sm:$0xff]
        %v1798 = vld [vmem:[#allocation2 + $0x1e8] sm:$0xff]
        %v1799 = vld [vmem:[#allocation2 + $0x1f0] sm:$0xff]
        %v1800 = vld [vmem:[#allocation2 + $0x1f8] sm:$0xff]
        %v1801 = vld [vmem:[#allocation2 + $0x200] sm:$0xff]
        %v1802 = vld [vmem:[#allocation2 + $0x208] sm:$0xff]
        %v1803 = vld [vmem:[#allocation2 + $0x210] sm:$0xff]
        %v1804 = vld [vmem:[#allocation2 + $0x218] sm:$0xff]
        %v1805 = vld [vmem:[#allocation2 + $0x220] sm:$0xff]
        %v1806 = vld [vmem:[#allocation2 + $0x228] sm:$0xff]
        %v1807 = vld [vmem:[#allocation2 + $0x230] sm:$0xff]
        %v1808 = vld [vmem:[#allocation2 + $0x238] sm:$0xff]
        %v1809 = vld [vmem:[#allocation2 + $0x240] sm:$0xff]
        %v1810 = vld [vmem:[#allocation2 + $0x248] sm:$0xff]
        %v1811 = vld [vmem:[#allocation2 + $0x250] sm:$0xff]
        %v1812 = vld [vmem:[#allocation2 + $0x258] sm:$0xff]
        %v1813 = vld [vmem:[#allocation2 + $0x260] sm:$0xff]
        %v1814 = vld [vmem:[#allocation2 + $0x268] sm:$0xff]
        %v1815 = vld [vmem:[#allocation2 + $0x270] sm:$0xff]
        %v1816 = vld [vmem:[#allocation2 + $0x278] sm:$0xff]
        %v1817 = vld [vmem:[#allocation2 + $0x280] sm:$0xff]
        %v1818 = vld [vmem:[#allocation2 + $0x288] sm:$0xff]
        %v1819 = vld [vmem:[#allocation2 + $0x290] sm:$0xff]
        %v1820 = vld [vmem:[#allocation2 + $0x298] sm:$0xff]
        %v1821 = vld [vmem:[#allocation2 + $0x2a0] sm:$0xff]
        %v1822 = vld [vmem:[#allocation2 + $0x2a8] sm:$0xff]
        %v1823 = vld [vmem:[#allocation2 + $0x2b0] sm:$0xff]
        %v1824 = vld [vmem:[#allocation2 + $0x2b8] sm:$0xff]
        %v1825 = vld [vmem:[#allocation2 + $0x2c0] sm:$0xff]
        %v1826 = vld [vmem:[#allocation2 + $0x2c8] sm:$0xff]
        %v1827 = vld [vmem:[#allocation2 + $0x2d0] sm:$0xff]
        %v1828 = vld [vmem:[#allocation2 + $0x2d8] sm:$0xff]
        %v1829 = vld [vmem:[#allocation2 + $0x2e0] sm:$0xff]
        %v1830 = vld [vmem:[#allocation2 + $0x2e8] sm:$0xff]
        %v1831 = vld [vmem:[#allocation2 + $0x2f0] sm:$0xff]
        %v1832 = vld [vmem:[#allocation2 + $0x2f8] sm:$0xff]
        %v1833 = vld [vmem:[#allocation2 + $0x300] sm:$0xff]
        %v1834 = vld [vmem:[#allocation2 + $0x308] sm:$0xff]
        %v1835 = vld [vmem:[#allocation2 + $0x310] sm:$0xff]
        %v1836 = vld [vmem:[#allocation2 + $0x318] sm:$0xff]
        %v1837 = vld [vmem:[#allocation2 + $0x320] sm:$0xff]
        %v1838 = vld [vmem:[#allocation2 + $0x328] sm:$0xff]
        %v1839 = vld [vmem:[#allocation2 + $0x330] sm:$0xff]
        %v1840 = vld [vmem:[#allocation2 + $0x338] sm:$0xff]
        %v1841 = vld [vmem:[#allocation2 + $0x340] sm:$0xff]
        %v1842 = vld [vmem:[#allocation2 + $0x348] sm:$0xff]
        %v1843 = vld [vmem:[#allocation2 + $0x350] sm:$0xff]
        %v1844 = vld [vmem:[#allocation2 + $0x358] sm:$0xff]
        %v1845 = vld [vmem:[#allocation2 + $0x360] sm:$0xff]
        %v1846 = vld [vmem:[#allocation2 + $0x368] sm:$0xff]
        %v1847 = vld [vmem:[#allocation2 + $0x370] sm:$0xff]
        %v1848 = vld [vmem:[#allocation2 + $0x378] sm:$0xff]
        %v1849 = vld [vmem:[#allocation2 + $0x380] sm:$0xff]
        %v1850 = vld [vmem:[#allocation2 + $0x388] sm:$0xff]
        %v1851 = vld [vmem:[#allocation2 + $0x390] sm:$0xff]
        %v1852 = vld [vmem:[#allocation2 + $0x398] sm:$0xff]
        %v1853 = vld [vmem:[#allocation2 + $0x3a0] sm:$0xff]
        %v1854 = vld [vmem:[#allocation2 + $0x3a8] sm:$0xff]
        %v1855 = vld [vmem:[#allocation2 + $0x3b0] sm:$0xff]
        %v1856 = vld [vmem:[#allocation2 + $0x3b8] sm:$0xff]
        %v1857 = vld [vmem:[#allocation2 + $0x3c0] sm:$0xff]
        %v1858 = vld [vmem:[#allocation2 + $0x3c8] sm:$0xff]
        %v1859 = vld [vmem:[#allocation2 + $0x3d0] sm:$0xff]
        %v1860 = vld [vmem:[#allocation2 + $0x3d8] sm:$0xff]
        %v1861 = vld [vmem:[#allocation2 + $0x3e0] sm:$0xff]
        %v1862 = vld [vmem:[#allocation2 + $0x3e8] sm:$0xff]
        %v1863 = vld [vmem:[#allocation2 + $0x3f0] sm:$0xff]
        %v1864 = vld [vmem:[#allocation2 + $0x3f8] sm:$0xff]
        %v1865 = vld [vmem:[#allocation2 + $0x400] sm:$0xff]
        %v1866 = vld [vmem:[#allocation2 + $0x408] sm:$0xff]
        %v1867 = vld [vmem:[#allocation2 + $0x410] sm:$0xff]
        %v1868 = vld [vmem:[#allocation2 + $0x418] sm:$0xff]
        %v1869 = vld [vmem:[#allocation2 + $0x420] sm:$0xff]
        %v1870 = vld [vmem:[#allocation2 + $0x428] sm:$0xff]
        %v1871 = vld [vmem:[#allocation2 + $0x430] sm:$0xff]
        %v1872 = vld [vmem:[#allocation2 + $0x438] sm:$0xff]
        %v1873 = vld [vmem:[#allocation2 + $0x440] sm:$0xff]
        %v1874 = vld [vmem:[#allocation2 + $0x448] sm:$0xff]
        %v1875 = vld [vmem:[#allocation2 + $0x450] sm:$0xff]
        %v1876 = vld [vmem:[#allocation2 + $0x458] sm:$0xff]
        %v1877 = vld [vmem:[#allocation2 + $0x460] sm:$0xff]
        %v1878 = vld [vmem:[#allocation2 + $0x468] sm:$0xff]
        %v1879 = vld [vmem:[#allocation2 + $0x470] sm:$0xff]
        %v1880 = vld [vmem:[#allocation2 + $0x478] sm:$0xff]
        %v1881 = vld [vmem:[#allocation2 + $0x480] sm:$0xff]
        %v1882 = vld [vmem:[#allocation2 + $0x488] sm:$0xff]
        %v1883 = vld [vmem:[#allocation2 + $0x490] sm:$0xff]
        %v1884 = vld [vmem:[#allocation2 + $0x498] sm:$0xff]
        %v1885 = vld [vmem:[#allocation2 + $0x4a0] sm:$0xff]
        %v1886 = vld [vmem:[#allocation2 + $0x4a8] sm:$0xff]
        %v1887 = vld [vmem:[#allocation2 + $0x4b0] sm:$0xff]
        %v1888 = vld [vmem:[#allocation2 + $0x4b8] sm:$0xff]
        %v1889 = vld [vmem:[#allocation2 + $0x4c0] sm:$0xff]
        %v1890 = vld [vmem:[#allocation2 + $0x4c8] sm:$0xff]
        %v1891 = vld [vmem:[#allocation2 + $0x4d0] sm:$0xff]
        %v1892 = vld [vmem:[#allocation2 + $0x4d8] sm:$0xff]
        %v1893 = vld [vmem:[#allocation2 + $0x4e0] sm:$0xff]
        %v1894 = vld [vmem:[#allocation2 + $0x4e8] sm:$0xff]
        %v1895 = vld [vmem:[#allocation2 + $0x4f0] sm:$0xff]
        %v1896 = vld [vmem:[#allocation2 + $0x4f8] sm:$0xff]
        %v1897 = vld [vmem:[#allocation2 + $0x500] sm:$0xff]
        %v1898 = vld [vmem:[#allocation2 + $0x508] sm:$0xff]
        %v1899 = vld [vmem:[#allocation2 + $0x510] sm:$0xff]
        %v1900 = vld [vmem:[#allocation2 + $0x518] sm:$0xff]
        %v1901 = vld [vmem:[#allocation2 + $0x520] sm:$0xff]
        %v1902 = vld [vmem:[#allocation2 + $0x528] sm:$0xff]
        %v1903 = vld [vmem:[#allocation2 + $0x530] sm:$0xff]
        %v1904 = vld [vmem:[#allocation2 + $0x538] sm:$0xff]
        %v1905 = vld [vmem:[#allocation2 + $0x540] sm:$0xff]
        %v1906 = vld [vmem:[#allocation2 + $0x548] sm:$0xff]
        %v1907 = vld [vmem:[#allocation2 + $0x550] sm:$0xff]
        %v1908 = vld [vmem:[#allocation2 + $0x558] sm:$0xff]
        %v1909 = vld [vmem:[#allocation2 + $0x560] sm:$0xff]
        %v1910 = vld [vmem:[#allocation2 + $0x568] sm:$0xff]
        %v1911 = vld [vmem:[#allocation2 + $0x570] sm:$0xff]
        %v1912 = vld [vmem:[#allocation2 + $0x578] sm:$0xff]
        %v1913 = vld [vmem:[#allocation2 + $0x580] sm:$0xff]
        %v1914 = vld [vmem:[#allocation2 + $0x588] sm:$0xff]
        %v1915 = vld [vmem:[#allocation2 + $0x590] sm:$0xff]
        %v1916 = vld [vmem:[#allocation2 + $0x598] sm:$0xff]
        %v1917 = vld [vmem:[#allocation2 + $0x5a0] sm:$0xff]
        %v1918 = vld [vmem:[#allocation2 + $0x5a8] sm:$0xff]
        %v1919 = vld [vmem:[#allocation2 + $0x5b0] sm:$0xff]
        %v1920 = vld [vmem:[#allocation2 + $0x5b8] sm:$0xff]
        %v1921 = vld [vmem:[#allocation2 + $0x5c0] sm:$0xff]
        %v1922 = vld [vmem:[#allocation2 + $0x5c8] sm:$0xff]
        %v1923 = vld [vmem:[#allocation2 + $0x5d0] sm:$0xff]
        %v1924 = vld [vmem:[#allocation2 + $0x5d8] sm:$0xff]
        %v1925 = vld [vmem:[#allocation2 + $0x5e0] sm:$0xff]
        %v1926 = vld [vmem:[#allocation2 + $0x5e8] sm:$0xff]
        %v1927 = vld [vmem:[#allocation2 + $0x5f0] sm:$0xff]
        %v1928 = vld [vmem:[#allocation2 + $0x5f8] sm:$0xff]
        %v1929 = vld [vmem:[#allocation2 + $0x600] sm:$0xff]
        %v1930 = vld [vmem:[#allocation2 + $0x608] sm:$0xff]
        %v1931 = vld [vmem:[#allocation2 + $0x610] sm:$0xff]
        %v1932 = vld [vmem:[#allocation2 + $0x618] sm:$0xff]
        %v1933 = vld [vmem:[#allocation2 + $0x620] sm:$0xff]
        %v1934 = vld [vmem:[#allocation2 + $0x628] sm:$0xff]
        %v1935 = vld [vmem:[#allocation2 + $0x630] sm:$0xff]
        %v1936 = vld [vmem:[#allocation2 + $0x638] sm:$0xff]
        %v1937 = vld [vmem:[#allocation2 + $0x640] sm:$0xff]
        %v1938 = vld [vmem:[#allocation2 + $0x648] sm:$0xff]
        %v1939 = vld [vmem:[#allocation2 + $0x650] sm:$0xff]
        %v1940 = vld [vmem:[#allocation2 + $0x658] sm:$0xff]
        %v1941 = vld [vmem:[#allocation2 + $0x660] sm:$0xff]
        %v1942 = vld [vmem:[#allocation2 + $0x668] sm:$0xff]
        %v1943 = vld [vmem:[#allocation2 + $0x670] sm:$0xff]
        %v1944 = vld [vmem:[#allocation2 + $0x678] sm:$0xff]
        %v1945 = vld [vmem:[#allocation2 + $0x680] sm:$0xff]
        %v1946 = vld [vmem:[#allocation2 + $0x688] sm:$0xff]
        %v1947 = vld [vmem:[#allocation2 + $0x690] sm:$0xff]
        %v1948 = vld [vmem:[#allocation2 + $0x698] sm:$0xff]
        %v1949 = vld [vmem:[#allocation2 + $0x6a0] sm:$0xff]
        %v1950 = vld [vmem:[#allocation2 + $0x6a8] sm:$0xff]
        %v1951 = vld [vmem:[#allocation2 + $0x6b0] sm:$0xff]
        %v1952 = vld [vmem:[#allocation2 + $0x6b8] sm:$0xff]
        %v1953 = vld [vmem:[#allocation2 + $0x6c0] sm:$0xff]
        %v1954 = vld [vmem:[#allocation2 + $0x6c8] sm:$0xff]
        %v1955 = vld [vmem:[#allocation2 + $0x6d0] sm:$0xff]
        %v1956 = vld [vmem:[#allocation2 + $0x6d8] sm:$0xff]
        %v1957 = vld [vmem:[#allocation2 + $0x6e0] sm:$0xff]
        %v1958 = vld [vmem:[#allocation2 + $0x6e8] sm:$0xff]
        %v1959 = vld [vmem:[#allocation2 + $0x6f0] sm:$0xff]
        %v1960 = vld [vmem:[#allocation2 + $0x6f8] sm:$0xff]
        %v1961 = vld [vmem:[#allocation2 + $0x700] sm:$0xff]
        %v1962 = vld [vmem:[#allocation2 + $0x708] sm:$0xff]
        %v1963 = vld [vmem:[#allocation2 + $0x710] sm:$0xff]
        %v1964 = vld [vmem:[#allocation2 + $0x718] sm:$0xff]
        %v1965 = vld [vmem:[#allocation2 + $0x720] sm:$0xff]
        %v1966 = vld [vmem:[#allocation2 + $0x728] sm:$0xff]
        %v1967 = vld [vmem:[#allocation2 + $0x730] sm:$0xff]
        %v1968 = vld [vmem:[#allocation2 + $0x738] sm:$0xff]
        %v1969 = vld [vmem:[#allocation2 + $0x740] sm:$0xff]
        %v1970 = vld [vmem:[#allocation2 + $0x748] sm:$0xff]
        %v1971 = vld [vmem:[#allocation2 + $0x750] sm:$0xff]
        %v1972 = vld [vmem:[#allocation2 + $0x758] sm:$0xff]
        %v1973 = vld [vmem:[#allocation2 + $0x760] sm:$0xff]
        %v1974 = vld [vmem:[#allocation2 + $0x768] sm:$0xff]
        %v1975 = vld [vmem:[#allocation2 + $0x770] sm:$0xff]
        %v1976 = vld [vmem:[#allocation2 + $0x778] sm:$0xff]
        %v1977 = vld [vmem:[#allocation2 + $0x780] sm:$0xff]
        %v1978 = vld [vmem:[#allocation2 + $0x788] sm:$0xff]
        %v1979 = vld [vmem:[#allocation2 + $0x790] sm:$0xff]
        %v1980 = vld [vmem:[#allocation2 + $0x798] sm:$0xff]
        %v1981 = vld [vmem:[#allocation2 + $0x7a0] sm:$0xff]
        %v1982 = vld [vmem:[#allocation2 + $0x7a8] sm:$0xff]
        %v1983 = vld [vmem:[#allocation2 + $0x7b0] sm:$0xff]
        %v1984 = vld [vmem:[#allocation2 + $0x7b8] sm:$0xff]
        %v1985 = vld [vmem:[#allocation2 + $0x7c0] sm:$0xff]
        %v1986 = vld [vmem:[#allocation2 + $0x7c8] sm:$0xff]
        %v1987 = vld [vmem:[#allocation2 + $0x7d0] sm:$0xff]
        %v1988 = vld [vmem:[#allocation2 + $0x7d8] sm:$0xff]
        %v1989 = vld [vmem:[#allocation2 + $0x7e0] sm:$0xff]
        %v1990 = vld [vmem:[#allocation2 + $0x7e8] sm:$0xff]
        %v1991 = vld [vmem:[#allocation2 + $0x7f0] sm:$0xff]
        %v1992 = vld [vmem:[#allocation2 + $0x7f8] sm:$0xff]
        %v1993 = vld [vmem:[#allocation2 + $0x800] sm:$0xff]
        %v1994 = vld [vmem:[#allocation2 + $0x808] sm:$0xff]
        %v1995 = vld [vmem:[#allocation2 + $0x810] sm:$0xff]
        %v1996 = vld [vmem:[#allocation2 + $0x818] sm:$0xff]
        %v1997 = vld [vmem:[#allocation2 + $0x820] sm:$0xff]
        %v1998 = vld [vmem:[#allocation2 + $0x828] sm:$0xff]
        %v1999 = vld [vmem:[#allocation2 + $0x830] sm:$0xff]
        %v2000 = vld [vmem:[#allocation2 + $0x838] sm:$0xff]
        %v2001 = vld [vmem:[#allocation2 + $0x840] sm:$0xff]
        %v2002 = vld [vmem:[#allocation2 + $0x848] sm:$0xff]
        %v2003 = vld [vmem:[#allocation2 + $0x850] sm:$0xff]
        %v2004 = vld [vmem:[#allocation2 + $0x858] sm:$0xff]
        %v2005 = vld [vmem:[#allocation2 + $0x860] sm:$0xff]
        %v2006 = vld [vmem:[#allocation2 + $0x868] sm:$0xff]
        %v2007 = vld [vmem:[#allocation2 + $0x870] sm:$0xff]
        %v2008 = vld [vmem:[#allocation2 + $0x878] sm:$0xff]
        %v2009 = vld [vmem:[#allocation2 + $0x880] sm:$0xff]
        %v2010 = vld [vmem:[#allocation2 + $0x888] sm:$0xff]
        %v2011 = vld [vmem:[#allocation2 + $0x890] sm:$0xff]
        %v2012 = vld [vmem:[#allocation2 + $0x898] sm:$0xff]
        %v2013 = vld [vmem:[#allocation2 + $0x8a0] sm:$0xff]
        %v2014 = vld [vmem:[#allocation2 + $0x8a8] sm:$0xff]
        %v2015 = vld [vmem:[#allocation2 + $0x8b0] sm:$0xff]
        %v2016 = vld [vmem:[#allocation2 + $0x8b8] sm:$0xff]
        %v2017 = vld [vmem:[#allocation2 + $0x8c0] sm:$0xff]
        %v2018 = vld [vmem:[#allocation2 + $0x8c8] sm:$0xff]
        %v2019 = vld [vmem:[#allocation2 + $0x8d0] sm:$0xff]
        %v2020 = vld [vmem:[#allocation2 + $0x8d8] sm:$0xff]
        %v2021 = vld [vmem:[#allocation2 + $0x8e0] sm:$0xff]
        %v2022 = vld [vmem:[#allocation2 + $0x8e8] sm:$0xff]
        %v2023 = vld [vmem:[#allocation2 + $0x8f0] sm:$0xff]
        %v2024 = vld [vmem:[#allocation2 + $0x8f8] sm:$0xff]
        %v2025 = vld [vmem:[#allocation2 + $0x900] sm:$0xff]
        %v2026 = vld [vmem:[#allocation2 + $0x908] sm:$0xff]
        %v2027 = vld [vmem:[#allocation2 + $0x910] sm:$0xff]
        %v2028 = vld [vmem:[#allocation2 + $0x918] sm:$0xff]
        %v2029 = vld [vmem:[#allocation2 + $0x920] sm:$0xff]
        %v2030 = vld [vmem:[#allocation2 + $0x928] sm:$0xff]
        %v2031 = vld [vmem:[#allocation2 + $0x930] sm:$0xff]
        %v2032 = vld [vmem:[#allocation2 + $0x938] sm:$0xff]
        %v2033 = vld [vmem:[#allocation2 + $0x940] sm:$0xff]
        %v2034 = vld [vmem:[#allocation2 + $0x948] sm:$0xff]
        %v2035 = vld [vmem:[#allocation2 + $0x950] sm:$0xff]
        %v2036 = vld [vmem:[#allocation2 + $0x958] sm:$0xff]
        %v2037 = vld [vmem:[#allocation2 + $0x960] sm:$0xff]
        %v2038 = vld [vmem:[#allocation2 + $0x968] sm:$0xff]
        %v2039 = vld [vmem:[#allocation2 + $0x970] sm:$0xff]
        %v2040 = vld [vmem:[#allocation2 + $0x978] sm:$0xff]
        %v2041 = vld [vmem:[#allocation2 + $0x980] sm:$0xff]
        %v2042 = vld [vmem:[#allocation2 + $0x988] sm:$0xff]
        %v2043 = vld [vmem:[#allocation2 + $0x990] sm:$0xff]
        %v2044 = vld [vmem:[#allocation2 + $0x998] sm:$0xff]
        %v2045 = vld [vmem:[#allocation2 + $0x9a0] sm:$0xff]
        %v2046 = vld [vmem:[#allocation2 + $0x9a8] sm:$0xff]
        %v2047 = vld [vmem:[#allocation2 + $0x9b0] sm:$0xff]
        %v2048 = vld [vmem:[#allocation2 + $0x9b8] sm:$0xff]
        %v2049 = vld [vmem:[#allocation2 + $0x9c0] sm:$0xff]
        %v2050 = vld [vmem:[#allocation2 + $0x9c8] sm:$0xff]
        %v2051 = vld [vmem:[#allocation2 + $0x9d0] sm:$0xff]
        %v2052 = vld [vmem:[#allocation2 + $0x9d8] sm:$0xff]
        %v2053 = vld [vmem:[#allocation2 + $0x9e0] sm:$0xff]
        %v2054 = vld [vmem:[#allocation2 + $0x9e8] sm:$0xff]
        %v2055 = vld [vmem:[#allocation2 + $0x9f0] sm:$0xff]
        %v2056 = vld [vmem:[#allocation2 + $0x9f8] sm:$0xff]
        %v2057 = vld [vmem:[%s6] sm:$0x3]
        %vm2058 = vcmask 261120
        %v2060 = vsel %vm2058, %v1727, 0
        %v2063 = vsel %vm2058, %v1728, 0
        %v2066 = vsel %vm2058, %v1729, 0
        %v2069 = vsel %vm2058, %v1730, 0
        %v2072 = vsel %vm2058, %v1731, 0
        %v2075 = vsel %vm2058, %v1732, 0
        %v2078 = vsel %vm2058, %v1733, 0
        %v2081 = vsel %vm2058, %v1734, 0
        %v2084 = vsel %vm2058, %v1735, 0
        %v2087 = vsel %vm2058, %v1736, 0
        %2089 = vmatprep.subr.mxu0 %v1720
        %2090 = vmatpush1.msra.mxu0 %v1719
        %2091 = vmatprep.subr.mxu0 %v1722
        %2092 = vmatpush1.msra.mxu0 %v1721
        %2093 = vmatprep.subr.mxu0 %v1724
        %2094 = vmatpush1.msra.mxu0 %v1723
        %2095 = vmatprep.subr.mxu0 %v1726
        %2096 = vmatpush1.msra.mxu0 %v1725
        %2097 = vmatprep.subr.mxu0 0.0
        %2098 = vmatpush1.msra.mxu0 0.0
        %2099 = vmatprep.subr.mxu0 0.0
        %2100 = vmatpush1.msra.mxu0 0.0
        %2101 = vmatprep.subr.mxu0 0.0
        %2102 = vmatpush1.msra.mxu0 0.0
        %2103 = vmatprep.subr.mxu0 0.0
        %2104 = vmatpush1.msra.mxu0 0.0
        %2105 = vmatprep.subr.mxu0 0.0
        %2106 = vmatpush1.msra.mxu0 0.0
        %2107 = vmatprep.subr.mxu0 0.0
        %2108 = vmatpush1.msra.mxu0 0.0
        %2109 = vmatprep.subr.mxu0 0.0
        %2110 = vmatpush1.msra.mxu0 0.0
        %2111 = vmatprep.subr.mxu0 0.0
        %2112 = vmatpush1.msra.mxu0 0.0
        %2113 = vmatprep.subr.mxu0 0.0
        %2114 = vmatpush1.msra.mxu0 0.0
        %2115 = vmatprep.subr.mxu0 0.0
        %2116 = vmatpush1.msra.mxu0 0.0
        %2117 = vmatprep.subr.mxu0 0.0
        %2118 = vmatpush1.msra.mxu0 0.0
        %2119 = vmatprep.subr.mxu0 0.0
        %2120 = vmatpush1.msra.mxu0 0.0
        %2121 = vmatprep.subr.mxu0 0.0
        %2122 = vmatpush1.msra.mxu0 0.0
        %2123 = vmatprep.subr.mxu0 0.0
        %2124 = vmatpush1.msra.mxu0 0.0
        %2125 = vmatprep.subr.mxu0 0.0
        %2126 = vmatpush1.msra.mxu0 0.0
        %2127 = vmatprep.subr.mxu0 0.0
        %2128 = vmatpush1.msra.mxu0 0.0
        %2129 = vmatprep.subr.mxu0 0.0
        %2130 = vmatpush1.msra.mxu0 0.0
        %2131 = vmatprep.subr.mxu0 0.0
        %2132 = vmatpush1.msra.mxu0 0.0
        %2133 = vmatprep.subr.mxu0 0.0
        %2134 = vmatpush1.msra.mxu0 0.0
        %2135 = vmatprep.subr.mxu0 0.0
        %2136 = vmatpush1.msra.mxu0 0.0
        %2137 = vmatprep.subr.mxu0 0.0
        %2138 = vmatpush1.msra.mxu0 0.0
        %2139 = vmatprep.subr.mxu0 0.0
        %2140 = vmatpush1.msra.mxu0 0.0
        %2141 = vmatprep.subr.mxu0 0.0
        %2142 = vmatpush1.msra.mxu0 0.0
        %2143 = vmatprep.subr.mxu0 0.0
        %2144 = vmatpush1.msra.mxu0 0.0
        %2145 = vmatprep.subr.mxu0 0.0
        %2146 = vmatpush1.msra.mxu0 0.0
        %2147 = vmatprep.subr.mxu0 0.0
        %2148 = vmatpush1.msra.mxu0 0.0
        %2149 = vmatprep.subr.mxu0 0.0
        %2150 = vmatpush1.msra.mxu0 0.0
        %2151 = vmatprep.subr.mxu0 0.0
        %2152 = vmatpush1.msra.mxu0 0.0
        %2153 = vmatprep.mubr.f32.mxu0 0.0
        %2154 = vmatmul.mubr.f32.gmra.mrb[0].mxu0 %v2060
        %v2155 = vpop.f32.mrb[0].mxu0
        %v2156 = vadd.f32 0.0, %v2155
        %v2157 = vpop.f32.mrb[0].mxu0
        %v2158 = vadd.f32 0.0, %v2157
        %2159 = vmatprep.mubr.f32.mxu0 0.0
        %2160 = vmatmul.mubr.f32.gmra.mrb[0].mxu0 %v2063
        %v2161 = vpop.f32.mrb[0].mxu0
        %v2162 = vadd.f32 0.0, %v2161
        %v2163 = vpop.f32.mrb[0].mxu0
        %v2164 = vadd.f32 0.0, %v2163
        %2165 = vmatprep.mubr.f32.mxu0 0.0
        %2166 = vmatmul.mubr.f32.gmra.mrb[0].mxu0 %v2066
        %v2167 = vpop.f32.mrb[0].mxu0
        %v2168 = vadd.f32 0.0, %v2167
        %v2169 = vpop.f32.mrb[0].mxu0
        %v2170 = vadd.f32 0.0, %v2169
        %2171 = vmatprep.mubr.f32.mxu0 0.0
        %2172 = vmatmul.mubr.f32.gmra.mrb[0].mxu0 %v2069
        %v2173 = vpop.f32.mrb[0].mxu0
        %v2174 = vadd.f32 0.0, %v2173
        %v2175 = vpop.f32.mrb[0].mxu0
        %v2176 = vadd.f32 0.0, %v2175
        %2177 = vmatprep.mubr.f32.mxu0 0.0
        %2178 = vmatmul.mubr.f32.gmra.mrb[0].mxu0 %v2072
        %v2179 = vpop.f32.mrb[0].mxu0
        %v2180 = vadd.f32 0.0, %v2179
        %v2181 = vpop.f32.mrb[0].mxu0
        %v2182 = vadd.f32 0.0, %v2181
        %2183 = vmatprep.mubr.f32.mxu0 0.0
        %2184 = vmatmul.mubr.f32.gmra.mrb[0].mxu0 %v2075
        %v2185 = vpop.f32.mrb[0].mxu0
        %v2186 = vadd.f32 0.0, %v2185
        %v2187 = vpop.f32.mrb[0].mxu0
        %v2188 = vadd.f32 0.0, %v2187
        %2189 = vmatprep.mubr.f32.mxu0 0.0
        %2190 = vmatmul.mubr.f32.gmra.mrb[0].mxu0 %v2078
        %v2191 = vpop.f32.mrb[0].mxu0
        %v2192 = vadd.f32 0.0, %v2191
        %v2193 = vpop.f32.mrb[0].mxu0
        %v2194 = vadd.f32 0.0, %v2193
        %2195 = vmatprep.mubr.f32.mxu0 0.0
        %2196 = vmatmul.mubr.f32.gmra.mrb[0].mxu0 %v2081
        %v2197 = vpop.f32.mrb[0].mxu0
        %v2198 = vadd.f32 0.0, %v2197
        %v2199 = vpop.f32.mrb[0].mxu0
        %v2200 = vadd.f32 0.0, %v2199
        %2201 = vmatprep.mubr.f32.mxu0 0.0
        %2202 = vmatmul.mubr.f32.gmra.mrb[0].mxu0 %v2084
        %v2203 = vpop.f32.mrb[0].mxu0
        %v2204 = vadd.f32 0.0, %v2203
        %v2205 = vpop.f32.mrb[0].mxu0
        %v2206 = vadd.f32 0.0, %v2205
        %2207 = vmatprep.mubr.f32.mxu0 0.0
        %2208 = vmatmul.mubr.f32.gmra.mrb[0].mxu0 %v2087
        %v2209 = vpop.f32.mrb[0].mxu0
        %v2210 = vadd.f32 0.0, %v2209
        %v2211 = vpop.f32.mrb[0].mxu0
        %v2212 = vadd.f32 0.0, %v2211
        %2213 = vdwg.mxu0
        %v2215 = vlaneseq
        %v2216 = vshrl.u32 %v2215, 7
        %v2217 = vsub.s32 0, %v2216
        %v2218 = vrot.slane %v2057, %v2217
        %v2219 = vlaneseq
        %v2220 = vshrl.u32 %v2219, 7
        %v2221 = vsub.s32 1, %v2220
        %v2222 = vrot.slane %v2057, %v2221
        %2225 = vmatprep.subr.mxu0 %v1738
        %2226 = vmatpush1.msra.mxu0 %v1737
        %2227 = vmatprep.subr.mxu0 %v1740
        %2228 = vmatpush1.msra.mxu0 %v1739
        %2229 = vmatprep.subr.mxu0 %v1742
        %2230 = vmatpush1.msra.mxu0 %v1741
        %2231 = vmatprep.subr.mxu0 %v1744
        %2232 = vmatpush1.msra.mxu0 %v1743
        %2233 = vmatprep.subr.mxu0 %v1746
        %2234 = vmatpush1.msra.mxu0 %v1745
        %2235 = vmatprep.subr.mxu0 %v1748
        %2236 = vmatpush1.msra.mxu0 %v1747
        %2237 = vmatprep.subr.mxu0 %v1750
        %2238 = vmatpush1.msra.mxu0 %v1749
        %2239 = vmatprep.subr.mxu0 %v1752
        %2240 = vmatpush1.msra.mxu0 %v1751
        %2241 = vmatprep.subr.mxu0 %v1754
        %2242 = vmatpush1.msra.mxu0 %v1753
        %2243 = vmatprep.subr.mxu0 %v1756
        %2244 = vmatpush1.msra.mxu0 %v1755
        %2245 = vmatprep.subr.mxu0 %v1758
        %2246 = vmatpush1.msra.mxu0 %v1757
        %2247 = vmatprep.subr.mxu0 %v1760
        %2248 = vmatpush1.msra.mxu0 %v1759
        %2249 = vmatprep.subr.mxu0 %v1762
        %2250 = vmatpush1.msra.mxu0 %v1761
        %2251 = vmatprep.subr.mxu0 %v1764
        %2252 = vmatpush1.msra.mxu0 %v1763
        %2253 = vmatprep.subr.mxu0 %v1766
        %2254 = vmatpush1.msra.mxu0 %v1765
        %2255 = vmatprep.subr.mxu0 %v1768
        %2256 = vmatpush1.msra.mxu0 %v1767
        %2257 = vmatprep.subr.mxu0 %v1770
        %2258 = vmatpush1.msra.mxu0 %v1769
        %2259 = vmatprep.subr.mxu0 %v1772
        %2260 = vmatpush1.msra.mxu0 %v1771
        %2261 = vmatprep.subr.mxu0 %v1774
        %2262 = vmatpush1.msra.mxu0 %v1773
        %2263 = vmatprep.subr.mxu0 %v1776
        %2264 = vmatpush1.msra.mxu0 %v1775
        %2265 = vmatprep.subr.mxu0 %v1778
        %2266 = vmatpush1.msra.mxu0 %v1777
        %2267 = vmatprep.subr.mxu0 %v1780
        %2268 = vmatpush1.msra.mxu0 %v1779
        %2269 = vmatprep.subr.mxu0 %v1782
        %2270 = vmatpush1.msra.mxu0 %v1781
        %2271 = vmatprep.subr.mxu0 %v1784
        %2272 = vmatpush1.msra.mxu0 %v1783
        %2273 = vmatprep.subr.mxu0 %v1786
        %2274 = vmatpush1.msra.mxu0 %v1785
        %2275 = vmatprep.subr.mxu0 %v1788
        %2276 = vmatpush1.msra.mxu0 %v1787
        %2277 = vmatprep.subr.mxu0 %v1790
        %2278 = vmatpush1.msra.mxu0 %v1789
        %2279 = vmatprep.subr.mxu0 %v1792
        %2280 = vmatpush1.msra.mxu0 %v1791
        %2281 = vmatprep.subr.mxu0 %v1794
        %2282 = vmatpush1.msra.mxu0 %v1793
        %2283 = vmatprep.subr.mxu0 %v1796
        %2284 = vmatpush1.msra.mxu0 %v1795
        %2285 = vmatprep.subr.mxu0 %v1798
        %2286 = vmatpush1.msra.mxu0 %v1797
        %2287 = vmatprep.subr.mxu0 %v1800
        %2288 = vmatpush1.msra.mxu0 %v1799
        %2289 = vmatprep.mubr.f32.mxu0 %v2158
        %2290 = vmatmul.mubr.f32.gmra.mrb[0].mxu0 %v2156
        %v2291 = vpop.f32.mrb[0].mxu0
        %v2292 = vadd.f32 %v2218, %v2291
        %v2293 = vpop.f32.mrb[0].mxu0
        %v2294 = vadd.f32 %v2222, %v2293
        %2295 = vmatprep.mubr.f32.mxu0 %v2164
        %2296 = vmatmul.mubr.f32.gmra.mrb[0].mxu0 %v2162
        %v2297 = vpop.f32.mrb[0].mxu0
        %v2298 = vadd.f32 %v2218, %v2297
        %v2299 = vpop.f32.mrb[0].mxu0
        %v2300 = vadd.f32 %v2222, %v2299
        %2301 = vdwg.mxu0
        %2302 = vmatprep.subr.mxu0 %v1802
        %2303 = vmatpush1.msra.mxu0 %v1801
        %2304 = vmatprep.subr.mxu0 %v1804
        %2305 = vmatpush1.msra.mxu0 %v1803
        %2306 = vmatprep.subr.mxu0 %v1806
        %2307 = vmatpush1.msra.mxu0 %v1805
        %2308 = vmatprep.subr.mxu0 %v1808
        %2309 = vmatpush1.msra.mxu0 %v1807
        %2310 = vmatprep.subr.mxu0 %v1810
        %2311 = vmatpush1.msra.mxu0 %v1809
        %2312 = vmatprep.subr.mxu0 %v1812
        %2313 = vmatpush1.msra.mxu0 %v1811
        %2314 = vmatprep.subr.mxu0 %v1814
        %2315 = vmatpush1.msra.mxu0 %v1813
        %2316 = vmatprep.subr.mxu0 %v1816
        %2317 = vmatpush1.msra.mxu0 %v1815
        %2318 = vmatprep.subr.mxu0 %v1818
        %2319 = vmatpush1.msra.mxu0 %v1817
        %2320 = vmatprep.subr.mxu0 %v1820
        %2321 = vmatpush1.msra.mxu0 %v1819
        %2322 = vmatprep.subr.mxu0 %v1822
        %2323 = vmatpush1.msra.mxu0 %v1821
        %2324 = vmatprep.subr.mxu0 %v1824
        %2325 = vmatpush1.msra.mxu0 %v1823
        %2326 = vmatprep.subr.mxu0 %v1826
        %2327 = vmatpush1.msra.mxu0 %v1825
        %2328 = vmatprep.subr.mxu0 %v1828
        %2329 = vmatpush1.msra.mxu0 %v1827
        %2330 = vmatprep.subr.mxu0 %v1830
        %2331 = vmatpush1.msra.mxu0 %v1829
        %2332 = vmatprep.subr.mxu0 %v1832
        %2333 = vmatpush1.msra.mxu0 %v1831
        %2334 = vmatprep.subr.mxu0 %v1834
        %2335 = vmatpush1.msra.mxu0 %v1833
        %2336 = vmatprep.subr.mxu0 %v1836
        %2337 = vmatpush1.msra.mxu0 %v1835
        %2338 = vmatprep.subr.mxu0 %v1838
        %2339 = vmatpush1.msra.mxu0 %v1837
        %2340 = vmatprep.subr.mxu0 %v1840
        %2341 = vmatpush1.msra.mxu0 %v1839
        %2342 = vmatprep.subr.mxu0 %v1842
        %2343 = vmatpush1.msra.mxu0 %v1841
        %2344 = vmatprep.subr.mxu0 %v1844
        %2345 = vmatpush1.msra.mxu0 %v1843
        %2346 = vmatprep.subr.mxu0 %v1846
        %2347 = vmatpush1.msra.mxu0 %v1845
        %2348 = vmatprep.subr.mxu0 %v1848
        %2349 = vmatpush1.msra.mxu0 %v1847
        %2350 = vmatprep.subr.mxu0 %v1850
        %2351 = vmatpush1.msra.mxu0 %v1849
        %2352 = vmatprep.subr.mxu0 %v1852
        %2353 = vmatpush1.msra.mxu0 %v1851
        %2354 = vmatprep.subr.mxu0 %v1854
        %2355 = vmatpush1.msra.mxu0 %v1853
        %2356 = vmatprep.subr.mxu0 %v1856
        %2357 = vmatpush1.msra.mxu0 %v1855
        %2358 = vmatprep.subr.mxu0 %v1858
        %2359 = vmatpush1.msra.mxu0 %v1857
        %2360 = vmatprep.subr.mxu0 %v1860
        %2361 = vmatpush1.msra.mxu0 %v1859
        %2362 = vmatprep.subr.mxu0 %v1862
        %2363 = vmatpush1.msra.mxu0 %v1861
        %2364 = vmatprep.subr.mxu0 %v1864
        %2365 = vmatpush1.msra.mxu0 %v1863
        %2366 = vmatprep.mubr.f32.mxu0 %v2170
        %2367 = vmatmul.mubr.f32.gmra.mrb[0].mxu0 %v2168
        %v2368 = vpop.f32.mrb[0].mxu0
        %v2369 = vadd.f32 %v2292, %v2368
        %v2370 = vpop.f32.mrb[0].mxu0
        %v2371 = vadd.f32 %v2294, %v2370
        %2372 = vmatprep.mubr.f32.mxu0 %v2176
        %2373 = vmatmul.mubr.f32.gmra.mrb[0].mxu0 %v2174
        %v2374 = vpop.f32.mrb[0].mxu0
        %v2375 = vadd.f32 %v2298, %v2374
        %v2376 = vpop.f32.mrb[0].mxu0
        %v2377 = vadd.f32 %v2300, %v2376
        %2378 = vdwg.mxu0
        %2379 = vmatprep.subr.mxu0 %v1866
        %2380 = vmatpush1.msra.mxu0 %v1865
        %2381 = vmatprep.subr.mxu0 %v1868
        %2382 = vmatpush1.msra.mxu0 %v1867
        %2383 = vmatprep.subr.mxu0 %v1870
        %2384 = vmatpush1.msra.mxu0 %v1869
        %2385 = vmatprep.subr.mxu0 %v1872
        %2386 = vmatpush1.msra.mxu0 %v1871
        %2387 = vmatprep.subr.mxu0 %v1874
        %2388 = vmatpush1.msra.mxu0 %v1873
        %2389 = vmatprep.subr.mxu0 %v1876
        %2390 = vmatpush1.msra.mxu0 %v1875
        %2391 = vmatprep.subr.mxu0 %v1878
        %2392 = vmatpush1.msra.mxu0 %v1877
        %2393 = vmatprep.subr.mxu0 %v1880
        %2394 = vmatpush1.msra.mxu0 %v1879
        %2395 = vmatprep.subr.mxu0 %v1882
        %2396 = vmatpush1.msra.mxu0 %v1881
        %2397 = vmatprep.subr.mxu0 %v1884
        %2398 = vmatpush1.msra.mxu0 %v1883
        %2399 = vmatprep.subr.mxu0 %v1886
        %2400 = vmatpush1.msra.mxu0 %v1885
        %2401 = vmatprep.subr.mxu0 %v1888
        %2402 = vmatpush1.msra.mxu0 %v1887
        %2403 = vmatprep.subr.mxu0 %v1890
        %2404 = vmatpush1.msra.mxu0 %v1889
        %2405 = vmatprep.subr.mxu0 %v1892
        %2406 = vmatpush1.msra.mxu0 %v1891
        %2407 = vmatprep.subr.mxu0 %v1894
        %2408 = vmatpush1.msra.mxu0 %v1893
        %2409 = vmatprep.subr.mxu0 %v1896
        %2410 = vmatpush1.msra.mxu0 %v1895
        %2411 = vmatprep.subr.mxu0 %v1898
        %2412 = vmatpush1.msra.mxu0 %v1897
        %2413 = vmatprep.subr.mxu0 %v1900
        %2414 = vmatpush1.msra.mxu0 %v1899
        %2415 = vmatprep.subr.mxu0 %v1902
        %2416 = vmatpush1.msra.mxu0 %v1901
        %2417 = vmatprep.subr.mxu0 %v1904
        %2418 = vmatpush1.msra.mxu0 %v1903
        %2419 = vmatprep.subr.mxu0 %v1906
        %2420 = vmatpush1.msra.mxu0 %v1905
        %2421 = vmatprep.subr.mxu0 %v1908
        %2422 = vmatpush1.msra.mxu0 %v1907
        %2423 = vmatprep.subr.mxu0 %v1910
        %2424 = vmatpush1.msra.mxu0 %v1909
        %2425 = vmatprep.subr.mxu0 %v1912
        %2426 = vmatpush1.msra.mxu0 %v1911
        %2427 = vmatprep.subr.mxu0 %v1914
        %2428 = vmatpush1.msra.mxu0 %v1913
        %2429 = vmatprep.subr.mxu0 %v1916
        %2430 = vmatpush1.msra.mxu0 %v1915
        %2431 = vmatprep.subr.mxu0 %v1918
        %2432 = vmatpush1.msra.mxu0 %v1917
        %2433 = vmatprep.subr.mxu0 %v1920
        %2434 = vmatpush1.msra.mxu0 %v1919
        %2435 = vmatprep.subr.mxu0 %v1922
        %2436 = vmatpush1.msra.mxu0 %v1921
        %2437 = vmatprep.subr.mxu0 %v1924
        %2438 = vmatpush1.msra.mxu0 %v1923
        %2439 = vmatprep.subr.mxu0 %v1926
        %2440 = vmatpush1.msra.mxu0 %v1925
        %2441 = vmatprep.subr.mxu0 %v1928
        %2442 = vmatpush1.msra.mxu0 %v1927
        %2443 = vmatprep.mubr.f32.mxu0 %v2182
        %2444 = vmatmul.mubr.f32.gmra.mrb[0].mxu0 %v2180
        %v2445 = vpop.f32.mrb[0].mxu0
        %v2446 = vadd.f32 %v2369, %v2445
        %v2447 = vpop.f32.mrb[0].mxu0
        %v2448 = vadd.f32 %v2371, %v2447
        %2449 = vmatprep.mubr.f32.mxu0 %v2188
        %2450 = vmatmul.mubr.f32.gmra.mrb[0].mxu0 %v2186
        %v2451 = vpop.f32.mrb[0].mxu0
        %v2452 = vadd.f32 %v2375, %v2451
        %v2453 = vpop.f32.mrb[0].mxu0
        %v2454 = vadd.f32 %v2377, %v2453
        %2455 = vdwg.mxu0
        %2456 = vmatprep.subr.mxu0 %v1930
        %2457 = vmatpush1.msra.mxu0 %v1929
        %2458 = vmatprep.subr.mxu0 %v1932
        %2459 = vmatpush1.msra.mxu0 %v1931
        %2460 = vmatprep.subr.mxu0 %v1934
        %2461 = vmatpush1.msra.mxu0 %v1933
        %2462 = vmatprep.subr.mxu0 %v1936
        %2463 = vmatpush1.msra.mxu0 %v1935
        %2464 = vmatprep.subr.mxu0 %v1938
        %2465 = vmatpush1.msra.mxu0 %v1937
        %2466 = vmatprep.subr.mxu0 %v1940
        %2467 = vmatpush1.msra.mxu0 %v1939
        %2468 = vmatprep.subr.mxu0 %v1942
        %2469 = vmatpush1.msra.mxu0 %v1941
        %2470 = vmatprep.subr.mxu0 %v1944
        %2471 = vmatpush1.msra.mxu0 %v1943
        %2472 = vmatprep.subr.mxu0 %v1946
        %2473 = vmatpush1.msra.mxu0 %v1945
        %2474 = vmatprep.subr.mxu0 %v1948
        %2475 = vmatpush1.msra.mxu0 %v1947
        %2476 = vmatprep.subr.mxu0 %v1950
        %2477 = vmatpush1.msra.mxu0 %v1949
        %2478 = vmatprep.subr.mxu0 %v1952
        %2479 = vmatpush1.msra.mxu0 %v1951
        %2480 = vmatprep.subr.mxu0 %v1954
        %2481 = vmatpush1.msra.mxu0 %v1953
        %2482 = vmatprep.subr.mxu0 %v1956
        %2483 = vmatpush1.msra.mxu0 %v1955
        %2484 = vmatprep.subr.mxu0 %v1958
        %2485 = vmatpush1.msra.mxu0 %v1957
        %2486 = vmatprep.subr.mxu0 %v1960
        %2487 = vmatpush1.msra.mxu0 %v1959
        %2488 = vmatprep.subr.mxu0 %v1962
        %2489 = vmatpush1.msra.mxu0 %v1961
        %2490 = vmatprep.subr.mxu0 %v1964
        %2491 = vmatpush1.msra.mxu0 %v1963
        %2492 = vmatprep.subr.mxu0 %v1966
        %2493 = vmatpush1.msra.mxu0 %v1965
        %2494 = vmatprep.subr.mxu0 %v1968
        %2495 = vmatpush1.msra.mxu0 %v1967
        %2496 = vmatprep.subr.mxu0 %v1970
        %2497 = vmatpush1.msra.mxu0 %v1969
        %2498 = vmatprep.subr.mxu0 %v1972
        %2499 = vmatpush1.msra.mxu0 %v1971
        %2500 = vmatprep.subr.mxu0 %v1974
        %2501 = vmatpush1.msra.mxu0 %v1973
        %2502 = vmatprep.subr.mxu0 %v1976
        %2503 = vmatpush1.msra.mxu0 %v1975
        %2504 = vmatprep.subr.mxu0 %v1978
        %2505 = vmatpush1.msra.mxu0 %v1977
        %2506 = vmatprep.subr.mxu0 %v1980
        %2507 = vmatpush1.msra.mxu0 %v1979
        %2508 = vmatprep.subr.mxu0 %v1982
        %2509 = vmatpush1.msra.mxu0 %v1981
        %2510 = vmatprep.subr.mxu0 %v1984
        %2511 = vmatpush1.msra.mxu0 %v1983
        %2512 = vmatprep.subr.mxu0 %v1986
        %2513 = vmatpush1.msra.mxu0 %v1985
        %2514 = vmatprep.subr.mxu0 %v1988
        %2515 = vmatpush1.msra.mxu0 %v1987
        %2516 = vmatprep.subr.mxu0 %v1990
        %2517 = vmatpush1.msra.mxu0 %v1989
        %2518 = vmatprep.subr.mxu0 %v1992
        %2519 = vmatpush1.msra.mxu0 %v1991
        %2520 = vmatprep.mubr.f32.mxu0 %v2194
        %2521 = vmatmul.mubr.f32.gmra.mrb[0].mxu0 %v2192
        %v2522 = vpop.f32.mrb[0].mxu0
        %v2523 = vadd.f32 %v2446, %v2522
        %v2524 = vpop.f32.mrb[0].mxu0
        %v2525 = vadd.f32 %v2448, %v2524
        %2526 = vmatprep.mubr.f32.mxu0 %v2200
        %2527 = vmatmul.mubr.f32.gmra.mrb[0].mxu0 %v2198
        %v2528 = vpop.f32.mrb[0].mxu0
        %v2529 = vadd.f32 %v2452, %v2528
        %v2530 = vpop.f32.mrb[0].mxu0
        %v2531 = vadd.f32 %v2454, %v2530
        %2532 = vdwg.mxu0
        %2533 = vmatprep.subr.mxu0 %v1994
        %2534 = vmatpush1.msra.mxu0 %v1993
        %2535 = vmatprep.subr.mxu0 %v1996
        %2536 = vmatpush1.msra.mxu0 %v1995
        %2537 = vmatprep.subr.mxu0 %v1998
        %2538 = vmatpush1.msra.mxu0 %v1997
        %2539 = vmatprep.subr.mxu0 %v2000
        %2540 = vmatpush1.msra.mxu0 %v1999
        %2541 = vmatprep.subr.mxu0 %v2002
        %2542 = vmatpush1.msra.mxu0 %v2001
        %2543 = vmatprep.subr.mxu0 %v2004
        %2544 = vmatpush1.msra.mxu0 %v2003
        %2545 = vmatprep.subr.mxu0 %v2006
        %2546 = vmatpush1.msra.mxu0 %v2005
        %2547 = vmatprep.subr.mxu0 %v2008
        %2548 = vmatpush1.msra.mxu0 %v2007
        %2549 = vmatprep.subr.mxu0 %v2010
        %2550 = vmatpush1.msra.mxu0 %v2009
        %2551 = vmatprep.subr.mxu0 %v2012
        %2552 = vmatpush1.msra.mxu0 %v2011
        %2553 = vmatprep.subr.mxu0 %v2014
        %2554 = vmatpush1.msra.mxu0 %v2013
        %2555 = vmatprep.subr.mxu0 %v2016
        %2556 = vmatpush1.msra.mxu0 %v2015
        %2557 = vmatprep.subr.mxu0 %v2018
        %2558 = vmatpush1.msra.mxu0 %v2017
        %2559 = vmatprep.subr.mxu0 %v2020
        %2560 = vmatpush1.msra.mxu0 %v2019
        %2561 = vmatprep.subr.mxu0 %v2022
        %2562 = vmatpush1.msra.mxu0 %v2021
        %2563 = vmatprep.subr.mxu0 %v2024
        %2564 = vmatpush1.msra.mxu0 %v2023
        %2565 = vmatprep.subr.mxu0 %v2026
        %2566 = vmatpush1.msra.mxu0 %v2025
        %2567 = vmatprep.subr.mxu0 %v2028
        %2568 = vmatpush1.msra.mxu0 %v2027
        %2569 = vmatprep.subr.mxu0 %v2030
        %2570 = vmatpush1.msra.mxu0 %v2029
        %2571 = vmatprep.subr.mxu0 %v2032
        %2572 = vmatpush1.msra.mxu0 %v2031
        %2573 = vmatprep.subr.mxu0 %v2034
        %2574 = vmatpush1.msra.mxu0 %v2033
        %2575 = vmatprep.subr.mxu0 %v2036
        %2576 = vmatpush1.msra.mxu0 %v2035
        %2577 = vmatprep.subr.mxu0 %v2038
        %2578 = vmatpush1.msra.mxu0 %v2037
        %2579 = vmatprep.subr.mxu0 %v2040
        %2580 = vmatpush1.msra.mxu0 %v2039
        %2581 = vmatprep.subr.mxu0 %v2042
        %2582 = vmatpush1.msra.mxu0 %v2041
        %2583 = vmatprep.subr.mxu0 %v2044
        %2584 = vmatpush1.msra.mxu0 %v2043
        %2585 = vmatprep.subr.mxu0 %v2046
        %2586 = vmatpush1.msra.mxu0 %v2045
        %2587 = vmatprep.subr.mxu0 %v2048
        %2588 = vmatpush1.msra.mxu0 %v2047
        %2589 = vmatprep.subr.mxu0 %v2050
        %2590 = vmatpush1.msra.mxu0 %v2049
        %2591 = vmatprep.subr.mxu0 %v2052
        %2592 = vmatpush1.msra.mxu0 %v2051
        %2593 = vmatprep.subr.mxu0 %v2054
        %2594 = vmatpush1.msra.mxu0 %v2053
        %2595 = vmatprep.subr.mxu0 %v2056
        %2596 = vmatpush1.msra.mxu0 %v2055
        %2597 = vmatprep.mubr.f32.mxu0 %v2206
        %2598 = vmatmul.mubr.f32.gmra.mrb[0].mxu0 %v2204
        %v2599 = vpop.f32.mrb[0].mxu0
        %v2600 = vadd.f32 %v2523, %v2599
        %v2601 = vpop.f32.mrb[0].mxu0
        %v2602 = vadd.f32 %v2525, %v2601
        %2603 = vmatprep.mubr.f32.mxu0 %v2212
        %2604 = vmatmul.mubr.f32.gmra.mrb[0].mxu0 %v2210
        %v2605 = vpop.f32.mrb[0].mxu0
        %v2606 = vadd.f32 %v2529, %v2605
        %v2607 = vpop.f32.mrb[0].mxu0
        %v2608 = vadd.f32 %v2531, %v2607
        %2609 = vdwg.mxu0
        %vm2610 = vcmp.ge.f32.partialorder %v2600, 0.0
        %vm2611 = vcmp.ge.f32.partialorder %v2602, 0.0
        %vm2612 = vcmp.ge.f32.partialorder %v2606, 0.0
        %vm2613 = vcmp.ge.f32.partialorder %v2608, 0.0
        %v2614 = vmul.f32 %v2600, 0.01
        %v2615 = vmul.f32 %v2602, 0.01
        %v2616 = vmul.f32 %v2606, 0.01
        %v2617 = vmul.f32 %v2608, 0.01
        %v2618 = vsel %vm2610, %v2600, %v2614
        %v2619 = vsel %vm2611, %v2602, %v2615
        %v2620 = vsel %vm2612, %v2606, %v2616
        %v2621 = vsel %vm2613, %v2608, %v2617
        %v2622 = vld [vmem:[%s7] sm:$0xff]
        %v2623 = vld [vmem:[%s7 + $0x8] sm:$0xff]
        %v2624 = vld [vmem:[%s7 + $0x10] sm:$0xff]
        %v2625 = vld [vmem:[%s7 + $0x18] sm:$0xff]
        %v2626 = vld [vmem:[%s7 + $0x20] sm:$0xff]
        %v2627 = vld [vmem:[#allocation5] sm:$0xff]
        %v2628 = vld [vmem:[#allocation5 + $0x8] sm:$0xff]
        %v2629 = vld [vmem:[#allocation5 + $0x10] sm:$0xff]
        %v2630 = vld [vmem:[#allocation5 + $0x18] sm:$0xff]
        %v2631 = vld [vmem:[#allocation5 + $0x20] sm:$0xff]
        %v2632 = vld [vmem:[#allocation5 + $0x28] sm:$0xff]
        %v2633 = vld [vmem:[#allocation5 + $0x30] sm:$0xff]
        %v2634 = vld [vmem:[#allocation5 + $0x38] sm:$0xff]
        %v2635 = vld [vmem:[#allocation5 + $0x40] sm:$0xff]
        %v2636 = vld [vmem:[#allocation5 + $0x48] sm:$0xff]
        %v2637 = vld [vmem:[#allocation5 + $0x50] sm:$0xff]
        %v2638 = vld [vmem:[#allocation5 + $0x58] sm:$0xff]
        %v2639 = vld [vmem:[#allocation5 + $0x60] sm:$0xff]
        %v2640 = vld [vmem:[#allocation5 + $0x68] sm:$0xff]
        %v2641 = vld [vmem:[#allocation5 + $0x70] sm:$0xff]
        %v2642 = vld [vmem:[#allocation5 + $0x78] sm:$0xff]
        %v2643 = vld [vmem:[#allocation5 + $0x80] sm:$0xff]
        %v2644 = vld [vmem:[#allocation5 + $0x88] sm:$0xff]
        %v2645 = vld [vmem:[#allocation5 + $0x90] sm:$0xff]
        %v2646 = vld [vmem:[#allocation5 + $0x98] sm:$0xff]
        %v2647 = vld [vmem:[#allocation5 + $0xa0] sm:$0xff]
        %v2648 = vld [vmem:[#allocation5 + $0xa8] sm:$0xff]
        %v2649 = vld [vmem:[#allocation5 + $0xb0] sm:$0xff]
        %v2650 = vld [vmem:[#allocation5 + $0xb8] sm:$0xff]
        %v2651 = vld [vmem:[#allocation5 + $0xc0] sm:$0xff]
        %v2652 = vld [vmem:[#allocation5 + $0xc8] sm:$0xff]
        %v2653 = vld [vmem:[#allocation5 + $0xd0] sm:$0xff]
        %v2654 = vld [vmem:[#allocation5 + $0xd8] sm:$0xff]
        %v2655 = vld [vmem:[#allocation5 + $0xe0] sm:$0xff]
        %v2656 = vld [vmem:[#allocation5 + $0xe8] sm:$0xff]
        %v2657 = vld [vmem:[#allocation5 + $0xf0] sm:$0xff]
        %v2658 = vld [vmem:[#allocation5 + $0xf8] sm:$0xff]
        %v2659 = vld [vmem:[#allocation5 + $0x100] sm:$0xff]
        %v2660 = vld [vmem:[#allocation5 + $0x108] sm:$0xff]
        %v2661 = vld [vmem:[#allocation5 + $0x110] sm:$0xff]
        %v2662 = vld [vmem:[#allocation5 + $0x118] sm:$0xff]
        %v2663 = vld [vmem:[#allocation5 + $0x120] sm:$0xff]
        %v2664 = vld [vmem:[#allocation5 + $0x128] sm:$0xff]
        %v2665 = vld [vmem:[#allocation5 + $0x130] sm:$0xff]
        %v2666 = vld [vmem:[#allocation5 + $0x138] sm:$0xff]
        %v2667 = vld [vmem:[#allocation5 + $0x140] sm:$0xff]
        %v2668 = vld [vmem:[#allocation5 + $0x148] sm:$0xff]
        %v2669 = vld [vmem:[#allocation5 + $0x150] sm:$0xff]
        %v2670 = vld [vmem:[#allocation5 + $0x158] sm:$0xff]
        %v2671 = vld [vmem:[#allocation5 + $0x160] sm:$0xff]
        %v2672 = vld [vmem:[#allocation5 + $0x168] sm:$0xff]
        %v2673 = vld [vmem:[#allocation5 + $0x170] sm:$0xff]
        %v2674 = vld [vmem:[#allocation5 + $0x178] sm:$0xff]
        %v2675 = vld [vmem:[#allocation5 + $0x180] sm:$0xff]
        %v2676 = vld [vmem:[#allocation5 + $0x188] sm:$0xff]
        %v2677 = vld [vmem:[#allocation5 + $0x190] sm:$0xff]
        %v2678 = vld [vmem:[#allocation5 + $0x198] sm:$0xff]
        %v2679 = vld [vmem:[#allocation5 + $0x1a0] sm:$0xff]
        %v2680 = vld [vmem:[#allocation5 + $0x1a8] sm:$0xff]
        %v2681 = vld [vmem:[#allocation5 + $0x1b0] sm:$0xff]
        %v2682 = vld [vmem:[#allocation5 + $0x1b8] sm:$0xff]
        %v2683 = vld [vmem:[#allocation5 + $0x1c0] sm:$0xff]
        %v2684 = vld [vmem:[#allocation5 + $0x1c8] sm:$0xff]
        %v2685 = vld [vmem:[#allocation5 + $0x1d0] sm:$0xff]
        %v2686 = vld [vmem:[#allocation5 + $0x1d8] sm:$0xff]
        %v2687 = vld [vmem:[#allocation5 + $0x1e0] sm:$0xff]
        %v2688 = vld [vmem:[#allocation5 + $0x1e8] sm:$0xff]
        %v2689 = vld [vmem:[#allocation5 + $0x1f0] sm:$0xff]
        %v2690 = vld [vmem:[#allocation5 + $0x1f8] sm:$0xff]
        %v2691 = vld [vmem:[#allocation5 + $0x200] sm:$0xff]
        %v2692 = vld [vmem:[#allocation5 + $0x208] sm:$0xff]
        %v2693 = vld [vmem:[#allocation5 + $0x210] sm:$0xff]
        %v2694 = vld [vmem:[#allocation5 + $0x218] sm:$0xff]
        %v2695 = vld [vmem:[#allocation5 + $0x220] sm:$0xff]
        %v2696 = vld [vmem:[#allocation5 + $0x228] sm:$0xff]
        %v2697 = vld [vmem:[#allocation5 + $0x230] sm:$0xff]
        %v2698 = vld [vmem:[#allocation5 + $0x238] sm:$0xff]
        %v2699 = vld [vmem:[#allocation5 + $0x240] sm:$0xff]
        %v2700 = vld [vmem:[#allocation5 + $0x248] sm:$0xff]
        %v2701 = vld [vmem:[#allocation5 + $0x250] sm:$0xff]
        %v2702 = vld [vmem:[#allocation5 + $0x258] sm:$0xff]
        %v2703 = vld [vmem:[#allocation5 + $0x260] sm:$0xff]
        %v2704 = vld [vmem:[#allocation5 + $0x268] sm:$0xff]
        %v2705 = vld [vmem:[#allocation5 + $0x270] sm:$0xff]
        %v2706 = vld [vmem:[#allocation5 + $0x278] sm:$0xff]
        %v2707 = vld [vmem:[#allocation5 + $0x280] sm:$0xff]
        %v2708 = vld [vmem:[#allocation5 + $0x288] sm:$0xff]
        %v2709 = vld [vmem:[#allocation5 + $0x290] sm:$0xff]
        %v2710 = vld [vmem:[#allocation5 + $0x298] sm:$0xff]
        %v2711 = vld [vmem:[#allocation5 + $0x2a0] sm:$0xff]
        %v2712 = vld [vmem:[#allocation5 + $0x2a8] sm:$0xff]
        %v2713 = vld [vmem:[#allocation5 + $0x2b0] sm:$0xff]
        %v2714 = vld [vmem:[#allocation5 + $0x2b8] sm:$0xff]
        %v2715 = vld [vmem:[#allocation5 + $0x2c0] sm:$0xff]
        %v2716 = vld [vmem:[#allocation5 + $0x2c8] sm:$0xff]
        %v2717 = vld [vmem:[#allocation5 + $0x2d0] sm:$0xff]
        %v2718 = vld [vmem:[#allocation5 + $0x2d8] sm:$0xff]
        %v2719 = vld [vmem:[#allocation5 + $0x2e0] sm:$0xff]
        %v2720 = vld [vmem:[#allocation5 + $0x2e8] sm:$0xff]
        %v2721 = vld [vmem:[#allocation5 + $0x2f0] sm:$0xff]
        %v2722 = vld [vmem:[#allocation5 + $0x2f8] sm:$0xff]
        %v2723 = vld [vmem:[#allocation5 + $0x300] sm:$0xff]
        %v2724 = vld [vmem:[#allocation5 + $0x308] sm:$0xff]
        %v2725 = vld [vmem:[#allocation5 + $0x310] sm:$0xff]
        %v2726 = vld [vmem:[#allocation5 + $0x318] sm:$0xff]
        %v2727 = vld [vmem:[#allocation5 + $0x320] sm:$0xff]
        %v2728 = vld [vmem:[#allocation5 + $0x328] sm:$0xff]
        %v2729 = vld [vmem:[#allocation5 + $0x330] sm:$0xff]
        %v2730 = vld [vmem:[#allocation5 + $0x338] sm:$0xff]
        %v2731 = vld [vmem:[#allocation5 + $0x340] sm:$0xff]
        %v2732 = vld [vmem:[#allocation5 + $0x348] sm:$0xff]
        %v2733 = vld [vmem:[#allocation5 + $0x350] sm:$0xff]
        %v2734 = vld [vmem:[#allocation5 + $0x358] sm:$0xff]
        %v2735 = vld [vmem:[#allocation5 + $0x360] sm:$0xff]
        %v2736 = vld [vmem:[#allocation5 + $0x368] sm:$0xff]
        %v2737 = vld [vmem:[#allocation5 + $0x370] sm:$0xff]
        %v2738 = vld [vmem:[#allocation5 + $0x378] sm:$0xff]
        %v2739 = vld [vmem:[#allocation5 + $0x380] sm:$0xff]
        %v2740 = vld [vmem:[#allocation5 + $0x388] sm:$0xff]
        %v2741 = vld [vmem:[#allocation5 + $0x390] sm:$0xff]
        %v2742 = vld [vmem:[#allocation5 + $0x398] sm:$0xff]
        %v2743 = vld [vmem:[#allocation5 + $0x3a0] sm:$0xff]
        %v2744 = vld [vmem:[#allocation5 + $0x3a8] sm:$0xff]
        %v2745 = vld [vmem:[#allocation5 + $0x3b0] sm:$0xff]
        %v2746 = vld [vmem:[#allocation5 + $0x3b8] sm:$0xff]
        %v2747 = vld [vmem:[#allocation5 + $0x3c0] sm:$0xff]
        %v2748 = vld [vmem:[#allocation5 + $0x3c8] sm:$0xff]
        %v2749 = vld [vmem:[#allocation5 + $0x3d0] sm:$0xff]
        %v2750 = vld [vmem:[#allocation5 + $0x3d8] sm:$0xff]
        %v2751 = vld [vmem:[#allocation5 + $0x3e0] sm:$0xff]
        %v2752 = vld [vmem:[#allocation5 + $0x3e8] sm:$0xff]
        %v2753 = vld [vmem:[#allocation5 + $0x3f0] sm:$0xff]
        %v2754 = vld [vmem:[#allocation5 + $0x3f8] sm:$0xff]
        %v2755 = vld [vmem:[#allocation5 + $0x400] sm:$0xff]
        %v2756 = vld [vmem:[#allocation5 + $0x408] sm:$0xff]
        %v2757 = vld [vmem:[#allocation5 + $0x410] sm:$0xff]
        %v2758 = vld [vmem:[#allocation5 + $0x418] sm:$0xff]
        %v2759 = vld [vmem:[#allocation5 + $0x420] sm:$0xff]
        %v2760 = vld [vmem:[#allocation5 + $0x428] sm:$0xff]
        %v2761 = vld [vmem:[#allocation5 + $0x430] sm:$0xff]
        %v2762 = vld [vmem:[#allocation5 + $0x438] sm:$0xff]
        %v2763 = vld [vmem:[#allocation5 + $0x440] sm:$0xff]
        %v2764 = vld [vmem:[#allocation5 + $0x448] sm:$0xff]
        %v2765 = vld [vmem:[#allocation5 + $0x450] sm:$0xff]
        %v2766 = vld [vmem:[#allocation5 + $0x458] sm:$0xff]
        %v2767 = vld [vmem:[#allocation5 + $0x460] sm:$0xff]
        %v2768 = vld [vmem:[#allocation5 + $0x468] sm:$0xff]
        %v2769 = vld [vmem:[#allocation5 + $0x470] sm:$0xff]
        %v2770 = vld [vmem:[#allocation5 + $0x478] sm:$0xff]
        %v2771 = vld [vmem:[#allocation5 + $0x480] sm:$0xff]
        %v2772 = vld [vmem:[#allocation5 + $0x488] sm:$0xff]
        %v2773 = vld [vmem:[#allocation5 + $0x490] sm:$0xff]
        %v2774 = vld [vmem:[#allocation5 + $0x498] sm:$0xff]
        %v2775 = vld [vmem:[#allocation5 + $0x4a0] sm:$0xff]
        %v2776 = vld [vmem:[#allocation5 + $0x4a8] sm:$0xff]
        %v2777 = vld [vmem:[#allocation5 + $0x4b0] sm:$0xff]
        %v2778 = vld [vmem:[#allocation5 + $0x4b8] sm:$0xff]
        %v2779 = vld [vmem:[#allocation5 + $0x4c0] sm:$0xff]
        %v2780 = vld [vmem:[#allocation5 + $0x4c8] sm:$0xff]
        %v2781 = vld [vmem:[#allocation5 + $0x4d0] sm:$0xff]
        %v2782 = vld [vmem:[#allocation5 + $0x4d8] sm:$0xff]
        %v2783 = vld [vmem:[#allocation5 + $0x4e0] sm:$0xff]
        %v2784 = vld [vmem:[#allocation5 + $0x4e8] sm:$0xff]
        %v2785 = vld [vmem:[#allocation5 + $0x4f0] sm:$0xff]
        %v2786 = vld [vmem:[#allocation5 + $0x4f8] sm:$0xff]
        %v2787 = vld [vmem:[#allocation5 + $0x500] sm:$0xff]
        %v2788 = vld [vmem:[#allocation5 + $0x508] sm:$0xff]
        %v2789 = vld [vmem:[#allocation5 + $0x510] sm:$0xff]
        %v2790 = vld [vmem:[#allocation5 + $0x518] sm:$0xff]
        %v2791 = vld [vmem:[#allocation5 + $0x520] sm:$0xff]
        %v2792 = vld [vmem:[#allocation5 + $0x528] sm:$0xff]
        %v2793 = vld [vmem:[#allocation5 + $0x530] sm:$0xff]
        %v2794 = vld [vmem:[#allocation5 + $0x538] sm:$0xff]
        %v2795 = vld [vmem:[#allocation5 + $0x540] sm:$0xff]
        %v2796 = vld [vmem:[#allocation5 + $0x548] sm:$0xff]
        %v2797 = vld [vmem:[#allocation5 + $0x550] sm:$0xff]
        %v2798 = vld [vmem:[#allocation5 + $0x558] sm:$0xff]
        %v2799 = vld [vmem:[#allocation5 + $0x560] sm:$0xff]
        %v2800 = vld [vmem:[#allocation5 + $0x568] sm:$0xff]
        %v2801 = vld [vmem:[#allocation5 + $0x570] sm:$0xff]
        %v2802 = vld [vmem:[#allocation5 + $0x578] sm:$0xff]
        %v2803 = vld [vmem:[#allocation5 + $0x580] sm:$0xff]
        %v2804 = vld [vmem:[#allocation5 + $0x588] sm:$0xff]
        %v2805 = vld [vmem:[#allocation5 + $0x590] sm:$0xff]
        %v2806 = vld [vmem:[#allocation5 + $0x598] sm:$0xff]
        %v2807 = vld [vmem:[#allocation5 + $0x5a0] sm:$0xff]
        %v2808 = vld [vmem:[#allocation5 + $0x5a8] sm:$0xff]
        %v2809 = vld [vmem:[#allocation5 + $0x5b0] sm:$0xff]
        %v2810 = vld [vmem:[#allocation5 + $0x5b8] sm:$0xff]
        %v2811 = vld [vmem:[#allocation5 + $0x5c0] sm:$0xff]
        %v2812 = vld [vmem:[#allocation5 + $0x5c8] sm:$0xff]
        %v2813 = vld [vmem:[#allocation5 + $0x5d0] sm:$0xff]
        %v2814 = vld [vmem:[#allocation5 + $0x5d8] sm:$0xff]
        %v2815 = vld [vmem:[#allocation5 + $0x5e0] sm:$0xff]
        %v2816 = vld [vmem:[#allocation5 + $0x5e8] sm:$0xff]
        %v2817 = vld [vmem:[#allocation5 + $0x5f0] sm:$0xff]
        %v2818 = vld [vmem:[#allocation5 + $0x5f8] sm:$0xff]
        %v2819 = vld [vmem:[#allocation5 + $0x600] sm:$0xff]
        %v2820 = vld [vmem:[#allocation5 + $0x608] sm:$0xff]
        %v2821 = vld [vmem:[#allocation5 + $0x610] sm:$0xff]
        %v2822 = vld [vmem:[#allocation5 + $0x618] sm:$0xff]
        %v2823 = vld [vmem:[#allocation5 + $0x620] sm:$0xff]
        %v2824 = vld [vmem:[#allocation5 + $0x628] sm:$0xff]
        %v2825 = vld [vmem:[#allocation5 + $0x630] sm:$0xff]
        %v2826 = vld [vmem:[#allocation5 + $0x638] sm:$0xff]
        %v2827 = vld [vmem:[#allocation5 + $0x640] sm:$0xff]
        %v2828 = vld [vmem:[#allocation5 + $0x648] sm:$0xff]
        %v2829 = vld [vmem:[#allocation5 + $0x650] sm:$0xff]
        %v2830 = vld [vmem:[#allocation5 + $0x658] sm:$0xff]
        %v2831 = vld [vmem:[#allocation5 + $0x660] sm:$0xff]
        %v2832 = vld [vmem:[#allocation5 + $0x668] sm:$0xff]
        %v2833 = vld [vmem:[#allocation5 + $0x670] sm:$0xff]
        %v2834 = vld [vmem:[#allocation5 + $0x678] sm:$0xff]
        %v2835 = vld [vmem:[#allocation5 + $0x680] sm:$0xff]
        %v2836 = vld [vmem:[#allocation5 + $0x688] sm:$0xff]
        %v2837 = vld [vmem:[#allocation5 + $0x690] sm:$0xff]
        %v2838 = vld [vmem:[#allocation5 + $0x698] sm:$0xff]
        %v2839 = vld [vmem:[#allocation5 + $0x6a0] sm:$0xff]
        %v2840 = vld [vmem:[#allocation5 + $0x6a8] sm:$0xff]
        %v2841 = vld [vmem:[#allocation5 + $0x6b0] sm:$0xff]
        %v2842 = vld [vmem:[#allocation5 + $0x6b8] sm:$0xff]
        %v2843 = vld [vmem:[#allocation5 + $0x6c0] sm:$0xff]
        %v2844 = vld [vmem:[#allocation5 + $0x6c8] sm:$0xff]
        %v2845 = vld [vmem:[#allocation5 + $0x6d0] sm:$0xff]
        %v2846 = vld [vmem:[#allocation5 + $0x6d8] sm:$0xff]
        %v2847 = vld [vmem:[#allocation5 + $0x6e0] sm:$0xff]
        %v2848 = vld [vmem:[#allocation5 + $0x6e8] sm:$0xff]
        %v2849 = vld [vmem:[#allocation5 + $0x6f0] sm:$0xff]
        %v2850 = vld [vmem:[#allocation5 + $0x6f8] sm:$0xff]
        %v2851 = vld [vmem:[#allocation5 + $0x700] sm:$0xff]
        %v2852 = vld [vmem:[#allocation5 + $0x708] sm:$0xff]
        %v2853 = vld [vmem:[#allocation5 + $0x710] sm:$0xff]
        %v2854 = vld [vmem:[#allocation5 + $0x718] sm:$0xff]
        %v2855 = vld [vmem:[#allocation5 + $0x720] sm:$0xff]
        %v2856 = vld [vmem:[#allocation5 + $0x728] sm:$0xff]
        %v2857 = vld [vmem:[#allocation5 + $0x730] sm:$0xff]
        %v2858 = vld [vmem:[#allocation5 + $0x738] sm:$0xff]
        %v2859 = vld [vmem:[#allocation5 + $0x740] sm:$0xff]
        %v2860 = vld [vmem:[#allocation5 + $0x748] sm:$0xff]
        %v2861 = vld [vmem:[#allocation5 + $0x750] sm:$0xff]
        %v2862 = vld [vmem:[#allocation5 + $0x758] sm:$0xff]
        %v2863 = vld [vmem:[#allocation5 + $0x760] sm:$0xff]
        %v2864 = vld [vmem:[#allocation5 + $0x768] sm:$0xff]
        %v2865 = vld [vmem:[#allocation5 + $0x770] sm:$0xff]
        %v2866 = vld [vmem:[#allocation5 + $0x778] sm:$0xff]
        %v2867 = vld [vmem:[#allocation5 + $0x780] sm:$0xff]
        %v2868 = vld [vmem:[#allocation5 + $0x788] sm:$0xff]
        %v2869 = vld [vmem:[#allocation5 + $0x790] sm:$0xff]
        %v2870 = vld [vmem:[#allocation5 + $0x798] sm:$0xff]
        %v2871 = vld [vmem:[#allocation5 + $0x7a0] sm:$0xff]
        %v2872 = vld [vmem:[#allocation5 + $0x7a8] sm:$0xff]
        %v2873 = vld [vmem:[#allocation5 + $0x7b0] sm:$0xff]
        %v2874 = vld [vmem:[#allocation5 + $0x7b8] sm:$0xff]
        %v2875 = vld [vmem:[#allocation5 + $0x7c0] sm:$0xff]
        %v2876 = vld [vmem:[#allocation5 + $0x7c8] sm:$0xff]
        %v2877 = vld [vmem:[#allocation5 + $0x7d0] sm:$0xff]
        %v2878 = vld [vmem:[#allocation5 + $0x7d8] sm:$0xff]
        %v2879 = vld [vmem:[#allocation5 + $0x7e0] sm:$0xff]
        %v2880 = vld [vmem:[#allocation5 + $0x7e8] sm:$0xff]
        %v2881 = vld [vmem:[#allocation5 + $0x7f0] sm:$0xff]
        %v2882 = vld [vmem:[#allocation5 + $0x7f8] sm:$0xff]
        %v2883 = vld [vmem:[#allocation5 + $0x800] sm:$0xff]
        %v2884 = vld [vmem:[#allocation5 + $0x808] sm:$0xff]
        %v2885 = vld [vmem:[#allocation5 + $0x810] sm:$0xff]
        %v2886 = vld [vmem:[#allocation5 + $0x818] sm:$0xff]
        %v2887 = vld [vmem:[#allocation5 + $0x820] sm:$0xff]
        %v2888 = vld [vmem:[#allocation5 + $0x828] sm:$0xff]
        %v2889 = vld [vmem:[#allocation5 + $0x830] sm:$0xff]
        %v2890 = vld [vmem:[#allocation5 + $0x838] sm:$0xff]
        %v2891 = vld [vmem:[#allocation5 + $0x840] sm:$0xff]
        %v2892 = vld [vmem:[#allocation5 + $0x848] sm:$0xff]
        %v2893 = vld [vmem:[#allocation5 + $0x850] sm:$0xff]
        %v2894 = vld [vmem:[#allocation5 + $0x858] sm:$0xff]
        %v2895 = vld [vmem:[#allocation5 + $0x860] sm:$0xff]
        %v2896 = vld [vmem:[#allocation5 + $0x868] sm:$0xff]
        %v2897 = vld [vmem:[#allocation5 + $0x870] sm:$0xff]
        %v2898 = vld [vmem:[#allocation5 + $0x878] sm:$0xff]
        %v2899 = vld [vmem:[#allocation5 + $0x880] sm:$0xff]
        %v2900 = vld [vmem:[#allocation5 + $0x888] sm:$0xff]
        %v2901 = vld [vmem:[#allocation5 + $0x890] sm:$0xff]
        %v2902 = vld [vmem:[#allocation5 + $0x898] sm:$0xff]
        %v2903 = vld [vmem:[#allocation5 + $0x8a0] sm:$0xff]
        %v2904 = vld [vmem:[#allocation5 + $0x8a8] sm:$0xff]
        %v2905 = vld [vmem:[#allocation5 + $0x8b0] sm:$0xff]
        %v2906 = vld [vmem:[#allocation5 + $0x8b8] sm:$0xff]
        %v2907 = vld [vmem:[#allocation5 + $0x8c0] sm:$0xff]
        %v2908 = vld [vmem:[#allocation5 + $0x8c8] sm:$0xff]
        %v2909 = vld [vmem:[#allocation5 + $0x8d0] sm:$0xff]
        %v2910 = vld [vmem:[#allocation5 + $0x8d8] sm:$0xff]
        %v2911 = vld [vmem:[#allocation5 + $0x8e0] sm:$0xff]
        %v2912 = vld [vmem:[#allocation5 + $0x8e8] sm:$0xff]
        %v2913 = vld [vmem:[#allocation5 + $0x8f0] sm:$0xff]
        %v2914 = vld [vmem:[#allocation5 + $0x8f8] sm:$0xff]
        %v2915 = vld [vmem:[#allocation5 + $0x900] sm:$0xff]
        %v2916 = vld [vmem:[#allocation5 + $0x908] sm:$0xff]
        %v2917 = vld [vmem:[#allocation5 + $0x910] sm:$0xff]
        %v2918 = vld [vmem:[#allocation5 + $0x918] sm:$0xff]
        %v2919 = vld [vmem:[#allocation5 + $0x920] sm:$0xff]
        %v2920 = vld [vmem:[#allocation5 + $0x928] sm:$0xff]
        %v2921 = vld [vmem:[#allocation5 + $0x930] sm:$0xff]
        %v2922 = vld [vmem:[#allocation5 + $0x938] sm:$0xff]
        %v2923 = vld [vmem:[#allocation5 + $0x940] sm:$0xff]
        %v2924 = vld [vmem:[#allocation5 + $0x948] sm:$0xff]
        %v2925 = vld [vmem:[#allocation5 + $0x950] sm:$0xff]
        %v2926 = vld [vmem:[#allocation5 + $0x958] sm:$0xff]
        %v2927 = vld [vmem:[#allocation5 + $0x960] sm:$0xff]
        %v2928 = vld [vmem:[#allocation5 + $0x968] sm:$0xff]
        %v2929 = vld [vmem:[#allocation5 + $0x970] sm:$0xff]
        %v2930 = vld [vmem:[#allocation5 + $0x978] sm:$0xff]
        %v2931 = vld [vmem:[#allocation5 + $0x980] sm:$0xff]
        %v2932 = vld [vmem:[#allocation5 + $0x988] sm:$0xff]
        %v2933 = vld [vmem:[#allocation5 + $0x990] sm:$0xff]
        %v2934 = vld [vmem:[#allocation5 + $0x998] sm:$0xff]
        %v2935 = vld [vmem:[#allocation5 + $0x9a0] sm:$0xff]
        %v2936 = vld [vmem:[#allocation5 + $0x9a8] sm:$0xff]
        %v2937 = vld [vmem:[#allocation5 + $0x9b0] sm:$0xff]
        %v2938 = vld [vmem:[#allocation5 + $0x9b8] sm:$0xff]
        %v2939 = vld [vmem:[#allocation5 + $0x9c0] sm:$0xff]
        %v2940 = vld [vmem:[#allocation5 + $0x9c8] sm:$0xff]
        %v2941 = vld [vmem:[#allocation5 + $0x9d0] sm:$0xff]
        %v2942 = vld [vmem:[#allocation5 + $0x9d8] sm:$0xff]
        %v2943 = vld [vmem:[#allocation5 + $0x9e0] sm:$0xff]
        %v2944 = vld [vmem:[#allocation5 + $0x9e8] sm:$0xff]
        %v2945 = vld [vmem:[#allocation5 + $0x9f0] sm:$0xff]
        %v2946 = vld [vmem:[#allocation5 + $0x9f8] sm:$0xff]
        %v2947 = vld [vmem:[%s9] sm:$0x3]
        %vm2948 = vcmask 130048
        %v2950 = vsel %vm2948, %v2622, 0
        %v2953 = vsel %vm2948, %v2623, 0
        %v2956 = vsel %vm2948, %v2624, 0
        %v2959 = vsel %vm2948, %v2625, 0
        %v2962 = vsel %vm2948, %v2626, 0
        %2964 = vmatprep.subr.mxu0 %v2619
        %2965 = vmatpush1.msra.mxu0 %v2618
        %2966 = vmatprep.subr.mxu0 %v2621
        %2967 = vmatpush1.msra.mxu0 %v2620
        %2968 = vmatprep.subr.mxu0 0.0
        %2969 = vmatpush1.msra.mxu0 0.0
        %2970 = vmatprep.subr.mxu0 0.0
        %2971 = vmatpush1.msra.mxu0 0.0
        %2972 = vmatprep.subr.mxu0 0.0
        %2973 = vmatpush1.msra.mxu0 0.0
        %2974 = vmatprep.subr.mxu0 0.0
        %2975 = vmatpush1.msra.mxu0 0.0
        %2976 = vmatprep.subr.mxu0 0.0
        %2977 = vmatpush1.msra.mxu0 0.0
        %2978 = vmatprep.subr.mxu0 0.0
        %2979 = vmatpush1.msra.mxu0 0.0
        %2980 = vmatprep.subr.mxu0 0.0
        %2981 = vmatpush1.msra.mxu0 0.0
        %2982 = vmatprep.subr.mxu0 0.0
        %2983 = vmatpush1.msra.mxu0 0.0
        %2984 = vmatprep.subr.mxu0 0.0
        %2985 = vmatpush1.msra.mxu0 0.0
        %2986 = vmatprep.subr.mxu0 0.0
        %2987 = vmatpush1.msra.mxu0 0.0
        %2988 = vmatprep.subr.mxu0 0.0
        %2989 = vmatpush1.msra.mxu0 0.0
        %2990 = vmatprep.subr.mxu0 0.0
        %2991 = vmatpush1.msra.mxu0 0.0
        %2992 = vmatprep.subr.mxu0 0.0
        %2993 = vmatpush1.msra.mxu0 0.0
        %2994 = vmatprep.subr.mxu0 0.0
        %2995 = vmatpush1.msra.mxu0 0.0
        %2996 = vmatprep.subr.mxu0 0.0
        %2997 = vmatpush1.msra.mxu0 0.0
        %2998 = vmatprep.subr.mxu0 0.0
        %2999 = vmatpush1.msra.mxu0 0.0
        %3000 = vmatprep.subr.mxu0 0.0
        %3001 = vmatpush1.msra.mxu0 0.0
        %3002 = vmatprep.subr.mxu0 0.0
        %3003 = vmatpush1.msra.mxu0 0.0
        %3004 = vmatprep.subr.mxu0 0.0
        %3005 = vmatpush1.msra.mxu0 0.0
        %3006 = vmatprep.subr.mxu0 0.0
        %3007 = vmatpush1.msra.mxu0 0.0
        %3008 = vmatprep.subr.mxu0 0.0
        %3009 = vmatpush1.msra.mxu0 0.0
        %3010 = vmatprep.subr.mxu0 0.0
        %3011 = vmatpush1.msra.mxu0 0.0
        %3012 = vmatprep.subr.mxu0 0.0
        %3013 = vmatpush1.msra.mxu0 0.0
        %3014 = vmatprep.subr.mxu0 0.0
        %3015 = vmatpush1.msra.mxu0 0.0
        %3016 = vmatprep.subr.mxu0 0.0
        %3017 = vmatpush1.msra.mxu0 0.0
        %3018 = vmatprep.subr.mxu0 0.0
        %3019 = vmatpush1.msra.mxu0 0.0
        %3020 = vmatprep.subr.mxu0 0.0
        %3021 = vmatpush1.msra.mxu0 0.0
        %3022 = vmatprep.subr.mxu0 0.0
        %3023 = vmatpush1.msra.mxu0 0.0
        %3024 = vmatprep.subr.mxu0 0.0
        %3025 = vmatpush1.msra.mxu0 0.0
        %3026 = vmatprep.subr.mxu0 0.0
        %3027 = vmatpush1.msra.mxu0 0.0
        %3028 = vmatprep.mubr.f32.mxu0 0.0
        %3029 = vmatmul.mubr.f32.gmra.mrb[0].mxu0 %v2950
        %v3030 = vpop.f32.mrb[0].mxu0
        %v3031 = vadd.f32 0.0, %v3030
        %v3032 = vpop.f32.mrb[0].mxu0
        %v3033 = vadd.f32 0.0, %v3032
        %3034 = vmatprep.mubr.f32.mxu0 0.0
        %3035 = vmatmul.mubr.f32.gmra.mrb[0].mxu0 %v2953
        %v3036 = vpop.f32.mrb[0].mxu0
        %v3037 = vadd.f32 0.0, %v3036
        %v3038 = vpop.f32.mrb[0].mxu0
        %v3039 = vadd.f32 0.0, %v3038
        %3040 = vmatprep.mubr.f32.mxu0 0.0
        %3041 = vmatmul.mubr.f32.gmra.mrb[0].mxu0 %v2956
        %v3042 = vpop.f32.mrb[0].mxu0
        %v3043 = vadd.f32 0.0, %v3042
        %v3044 = vpop.f32.mrb[0].mxu0
        %v3045 = vadd.f32 0.0, %v3044
        %3046 = vmatprep.mubr.f32.mxu0 0.0
        %3047 = vmatmul.mubr.f32.gmra.mrb[0].mxu0 %v2959
        %v3048 = vpop.f32.mrb[0].mxu0
        %v3049 = vadd.f32 0.0, %v3048
        %v3050 = vpop.f32.mrb[0].mxu0
        %v3051 = vadd.f32 0.0, %v3050
        %3052 = vmatprep.mubr.f32.mxu0 0.0
        %3053 = vmatmul.mubr.f32.gmra.mrb[0].mxu0 %v2962
        %v3054 = vpop.f32.mrb[0].mxu0
        %v3055 = vadd.f32 0.0, %v3054
        %v3056 = vpop.f32.mrb[0].mxu0
        %v3057 = vadd.f32 0.0, %v3056
        %3058 = vdwg.mxu0
        %v3060 = vlaneseq
        %v3061 = vshrl.u32 %v3060, 7
        %v3062 = vsub.s32 0, %v3061
        %v3063 = vrot.slane %v2947, %v3062
        %v3064 = vlaneseq
        %v3065 = vshrl.u32 %v3064, 7
        %v3066 = vsub.s32 1, %v3065
        %v3067 = vrot.slane %v2947, %v3066
        %3070 = vmatprep.subr.mxu0 %v2628
        %3071 = vmatpush1.msra.mxu0 %v2627
        %3072 = vmatprep.subr.mxu0 %v2630
        %3073 = vmatpush1.msra.mxu0 %v2629
        %3074 = vmatprep.subr.mxu0 %v2632
        %3075 = vmatpush1.msra.mxu0 %v2631
        %3076 = vmatprep.subr.mxu0 %v2634
        %3077 = vmatpush1.msra.mxu0 %v2633
        %3078 = vmatprep.subr.mxu0 %v2636
        %3079 = vmatpush1.msra.mxu0 %v2635
        %3080 = vmatprep.subr.mxu0 %v2638
        %3081 = vmatpush1.msra.mxu0 %v2637
        %3082 = vmatprep.subr.mxu0 %v2640
        %3083 = vmatpush1.msra.mxu0 %v2639
        %3084 = vmatprep.subr.mxu0 %v2642
        %3085 = vmatpush1.msra.mxu0 %v2641
        %3086 = vmatprep.subr.mxu0 %v2644
        %3087 = vmatpush1.msra.mxu0 %v2643
        %3088 = vmatprep.subr.mxu0 %v2646
        %3089 = vmatpush1.msra.mxu0 %v2645
        %3090 = vmatprep.subr.mxu0 %v2648
        %3091 = vmatpush1.msra.mxu0 %v2647
        %3092 = vmatprep.subr.mxu0 %v2650
        %3093 = vmatpush1.msra.mxu0 %v2649
        %3094 = vmatprep.subr.mxu0 %v2652
        %3095 = vmatpush1.msra.mxu0 %v2651
        %3096 = vmatprep.subr.mxu0 %v2654
        %3097 = vmatpush1.msra.mxu0 %v2653
        %3098 = vmatprep.subr.mxu0 %v2656
        %3099 = vmatpush1.msra.mxu0 %v2655
        %3100 = vmatprep.subr.mxu0 %v2658
        %3101 = vmatpush1.msra.mxu0 %v2657
        %3102 = vmatprep.subr.mxu0 %v2660
        %3103 = vmatpush1.msra.mxu0 %v2659
        %3104 = vmatprep.subr.mxu0 %v2662
        %3105 = vmatpush1.msra.mxu0 %v2661
        %3106 = vmatprep.subr.mxu0 %v2664
        %3107 = vmatpush1.msra.mxu0 %v2663
        %3108 = vmatprep.subr.mxu0 %v2666
        %3109 = vmatpush1.msra.mxu0 %v2665
        %3110 = vmatprep.subr.mxu0 %v2668
        %3111 = vmatpush1.msra.mxu0 %v2667
        %3112 = vmatprep.subr.mxu0 %v2670
        %3113 = vmatpush1.msra.mxu0 %v2669
        %3114 = vmatprep.subr.mxu0 %v2672
        %3115 = vmatpush1.msra.mxu0 %v2671
        %3116 = vmatprep.subr.mxu0 %v2674
        %3117 = vmatpush1.msra.mxu0 %v2673
        %3118 = vmatprep.subr.mxu0 %v2676
        %3119 = vmatpush1.msra.mxu0 %v2675
        %3120 = vmatprep.subr.mxu0 %v2678
        %3121 = vmatpush1.msra.mxu0 %v2677
        %3122 = vmatprep.subr.mxu0 %v2680
        %3123 = vmatpush1.msra.mxu0 %v2679
        %3124 = vmatprep.subr.mxu0 %v2682
        %3125 = vmatpush1.msra.mxu0 %v2681
        %3126 = vmatprep.subr.mxu0 %v2684
        %3127 = vmatpush1.msra.mxu0 %v2683
        %3128 = vmatprep.subr.mxu0 %v2686
        %3129 = vmatpush1.msra.mxu0 %v2685
        %3130 = vmatprep.subr.mxu0 %v2688
        %3131 = vmatpush1.msra.mxu0 %v2687
        %3132 = vmatprep.subr.mxu0 %v2690
        %3133 = vmatpush1.msra.mxu0 %v2689
        %3134 = vmatprep.mubr.f32.mxu0 %v3033
        %3135 = vmatmul.mubr.f32.gmra.mrb[0].mxu0 %v3031
        %v3136 = vpop.f32.mrb[0].mxu0
        %v3137 = vadd.f32 %v3063, %v3136
        %v3138 = vpop.f32.mrb[0].mxu0
        %v3139 = vadd.f32 %v3067, %v3138
        %3140 = vdwg.mxu0
        %3141 = vmatprep.subr.mxu0 %v2692
        %3142 = vmatpush1.msra.mxu0 %v2691
        %3143 = vmatprep.subr.mxu0 %v2694
        %3144 = vmatpush1.msra.mxu0 %v2693
        %3145 = vmatprep.subr.mxu0 %v2696
        %3146 = vmatpush1.msra.mxu0 %v2695
        %3147 = vmatprep.subr.mxu0 %v2698
        %3148 = vmatpush1.msra.mxu0 %v2697
        %3149 = vmatprep.subr.mxu0 %v2700
        %3150 = vmatpush1.msra.mxu0 %v2699
        %3151 = vmatprep.subr.mxu0 %v2702
        %3152 = vmatpush1.msra.mxu0 %v2701
        %3153 = vmatprep.subr.mxu0 %v2704
        %3154 = vmatpush1.msra.mxu0 %v2703
        %3155 = vmatprep.subr.mxu0 %v2706
        %3156 = vmatpush1.msra.mxu0 %v2705
        %3157 = vmatprep.subr.mxu0 %v2708
        %3158 = vmatpush1.msra.mxu0 %v2707
        %3159 = vmatprep.subr.mxu0 %v2710
        %3160 = vmatpush1.msra.mxu0 %v2709
        %3161 = vmatprep.subr.mxu0 %v2712
        %3162 = vmatpush1.msra.mxu0 %v2711
        %3163 = vmatprep.subr.mxu0 %v2714
        %3164 = vmatpush1.msra.mxu0 %v2713
        %3165 = vmatprep.subr.mxu0 %v2716
        %3166 = vmatpush1.msra.mxu0 %v2715
        %3167 = vmatprep.subr.mxu0 %v2718
        %3168 = vmatpush1.msra.mxu0 %v2717
        %3169 = vmatprep.subr.mxu0 %v2720
        %3170 = vmatpush1.msra.mxu0 %v2719
        %3171 = vmatprep.subr.mxu0 %v2722
        %3172 = vmatpush1.msra.mxu0 %v2721
        %3173 = vmatprep.subr.mxu0 %v2724
        %3174 = vmatpush1.msra.mxu0 %v2723
        %3175 = vmatprep.subr.mxu0 %v2726
        %3176 = vmatpush1.msra.mxu0 %v2725
        %3177 = vmatprep.subr.mxu0 %v2728
        %3178 = vmatpush1.msra.mxu0 %v2727
        %3179 = vmatprep.subr.mxu0 %v2730
        %3180 = vmatpush1.msra.mxu0 %v2729
        %3181 = vmatprep.subr.mxu0 %v2732
        %3182 = vmatpush1.msra.mxu0 %v2731
        %3183 = vmatprep.subr.mxu0 %v2734
        %3184 = vmatpush1.msra.mxu0 %v2733
        %3185 = vmatprep.subr.mxu0 %v2736
        %3186 = vmatpush1.msra.mxu0 %v2735
        %3187 = vmatprep.subr.mxu0 %v2738
        %3188 = vmatpush1.msra.mxu0 %v2737
        %3189 = vmatprep.subr.mxu0 %v2740
        %3190 = vmatpush1.msra.mxu0 %v2739
        %3191 = vmatprep.subr.mxu0 %v2742
        %3192 = vmatpush1.msra.mxu0 %v2741
        %3193 = vmatprep.subr.mxu0 %v2744
        %3194 = vmatpush1.msra.mxu0 %v2743
        %3195 = vmatprep.subr.mxu0 %v2746
        %3196 = vmatpush1.msra.mxu0 %v2745
        %3197 = vmatprep.subr.mxu0 %v2748
        %3198 = vmatpush1.msra.mxu0 %v2747
        %3199 = vmatprep.subr.mxu0 %v2750
        %3200 = vmatpush1.msra.mxu0 %v2749
        %3201 = vmatprep.subr.mxu0 %v2752
        %3202 = vmatpush1.msra.mxu0 %v2751
        %3203 = vmatprep.subr.mxu0 %v2754
        %3204 = vmatpush1.msra.mxu0 %v2753
        %3205 = vmatprep.mubr.f32.mxu0 %v3039
        %3206 = vmatmul.mubr.f32.gmra.mrb[0].mxu0 %v3037
        %v3207 = vpop.f32.mrb[0].mxu0
        %v3208 = vadd.f32 %v3137, %v3207
        %v3209 = vpop.f32.mrb[0].mxu0
        %v3210 = vadd.f32 %v3139, %v3209
        %3211 = vdwg.mxu0
        %3212 = vmatprep.subr.mxu0 %v2756
        %3213 = vmatpush1.msra.mxu0 %v2755
        %3214 = vmatprep.subr.mxu0 %v2758
        %3215 = vmatpush1.msra.mxu0 %v2757
        %3216 = vmatprep.subr.mxu0 %v2760
        %3217 = vmatpush1.msra.mxu0 %v2759
        %3218 = vmatprep.subr.mxu0 %v2762
        %3219 = vmatpush1.msra.mxu0 %v2761
        %3220 = vmatprep.subr.mxu0 %v2764
        %3221 = vmatpush1.msra.mxu0 %v2763
        %3222 = vmatprep.subr.mxu0 %v2766
        %3223 = vmatpush1.msra.mxu0 %v2765
        %3224 = vmatprep.subr.mxu0 %v2768
        %3225 = vmatpush1.msra.mxu0 %v2767
        %3226 = vmatprep.subr.mxu0 %v2770
        %3227 = vmatpush1.msra.mxu0 %v2769
        %3228 = vmatprep.subr.mxu0 %v2772
        %3229 = vmatpush1.msra.mxu0 %v2771
        %3230 = vmatprep.subr.mxu0 %v2774
        %3231 = vmatpush1.msra.mxu0 %v2773
        %3232 = vmatprep.subr.mxu0 %v2776
        %3233 = vmatpush1.msra.mxu0 %v2775
        %3234 = vmatprep.subr.mxu0 %v2778
        %3235 = vmatpush1.msra.mxu0 %v2777
        %3236 = vmatprep.subr.mxu0 %v2780
        %3237 = vmatpush1.msra.mxu0 %v2779
        %3238 = vmatprep.subr.mxu0 %v2782
        %3239 = vmatpush1.msra.mxu0 %v2781
        %3240 = vmatprep.subr.mxu0 %v2784
        %3241 = vmatpush1.msra.mxu0 %v2783
        %3242 = vmatprep.subr.mxu0 %v2786
        %3243 = vmatpush1.msra.mxu0 %v2785
        %3244 = vmatprep.subr.mxu0 %v2788
        %3245 = vmatpush1.msra.mxu0 %v2787
        %3246 = vmatprep.subr.mxu0 %v2790
        %3247 = vmatpush1.msra.mxu0 %v2789
        %3248 = vmatprep.subr.mxu0 %v2792
        %3249 = vmatpush1.msra.mxu0 %v2791
        %3250 = vmatprep.subr.mxu0 %v2794
        %3251 = vmatpush1.msra.mxu0 %v2793
        %3252 = vmatprep.subr.mxu0 %v2796
        %3253 = vmatpush1.msra.mxu0 %v2795
        %3254 = vmatprep.subr.mxu0 %v2798
        %3255 = vmatpush1.msra.mxu0 %v2797
        %3256 = vmatprep.subr.mxu0 %v2800
        %3257 = vmatpush1.msra.mxu0 %v2799
        %3258 = vmatprep.subr.mxu0 %v2802
        %3259 = vmatpush1.msra.mxu0 %v2801
        %3260 = vmatprep.subr.mxu0 %v2804
        %3261 = vmatpush1.msra.mxu0 %v2803
        %3262 = vmatprep.subr.mxu0 %v2806
        %3263 = vmatpush1.msra.mxu0 %v2805
        %3264 = vmatprep.subr.mxu0 %v2808
        %3265 = vmatpush1.msra.mxu0 %v2807
        %3266 = vmatprep.subr.mxu0 %v2810
        %3267 = vmatpush1.msra.mxu0 %v2809
        %3268 = vmatprep.subr.mxu0 %v2812
        %3269 = vmatpush1.msra.mxu0 %v2811
        %3270 = vmatprep.subr.mxu0 %v2814
        %3271 = vmatpush1.msra.mxu0 %v2813
        %3272 = vmatprep.subr.mxu0 %v2816
        %3273 = vmatpush1.msra.mxu0 %v2815
        %3274 = vmatprep.subr.mxu0 %v2818
        %3275 = vmatpush1.msra.mxu0 %v2817
        %3276 = vmatprep.mubr.f32.mxu0 %v3045
        %3277 = vmatmul.mubr.f32.gmra.mrb[0].mxu0 %v3043
        %v3278 = vpop.f32.mrb[0].mxu0
        %v3279 = vadd.f32 %v3208, %v3278
        %v3280 = vpop.f32.mrb[0].mxu0
        %v3281 = vadd.f32 %v3210, %v3280
        %3282 = vdwg.mxu0
        %3283 = vmatprep.subr.mxu0 %v2820
        %3284 = vmatpush1.msra.mxu0 %v2819
        %3285 = vmatprep.subr.mxu0 %v2822
        %3286 = vmatpush1.msra.mxu0 %v2821
        %3287 = vmatprep.subr.mxu0 %v2824
        %3288 = vmatpush1.msra.mxu0 %v2823
        %3289 = vmatprep.subr.mxu0 %v2826
        %3290 = vmatpush1.msra.mxu0 %v2825
        %3291 = vmatprep.subr.mxu0 %v2828
        %3292 = vmatpush1.msra.mxu0 %v2827
        %3293 = vmatprep.subr.mxu0 %v2830
        %3294 = vmatpush1.msra.mxu0 %v2829
        %3295 = vmatprep.subr.mxu0 %v2832
        %3296 = vmatpush1.msra.mxu0 %v2831
        %3297 = vmatprep.subr.mxu0 %v2834
        %3298 = vmatpush1.msra.mxu0 %v2833
        %3299 = vmatprep.subr.mxu0 %v2836
        %3300 = vmatpush1.msra.mxu0 %v2835
        %3301 = vmatprep.subr.mxu0 %v2838
        %3302 = vmatpush1.msra.mxu0 %v2837
        %3303 = vmatprep.subr.mxu0 %v2840
        %3304 = vmatpush1.msra.mxu0 %v2839
        %3305 = vmatprep.subr.mxu0 %v2842
        %3306 = vmatpush1.msra.mxu0 %v2841
        %3307 = vmatprep.subr.mxu0 %v2844
        %3308 = vmatpush1.msra.mxu0 %v2843
        %3309 = vmatprep.subr.mxu0 %v2846
        %3310 = vmatpush1.msra.mxu0 %v2845
        %3311 = vmatprep.subr.mxu0 %v2848
        %3312 = vmatpush1.msra.mxu0 %v2847
        %3313 = vmatprep.subr.mxu0 %v2850
        %3314 = vmatpush1.msra.mxu0 %v2849
        %3315 = vmatprep.subr.mxu0 %v2852
        %3316 = vmatpush1.msra.mxu0 %v2851
        %3317 = vmatprep.subr.mxu0 %v2854
        %3318 = vmatpush1.msra.mxu0 %v2853
        %3319 = vmatprep.subr.mxu0 %v2856
        %3320 = vmatpush1.msra.mxu0 %v2855
        %3321 = vmatprep.subr.mxu0 %v2858
        %3322 = vmatpush1.msra.mxu0 %v2857
        %3323 = vmatprep.subr.mxu0 %v2860
        %3324 = vmatpush1.msra.mxu0 %v2859
        %3325 = vmatprep.subr.mxu0 %v2862
        %3326 = vmatpush1.msra.mxu0 %v2861
        %3327 = vmatprep.subr.mxu0 %v2864
        %3328 = vmatpush1.msra.mxu0 %v2863
        %3329 = vmatprep.subr.mxu0 %v2866
        %3330 = vmatpush1.msra.mxu0 %v2865
        %3331 = vmatprep.subr.mxu0 %v2868
        %3332 = vmatpush1.msra.mxu0 %v2867
        %3333 = vmatprep.subr.mxu0 %v2870
        %3334 = vmatpush1.msra.mxu0 %v2869
        %3335 = vmatprep.subr.mxu0 %v2872
        %3336 = vmatpush1.msra.mxu0 %v2871
        %3337 = vmatprep.subr.mxu0 %v2874
        %3338 = vmatpush1.msra.mxu0 %v2873
        %3339 = vmatprep.subr.mxu0 %v2876
        %3340 = vmatpush1.msra.mxu0 %v2875
        %3341 = vmatprep.subr.mxu0 %v2878
        %3342 = vmatpush1.msra.mxu0 %v2877
        %3343 = vmatprep.subr.mxu0 %v2880
        %3344 = vmatpush1.msra.mxu0 %v2879
        %3345 = vmatprep.subr.mxu0 %v2882
        %3346 = vmatpush1.msra.mxu0 %v2881
        %3347 = vmatprep.mubr.f32.mxu0 %v3051
        %3348 = vmatmul.mubr.f32.gmra.mrb[0].mxu0 %v3049
        %v3349 = vpop.f32.mrb[0].mxu0
        %v3350 = vadd.f32 %v3279, %v3349
        %v3351 = vpop.f32.mrb[0].mxu0
        %v3352 = vadd.f32 %v3281, %v3351
        %3353 = vdwg.mxu0
        %3354 = vmatprep.subr.mxu0 %v2884
        %3355 = vmatpush1.msra.mxu0 %v2883
        %3356 = vmatprep.subr.mxu0 %v2886
        %3357 = vmatpush1.msra.mxu0 %v2885
        %3358 = vmatprep.subr.mxu0 %v2888
        %3359 = vmatpush1.msra.mxu0 %v2887
        %3360 = vmatprep.subr.mxu0 %v2890
        %3361 = vmatpush1.msra.mxu0 %v2889
        %3362 = vmatprep.subr.mxu0 %v2892
        %3363 = vmatpush1.msra.mxu0 %v2891
        %3364 = vmatprep.subr.mxu0 %v2894
        %3365 = vmatpush1.msra.mxu0 %v2893
        %3366 = vmatprep.subr.mxu0 %v2896
        %3367 = vmatpush1.msra.mxu0 %v2895
        %3368 = vmatprep.subr.mxu0 %v2898
        %3369 = vmatpush1.msra.mxu0 %v2897
        %3370 = vmatprep.subr.mxu0 %v2900
        %3371 = vmatpush1.msra.mxu0 %v2899
        %3372 = vmatprep.subr.mxu0 %v2902
        %3373 = vmatpush1.msra.mxu0 %v2901
        %3374 = vmatprep.subr.mxu0 %v2904
        %3375 = vmatpush1.msra.mxu0 %v2903
        %3376 = vmatprep.subr.mxu0 %v2906
        %3377 = vmatpush1.msra.mxu0 %v2905
        %3378 = vmatprep.subr.mxu0 %v2908
        %3379 = vmatpush1.msra.mxu0 %v2907
        %3380 = vmatprep.subr.mxu0 %v2910
        %3381 = vmatpush1.msra.mxu0 %v2909
        %3382 = vmatprep.subr.mxu0 %v2912
        %3383 = vmatpush1.msra.mxu0 %v2911
        %3384 = vmatprep.subr.mxu0 %v2914
        %3385 = vmatpush1.msra.mxu0 %v2913
        %3386 = vmatprep.subr.mxu0 %v2916
        %3387 = vmatpush1.msra.mxu0 %v2915
        %3388 = vmatprep.subr.mxu0 %v2918
        %3389 = vmatpush1.msra.mxu0 %v2917
        %3390 = vmatprep.subr.mxu0 %v2920
        %3391 = vmatpush1.msra.mxu0 %v2919
        %3392 = vmatprep.subr.mxu0 %v2922
        %3393 = vmatpush1.msra.mxu0 %v2921
        %3394 = vmatprep.subr.mxu0 %v2924
        %3395 = vmatpush1.msra.mxu0 %v2923
        %3396 = vmatprep.subr.mxu0 %v2926
        %3397 = vmatpush1.msra.mxu0 %v2925
        %3398 = vmatprep.subr.mxu0 %v2928
        %3399 = vmatpush1.msra.mxu0 %v2927
        %3400 = vmatprep.subr.mxu0 %v2930
        %3401 = vmatpush1.msra.mxu0 %v2929
        %3402 = vmatprep.subr.mxu0 %v2932
        %3403 = vmatpush1.msra.mxu0 %v2931
        %3404 = vmatprep.subr.mxu0 %v2934
        %3405 = vmatpush1.msra.mxu0 %v2933
        %3406 = vmatprep.subr.mxu0 %v2936
        %3407 = vmatpush1.msra.mxu0 %v2935
        %3408 = vmatprep.subr.mxu0 %v2938
        %3409 = vmatpush1.msra.mxu0 %v2937
        %3410 = vmatprep.subr.mxu0 %v2940
        %3411 = vmatpush1.msra.mxu0 %v2939
        %3412 = vmatprep.subr.mxu0 %v2942
        %3413 = vmatpush1.msra.mxu0 %v2941
        %3414 = vmatprep.subr.mxu0 %v2944
        %3415 = vmatpush1.msra.mxu0 %v2943
        %3416 = vmatprep.subr.mxu0 %v2946
        %3417 = vmatpush1.msra.mxu0 %v2945
        %3418 = vmatprep.mubr.f32.mxu0 %v3057
        %3419 = vmatmul.mubr.f32.gmra.mrb[0].mxu0 %v3055
        %v3420 = vpop.f32.mrb[0].mxu0
        %v3421 = vadd.f32 %v3350, %v3420
        %v3422 = vpop.f32.mrb[0].mxu0
        %v3423 = vadd.f32 %v3352, %v3422
        %3424 = vdwg.mxu0
        %vm3425 = vcmp.ge.f32.partialorder %v3421, 0.0
        %vm3426 = vcmp.ge.f32.partialorder %v3423, 0.0
        %v3427 = vmul.f32 %v3421, 0.01
        %v3428 = vmul.f32 %v3423, 0.01
        %v3429 = vsel %vm3425, %v3421, %v3427
        %v3430 = vsel %vm3426, %v3423, %v3428
        %v3431 = vld [vmem:[%s10] sm:$0xff]
        %v3432 = vld [vmem:[%s10 + $0x8] sm:$0xff]
        %v3433 = vld [vmem:[%s10 + $0x10] sm:$0xf]
        %v3434 = vld [vmem:[#allocation7] sm:$0xff]
        %v3435 = vld [vmem:[#allocation7 + $0x8] sm:$0xff]
        %v3436 = vld [vmem:[#allocation7 + $0x10] sm:$0xff]
        %v3437 = vld [vmem:[#allocation7 + $0x18] sm:$0xff]
        %v3438 = vld [vmem:[#allocation7 + $0x20] sm:$0xff]
        %v3439 = vld [vmem:[#allocation7 + $0x28] sm:$0xff]
        %v3440 = vld [vmem:[#allocation7 + $0x30] sm:$0xff]
        %v3441 = vld [vmem:[#allocation7 + $0x38] sm:$0xff]
        %v3442 = vld [vmem:[#allocation7 + $0x40] sm:$0xff]
        %v3443 = vld [vmem:[#allocation7 + $0x48] sm:$0xff]
        %v3444 = vld [vmem:[#allocation7 + $0x50] sm:$0xff]
        %v3445 = vld [vmem:[#allocation7 + $0x58] sm:$0xff]
        %v3446 = vld [vmem:[#allocation7 + $0x60] sm:$0xff]
        %v3447 = vld [vmem:[#allocation7 + $0x68] sm:$0xff]
        %v3448 = vld [vmem:[#allocation7 + $0x70] sm:$0xff]
        %v3449 = vld [vmem:[#allocation7 + $0x78] sm:$0xff]
        %v3450 = vld [vmem:[#allocation7 + $0x80] sm:$0xff]
        %v3451 = vld [vmem:[#allocation7 + $0x88] sm:$0xff]
        %v3452 = vld [vmem:[#allocation7 + $0x90] sm:$0xff]
        %v3453 = vld [vmem:[#allocation7 + $0x98] sm:$0xff]
        %v3454 = vld [vmem:[#allocation7 + $0xa0] sm:$0xff]
        %v3455 = vld [vmem:[#allocation7 + $0xa8] sm:$0xff]
        %v3456 = vld [vmem:[#allocation7 + $0xb0] sm:$0xff]
        %v3457 = vld [vmem:[#allocation7 + $0xb8] sm:$0xff]
        %v3458 = vld [vmem:[#allocation7 + $0xc0] sm:$0xff]
        %v3459 = vld [vmem:[#allocation7 + $0xc8] sm:$0xff]
        %v3460 = vld [vmem:[#allocation7 + $0xd0] sm:$0xff]
        %v3461 = vld [vmem:[#allocation7 + $0xd8] sm:$0xff]
        %v3462 = vld [vmem:[#allocation7 + $0xe0] sm:$0xff]
        %v3463 = vld [vmem:[#allocation7 + $0xe8] sm:$0xff]
        %v3464 = vld [vmem:[#allocation7 + $0xf0] sm:$0xff]
        %v3465 = vld [vmem:[#allocation7 + $0xf8] sm:$0xff]
        %v3466 = vld [vmem:[#allocation7 + $0x100] sm:$0xff]
        %v3467 = vld [vmem:[#allocation7 + $0x108] sm:$0xff]
        %v3468 = vld [vmem:[#allocation7 + $0x110] sm:$0xff]
        %v3469 = vld [vmem:[#allocation7 + $0x118] sm:$0xff]
        %v3470 = vld [vmem:[#allocation7 + $0x120] sm:$0xff]
        %v3471 = vld [vmem:[#allocation7 + $0x128] sm:$0xff]
        %v3472 = vld [vmem:[#allocation7 + $0x130] sm:$0xff]
        %v3473 = vld [vmem:[#allocation7 + $0x138] sm:$0xff]
        %v3474 = vld [vmem:[#allocation7 + $0x140] sm:$0xff]
        %v3475 = vld [vmem:[#allocation7 + $0x148] sm:$0xff]
        %v3476 = vld [vmem:[#allocation7 + $0x150] sm:$0xff]
        %v3477 = vld [vmem:[#allocation7 + $0x158] sm:$0xff]
        %v3478 = vld [vmem:[#allocation7 + $0x160] sm:$0xff]
        %v3479 = vld [vmem:[#allocation7 + $0x168] sm:$0xff]
        %v3480 = vld [vmem:[#allocation7 + $0x170] sm:$0xff]
        %v3481 = vld [vmem:[#allocation7 + $0x178] sm:$0xff]
        %v3482 = vld [vmem:[#allocation7 + $0x180] sm:$0xff]
        %v3483 = vld [vmem:[#allocation7 + $0x188] sm:$0xff]
        %v3484 = vld [vmem:[#allocation7 + $0x190] sm:$0xff]
        %v3485 = vld [vmem:[#allocation7 + $0x198] sm:$0xff]
        %v3486 = vld [vmem:[#allocation7 + $0x1a0] sm:$0xff]
        %v3487 = vld [vmem:[#allocation7 + $0x1a8] sm:$0xff]
        %v3488 = vld [vmem:[#allocation7 + $0x1b0] sm:$0xff]
        %v3489 = vld [vmem:[#allocation7 + $0x1b8] sm:$0xff]
        %v3490 = vld [vmem:[#allocation7 + $0x1c0] sm:$0xff]
        %v3491 = vld [vmem:[#allocation7 + $0x1c8] sm:$0xff]
        %v3492 = vld [vmem:[#allocation7 + $0x1d0] sm:$0xff]
        %v3493 = vld [vmem:[#allocation7 + $0x1d8] sm:$0xff]
        %v3494 = vld [vmem:[#allocation7 + $0x1e0] sm:$0xff]
        %v3495 = vld [vmem:[#allocation7 + $0x1e8] sm:$0xff]
        %v3496 = vld [vmem:[#allocation7 + $0x1f0] sm:$0xff]
        %v3497 = vld [vmem:[#allocation7 + $0x1f8] sm:$0xff]
        %v3498 = vld [vmem:[#allocation7 + $0x200] sm:$0xff]
        %v3499 = vld [vmem:[#allocation7 + $0x208] sm:$0xff]
        %v3500 = vld [vmem:[#allocation7 + $0x210] sm:$0xff]
        %v3501 = vld [vmem:[#allocation7 + $0x218] sm:$0xff]
        %v3502 = vld [vmem:[#allocation7 + $0x220] sm:$0xff]
        %v3503 = vld [vmem:[#allocation7 + $0x228] sm:$0xff]
        %v3504 = vld [vmem:[#allocation7 + $0x230] sm:$0xff]
        %v3505 = vld [vmem:[#allocation7 + $0x238] sm:$0xff]
        %v3506 = vld [vmem:[#allocation7 + $0x240] sm:$0xff]
        %v3507 = vld [vmem:[#allocation7 + $0x248] sm:$0xff]
        %v3508 = vld [vmem:[#allocation7 + $0x250] sm:$0xff]
        %v3509 = vld [vmem:[#allocation7 + $0x258] sm:$0xff]
        %v3510 = vld [vmem:[#allocation7 + $0x260] sm:$0xff]
        %v3511 = vld [vmem:[#allocation7 + $0x268] sm:$0xff]
        %v3512 = vld [vmem:[#allocation7 + $0x270] sm:$0xff]
        %v3513 = vld [vmem:[#allocation7 + $0x278] sm:$0xff]
        %v3514 = vld [vmem:[#allocation7 + $0x280] sm:$0xff]
        %v3515 = vld [vmem:[#allocation7 + $0x288] sm:$0xff]
        %v3516 = vld [vmem:[#allocation7 + $0x290] sm:$0xff]
        %v3517 = vld [vmem:[#allocation7 + $0x298] sm:$0xff]
        %v3518 = vld [vmem:[#allocation7 + $0x2a0] sm:$0xff]
        %v3519 = vld [vmem:[#allocation7 + $0x2a8] sm:$0xff]
        %v3520 = vld [vmem:[#allocation7 + $0x2b0] sm:$0xff]
        %v3521 = vld [vmem:[#allocation7 + $0x2b8] sm:$0xff]
        %v3522 = vld [vmem:[#allocation7 + $0x2c0] sm:$0xff]
        %v3523 = vld [vmem:[#allocation7 + $0x2c8] sm:$0xff]
        %v3524 = vld [vmem:[#allocation7 + $0x2d0] sm:$0xff]
        %v3525 = vld [vmem:[#allocation7 + $0x2d8] sm:$0xff]
        %v3526 = vld [vmem:[#allocation7 + $0x2e0] sm:$0xff]
        %v3527 = vld [vmem:[#allocation7 + $0x2e8] sm:$0xff]
        %v3528 = vld [vmem:[#allocation7 + $0x2f0] sm:$0xff]
        %v3529 = vld [vmem:[#allocation7 + $0x2f8] sm:$0xff]
        %v3530 = vld [vmem:[#allocation7 + $0x300] sm:$0xff]
        %v3531 = vld [vmem:[#allocation7 + $0x308] sm:$0xff]
        %v3532 = vld [vmem:[#allocation7 + $0x310] sm:$0xff]
        %v3533 = vld [vmem:[#allocation7 + $0x318] sm:$0xff]
        %v3534 = vld [vmem:[#allocation7 + $0x320] sm:$0xff]
        %v3535 = vld [vmem:[#allocation7 + $0x328] sm:$0xff]
        %v3536 = vld [vmem:[#allocation7 + $0x330] sm:$0xff]
        %v3537 = vld [vmem:[#allocation7 + $0x338] sm:$0xff]
        %v3538 = vld [vmem:[#allocation7 + $0x340] sm:$0xff]
        %v3539 = vld [vmem:[#allocation7 + $0x348] sm:$0xff]
        %v3540 = vld [vmem:[#allocation7 + $0x350] sm:$0xff]
        %v3541 = vld [vmem:[#allocation7 + $0x358] sm:$0xff]
        %v3542 = vld [vmem:[#allocation7 + $0x360] sm:$0xff]
        %v3543 = vld [vmem:[#allocation7 + $0x368] sm:$0xff]
        %v3544 = vld [vmem:[#allocation7 + $0x370] sm:$0xff]
        %v3545 = vld [vmem:[#allocation7 + $0x378] sm:$0xff]
        %v3546 = vld [vmem:[#allocation7 + $0x380] sm:$0xff]
        %v3547 = vld [vmem:[#allocation7 + $0x388] sm:$0xff]
        %v3548 = vld [vmem:[#allocation7 + $0x390] sm:$0xff]
        %v3549 = vld [vmem:[#allocation7 + $0x398] sm:$0xff]
        %v3550 = vld [vmem:[#allocation7 + $0x3a0] sm:$0xff]
        %v3551 = vld [vmem:[#allocation7 + $0x3a8] sm:$0xff]
        %v3552 = vld [vmem:[#allocation7 + $0x3b0] sm:$0xff]
        %v3553 = vld [vmem:[#allocation7 + $0x3b8] sm:$0xff]
        %v3554 = vld [vmem:[#allocation7 + $0x3c0] sm:$0xff]
        %v3555 = vld [vmem:[#allocation7 + $0x3c8] sm:$0xff]
        %v3556 = vld [vmem:[#allocation7 + $0x3d0] sm:$0xff]
        %v3557 = vld [vmem:[#allocation7 + $0x3d8] sm:$0xff]
        %v3558 = vld [vmem:[#allocation7 + $0x3e0] sm:$0xff]
        %v3559 = vld [vmem:[#allocation7 + $0x3e8] sm:$0xff]
        %v3560 = vld [vmem:[#allocation7 + $0x3f0] sm:$0xff]
        %v3561 = vld [vmem:[#allocation7 + $0x3f8] sm:$0xff]
        %v3562 = vld [vmem:[#allocation7 + $0x400] sm:$0xff]
        %v3563 = vld [vmem:[#allocation7 + $0x408] sm:$0xff]
        %v3564 = vld [vmem:[#allocation7 + $0x410] sm:$0xff]
        %v3565 = vld [vmem:[#allocation7 + $0x418] sm:$0xff]
        %v3566 = vld [vmem:[#allocation7 + $0x420] sm:$0xff]
        %v3567 = vld [vmem:[#allocation7 + $0x428] sm:$0xff]
        %v3568 = vld [vmem:[#allocation7 + $0x430] sm:$0xff]
        %v3569 = vld [vmem:[#allocation7 + $0x438] sm:$0xff]
        %v3570 = vld [vmem:[#allocation7 + $0x440] sm:$0xff]
        %v3571 = vld [vmem:[#allocation7 + $0x448] sm:$0xff]
        %v3572 = vld [vmem:[#allocation7 + $0x450] sm:$0xff]
        %v3573 = vld [vmem:[#allocation7 + $0x458] sm:$0xff]
        %v3574 = vld [vmem:[#allocation7 + $0x460] sm:$0xff]
        %v3575 = vld [vmem:[#allocation7 + $0x468] sm:$0xff]
        %v3576 = vld [vmem:[#allocation7 + $0x470] sm:$0xff]
        %v3577 = vld [vmem:[#allocation7 + $0x478] sm:$0xff]
        %v3578 = vld [vmem:[#allocation7 + $0x480] sm:$0xff]
        %v3579 = vld [vmem:[#allocation7 + $0x488] sm:$0xff]
        %v3580 = vld [vmem:[#allocation7 + $0x490] sm:$0xff]
        %v3581 = vld [vmem:[#allocation7 + $0x498] sm:$0xff]
        %v3582 = vld [vmem:[#allocation7 + $0x4a0] sm:$0xff]
        %v3583 = vld [vmem:[#allocation7 + $0x4a8] sm:$0xff]
        %v3584 = vld [vmem:[#allocation7 + $0x4b0] sm:$0xff]
        %v3585 = vld [vmem:[#allocation7 + $0x4b8] sm:$0xff]
        %v3586 = vld [vmem:[#allocation7 + $0x4c0] sm:$0xff]
        %v3587 = vld [vmem:[#allocation7 + $0x4c8] sm:$0xff]
        %v3588 = vld [vmem:[#allocation7 + $0x4d0] sm:$0xff]
        %v3589 = vld [vmem:[#allocation7 + $0x4d8] sm:$0xff]
        %v3590 = vld [vmem:[#allocation7 + $0x4e0] sm:$0xff]
        %v3591 = vld [vmem:[#allocation7 + $0x4e8] sm:$0xff]
        %v3592 = vld [vmem:[#allocation7 + $0x4f0] sm:$0xff]
        %v3593 = vld [vmem:[#allocation7 + $0x4f8] sm:$0xff]
        %v3594 = vld [vmem:[%s12] sm:$0x1]
        %vm3595 = vcmask 64512
        %v3597 = vsel %vm3595, %v3431, 0
        %v3600 = vsel %vm3595, %v3432, 0
        %v3603 = vsel %vm3595, %v3433, 0
        %3605 = vmatprep.subr.mxu0 %v3430
        %3606 = vmatpush1.msra.mxu0 %v3429
        %3607 = vmatprep.subr.mxu0 0.0
        %3608 = vmatpush1.msra.mxu0 0.0
        %3609 = vmatprep.subr.mxu0 0.0
        %3610 = vmatpush1.msra.mxu0 0.0
        %3611 = vmatprep.subr.mxu0 0.0
        %3612 = vmatpush1.msra.mxu0 0.0
        %3613 = vmatprep.subr.mxu0 0.0
        %3614 = vmatpush1.msra.mxu0 0.0
        %3615 = vmatprep.subr.mxu0 0.0
        %3616 = vmatpush1.msra.mxu0 0.0
        %3617 = vmatprep.subr.mxu0 0.0
        %3618 = vmatpush1.msra.mxu0 0.0
        %3619 = vmatprep.subr.mxu0 0.0
        %3620 = vmatpush1.msra.mxu0 0.0
        %3621 = vmatprep.subr.mxu0 0.0
        %3622 = vmatpush1.msra.mxu0 0.0
        %3623 = vmatprep.subr.mxu0 0.0
        %3624 = vmatpush1.msra.mxu0 0.0
        %3625 = vmatprep.subr.mxu0 0.0
        %3626 = vmatpush1.msra.mxu0 0.0
        %3627 = vmatprep.subr.mxu0 0.0
        %3628 = vmatpush1.msra.mxu0 0.0
        %3629 = vmatprep.subr.mxu0 0.0
        %3630 = vmatpush1.msra.mxu0 0.0
        %3631 = vmatprep.subr.mxu0 0.0
        %3632 = vmatpush1.msra.mxu0 0.0
        %3633 = vmatprep.subr.mxu0 0.0
        %3634 = vmatpush1.msra.mxu0 0.0
        %3635 = vmatprep.subr.mxu0 0.0
        %3636 = vmatpush1.msra.mxu0 0.0
        %3637 = vmatprep.subr.mxu0 0.0
        %3638 = vmatpush1.msra.mxu0 0.0
        %3639 = vmatprep.subr.mxu0 0.0
        %3640 = vmatpush1.msra.mxu0 0.0
        %3641 = vmatprep.subr.mxu0 0.0
        %3642 = vmatpush1.msra.mxu0 0.0
        %3643 = vmatprep.subr.mxu0 0.0
        %3644 = vmatpush1.msra.mxu0 0.0
        %3645 = vmatprep.subr.mxu0 0.0
        %3646 = vmatpush1.msra.mxu0 0.0
        %3647 = vmatprep.subr.mxu0 0.0
        %3648 = vmatpush1.msra.mxu0 0.0
        %3649 = vmatprep.subr.mxu0 0.0
        %3650 = vmatpush1.msra.mxu0 0.0
        %3651 = vmatprep.subr.mxu0 0.0
        %3652 = vmatpush1.msra.mxu0 0.0
        %3653 = vmatprep.subr.mxu0 0.0
        %3654 = vmatpush1.msra.mxu0 0.0
        %3655 = vmatprep.subr.mxu0 0.0
        %3656 = vmatpush1.msra.mxu0 0.0
        %3657 = vmatprep.subr.mxu0 0.0
        %3658 = vmatpush1.msra.mxu0 0.0
        %3659 = vmatprep.subr.mxu0 0.0
        %3660 = vmatpush1.msra.mxu0 0.0
        %3661 = vmatprep.subr.mxu0 0.0
        %3662 = vmatpush1.msra.mxu0 0.0
        %3663 = vmatprep.subr.mxu0 0.0
        %3664 = vmatpush1.msra.mxu0 0.0
        %3665 = vmatprep.subr.mxu0 0.0
        %3666 = vmatpush1.msra.mxu0 0.0
        %3667 = vmatprep.subr.mxu0 0.0
        %3668 = vmatpush1.msra.mxu0 0.0
        %3669 = vmatprep.mubr.f32.mxu0 0.0
        %3670 = vmatmul.mubr.f32.gmra.mrb[0].mxu0 %v3597
        %v3671 = vpop.f32.mrb[0].mxu0
        %v3672 = vadd.f32 0.0, %v3671
        %v3673 = vpop.f32.mrb[0].mxu0
        %v3674 = vadd.f32 0.0, %v3673
        %3675 = vmatprep.mubr.f32.mxu0 0.0
        %3676 = vmatmul.mubr.f32.gmra.mrb[0].mxu0 %v3600
        %v3677 = vpop.f32.mrb[0].mxu0
        %v3678 = vadd.f32 0.0, %v3677
        %v3679 = vpop.f32.mrb[0].mxu0
        %v3680 = vadd.f32 0.0, %v3679
        %3681 = vmatprep.mubr.f32.mxu0 0.0
        %3682 = vmatmul.mubr.f32.gmra.mrb[0].mxu0 %v3603
        %v3683 = vpop.f32.mrb[0].mxu0
        %v3684 = vadd.f32 0.0, %v3683
        %v3685 = vpop.f32.mrb[0].mxu0
        %v3686 = vadd.f32 0.0, %v3685
        %3687 = vdwg.mxu0
        %v3690 = vrot.slane %v3672, 4
        %v3691 = vrot.slane %v3674, 4
        %v3696 = vrot.slane %v3678, 4
        %v3697 = vrot.slane %v3680, 4
        %v3701 = vlaneseq
        %v3702 = vshrl.u32 %v3701, 7
        %v3703 = vsub.s32 0, %v3702
        %v3704 = vrot.slane %v3594, %v3703
        %3706 = vmatprep.subr.mxu0 0.0
        %3707 = vmatpush1.msra.mxu0 %v3434
        %3708 = vmatprep.subr.mxu0 0.0
        %3709 = vmatpush1.msra.mxu0 %v3435
        %3710 = vmatprep.subr.mxu0 0.0
        %3711 = vmatpush1.msra.mxu0 %v3436
        %3712 = vmatprep.subr.mxu0 0.0
        %3713 = vmatpush1.msra.mxu0 %v3437
        %3714 = vmatprep.subr.mxu0 0.0
        %3715 = vmatpush1.msra.mxu0 %v3438
        %3716 = vmatprep.subr.mxu0 0.0
        %3717 = vmatpush1.msra.mxu0 %v3439
        %3718 = vmatprep.subr.mxu0 0.0
        %3719 = vmatpush1.msra.mxu0 %v3440
        %3720 = vmatprep.subr.mxu0 0.0
        %3721 = vmatpush1.msra.mxu0 %v3441
        %3722 = vmatprep.subr.mxu0 0.0
        %3723 = vmatpush1.msra.mxu0 %v3442
        %3724 = vmatprep.subr.mxu0 0.0
        %3725 = vmatpush1.msra.mxu0 %v3443
        %3726 = vmatprep.subr.mxu0 0.0
        %3727 = vmatpush1.msra.mxu0 %v3444
        %3728 = vmatprep.subr.mxu0 0.0
        %3729 = vmatpush1.msra.mxu0 %v3445
        %3730 = vmatprep.subr.mxu0 0.0
        %3731 = vmatpush1.msra.mxu0 %v3446
        %3732 = vmatprep.subr.mxu0 0.0
        %3733 = vmatpush1.msra.mxu0 %v3447
        %3734 = vmatprep.subr.mxu0 0.0
        %3735 = vmatpush1.msra.mxu0 %v3448
        %3736 = vmatprep.subr.mxu0 0.0
        %3737 = vmatpush1.msra.mxu0 %v3449
        %3738 = vmatprep.subr.mxu0 0.0
        %3739 = vmatpush1.msra.mxu0 %v3450
        %3740 = vmatprep.subr.mxu0 0.0
        %3741 = vmatpush1.msra.mxu0 %v3451
        %3742 = vmatprep.subr.mxu0 0.0
        %3743 = vmatpush1.msra.mxu0 %v3452
        %3744 = vmatprep.subr.mxu0 0.0
        %3745 = vmatpush1.msra.mxu0 %v3453
        %3746 = vmatprep.subr.mxu0 0.0
        %3747 = vmatpush1.msra.mxu0 %v3454
        %3748 = vmatprep.subr.mxu0 0.0
        %3749 = vmatpush1.msra.mxu0 %v3455
        %3750 = vmatprep.subr.mxu0 0.0
        %3751 = vmatpush1.msra.mxu0 %v3456
        %3752 = vmatprep.subr.mxu0 0.0
        %3753 = vmatpush1.msra.mxu0 %v3457
        %3754 = vmatprep.subr.mxu0 0.0
        %3755 = vmatpush1.msra.mxu0 %v3458
        %3756 = vmatprep.subr.mxu0 0.0
        %3757 = vmatpush1.msra.mxu0 %v3459
        %3758 = vmatprep.subr.mxu0 0.0
        %3759 = vmatpush1.msra.mxu0 %v3460
        %3760 = vmatprep.subr.mxu0 0.0
        %3761 = vmatpush1.msra.mxu0 %v3461
        %3762 = vmatprep.subr.mxu0 0.0
        %3763 = vmatpush1.msra.mxu0 %v3462
        %3764 = vmatprep.subr.mxu0 0.0
        %3765 = vmatpush1.msra.mxu0 %v3463
        %3766 = vmatprep.subr.mxu0 0.0
        %3767 = vmatpush1.msra.mxu0 %v3464
        %3768 = vmatprep.subr.mxu0 0.0
        %3769 = vmatpush1.msra.mxu0 %v3465
        %3770 = vmatprep.mubr.f32.mxu0 %v3674
        %3771 = vmatmul.mubr.f32.gmra.mrb[0].mxu0 %v3672
        %v3772 = vpop.f32.mrb[0].mxu0
        %v3773 = vadd.f32 %v3704, %v3772
        %v3774 = vpop.f32.mrb[0].mxu0
        %3775 = vdwg.mxu0
        %3776 = vmatprep.subr.mxu0 0.0
        %3777 = vmatpush1.msra.mxu0 %v3466
        %3778 = vmatprep.subr.mxu0 0.0
        %3779 = vmatpush1.msra.mxu0 %v3467
        %3780 = vmatprep.subr.mxu0 0.0
        %3781 = vmatpush1.msra.mxu0 %v3468
        %3782 = vmatprep.subr.mxu0 0.0
        %3783 = vmatpush1.msra.mxu0 %v3469
        %3784 = vmatprep.subr.mxu0 0.0
        %3785 = vmatpush1.msra.mxu0 %v3470
        %3786 = vmatprep.subr.mxu0 0.0
        %3787 = vmatpush1.msra.mxu0 %v3471
        %3788 = vmatprep.subr.mxu0 0.0
        %3789 = vmatpush1.msra.mxu0 %v3472
        %3790 = vmatprep.subr.mxu0 0.0
        %3791 = vmatpush1.msra.mxu0 %v3473
        %3792 = vmatprep.subr.mxu0 0.0
        %3793 = vmatpush1.msra.mxu0 %v3474
        %3794 = vmatprep.subr.mxu0 0.0
        %3795 = vmatpush1.msra.mxu0 %v3475
        %3796 = vmatprep.subr.mxu0 0.0
        %3797 = vmatpush1.msra.mxu0 %v3476
        %3798 = vmatprep.subr.mxu0 0.0
        %3799 = vmatpush1.msra.mxu0 %v3477
        %3800 = vmatprep.subr.mxu0 0.0
        %3801 = vmatpush1.msra.mxu0 %v3478
        %3802 = vmatprep.subr.mxu0 0.0
        %3803 = vmatpush1.msra.mxu0 %v3479
        %3804 = vmatprep.subr.mxu0 0.0
        %3805 = vmatpush1.msra.mxu0 %v3480
        %3806 = vmatprep.subr.mxu0 0.0
        %3807 = vmatpush1.msra.mxu0 %v3481
        %3808 = vmatprep.subr.mxu0 0.0
        %3809 = vmatpush1.msra.mxu0 %v3482
        %3810 = vmatprep.subr.mxu0 0.0
        %3811 = vmatpush1.msra.mxu0 %v3483
        %3812 = vmatprep.subr.mxu0 0.0
        %3813 = vmatpush1.msra.mxu0 %v3484
        %3814 = vmatprep.subr.mxu0 0.0
        %3815 = vmatpush1.msra.mxu0 %v3485
        %3816 = vmatprep.subr.mxu0 0.0
        %3817 = vmatpush1.msra.mxu0 %v3486
        %3818 = vmatprep.subr.mxu0 0.0
        %3819 = vmatpush1.msra.mxu0 %v3487
        %3820 = vmatprep.subr.mxu0 0.0
        %3821 = vmatpush1.msra.mxu0 %v3488
        %3822 = vmatprep.subr.mxu0 0.0
        %3823 = vmatpush1.msra.mxu0 %v3489
        %3824 = vmatprep.subr.mxu0 0.0
        %3825 = vmatpush1.msra.mxu0 %v3490
        %3826 = vmatprep.subr.mxu0 0.0
        %3827 = vmatpush1.msra.mxu0 %v3491
        %3828 = vmatprep.subr.mxu0 0.0
        %3829 = vmatpush1.msra.mxu0 %v3492
        %3830 = vmatprep.subr.mxu0 0.0
        %3831 = vmatpush1.msra.mxu0 %v3493
        %3832 = vmatprep.subr.mxu0 0.0
        %3833 = vmatpush1.msra.mxu0 %v3494
        %3834 = vmatprep.subr.mxu0 0.0
        %3835 = vmatpush1.msra.mxu0 %v3495
        %3836 = vmatprep.subr.mxu0 0.0
        %3837 = vmatpush1.msra.mxu0 %v3496
        %3838 = vmatprep.subr.mxu0 0.0
        %3839 = vmatpush1.msra.mxu0 %v3497
        %3840 = vmatprep.mubr.f32.mxu0 %v3691
        %3841 = vmatmul.mubr.f32.gmra.mrb[0].mxu0 %v3690
        %v3842 = vpop.f32.mrb[0].mxu0
        %v3843 = vadd.f32 %v3773, %v3842
        %v3844 = vpop.f32.mrb[0].mxu0
        %3845 = vdwg.mxu0
        %3846 = vmatprep.subr.mxu0 0.0
        %3847 = vmatpush1.msra.mxu0 %v3498
        %3848 = vmatprep.subr.mxu0 0.0
        %3849 = vmatpush1.msra.mxu0 %v3499
        %3850 = vmatprep.subr.mxu0 0.0
        %3851 = vmatpush1.msra.mxu0 %v3500
        %3852 = vmatprep.subr.mxu0 0.0
        %3853 = vmatpush1.msra.mxu0 %v3501
        %3854 = vmatprep.subr.mxu0 0.0
        %3855 = vmatpush1.msra.mxu0 %v3502
        %3856 = vmatprep.subr.mxu0 0.0
        %3857 = vmatpush1.msra.mxu0 %v3503
        %3858 = vmatprep.subr.mxu0 0.0
        %3859 = vmatpush1.msra.mxu0 %v3504
        %3860 = vmatprep.subr.mxu0 0.0
        %3861 = vmatpush1.msra.mxu0 %v3505
        %3862 = vmatprep.subr.mxu0 0.0
        %3863 = vmatpush1.msra.mxu0 %v3506
        %3864 = vmatprep.subr.mxu0 0.0
        %3865 = vmatpush1.msra.mxu0 %v3507
        %3866 = vmatprep.subr.mxu0 0.0
        %3867 = vmatpush1.msra.mxu0 %v3508
        %3868 = vmatprep.subr.mxu0 0.0
        %3869 = vmatpush1.msra.mxu0 %v3509
        %3870 = vmatprep.subr.mxu0 0.0
        %3871 = vmatpush1.msra.mxu0 %v3510
        %3872 = vmatprep.subr.mxu0 0.0
        %3873 = vmatpush1.msra.mxu0 %v3511
        %3874 = vmatprep.subr.mxu0 0.0
        %3875 = vmatpush1.msra.mxu0 %v3512
        %3876 = vmatprep.subr.mxu0 0.0
        %3877 = vmatpush1.msra.mxu0 %v3513
        %3878 = vmatprep.subr.mxu0 0.0
        %3879 = vmatpush1.msra.mxu0 %v3514
        %3880 = vmatprep.subr.mxu0 0.0
        %3881 = vmatpush1.msra.mxu0 %v3515
        %3882 = vmatprep.subr.mxu0 0.0
        %3883 = vmatpush1.msra.mxu0 %v3516
        %3884 = vmatprep.subr.mxu0 0.0
        %3885 = vmatpush1.msra.mxu0 %v3517
        %3886 = vmatprep.subr.mxu0 0.0
        %3887 = vmatpush1.msra.mxu0 %v3518
        %3888 = vmatprep.subr.mxu0 0.0
        %3889 = vmatpush1.msra.mxu0 %v3519
        %3890 = vmatprep.subr.mxu0 0.0
        %3891 = vmatpush1.msra.mxu0 %v3520
        %3892 = vmatprep.subr.mxu0 0.0
        %3893 = vmatpush1.msra.mxu0 %v3521
        %3894 = vmatprep.subr.mxu0 0.0
        %3895 = vmatpush1.msra.mxu0 %v3522
        %3896 = vmatprep.subr.mxu0 0.0
        %3897 = vmatpush1.msra.mxu0 %v3523
        %3898 = vmatprep.subr.mxu0 0.0
        %3899 = vmatpush1.msra.mxu0 %v3524
        %3900 = vmatprep.subr.mxu0 0.0
        %3901 = vmatpush1.msra.mxu0 %v3525
        %3902 = vmatprep.subr.mxu0 0.0
        %3903 = vmatpush1.msra.mxu0 %v3526
        %3904 = vmatprep.subr.mxu0 0.0
        %3905 = vmatpush1.msra.mxu0 %v3527
        %3906 = vmatprep.subr.mxu0 0.0
        %3907 = vmatpush1.msra.mxu0 %v3528
        %3908 = vmatprep.subr.mxu0 0.0
        %3909 = vmatpush1.msra.mxu0 %v3529
        %3910 = vmatprep.mubr.f32.mxu0 %v3680
        %3911 = vmatmul.mubr.f32.gmra.mrb[0].mxu0 %v3678
        %v3912 = vpop.f32.mrb[0].mxu0
        %v3913 = vadd.f32 %v3843, %v3912
        %v3914 = vpop.f32.mrb[0].mxu0
        %3915 = vdwg.mxu0
        %3916 = vmatprep.subr.mxu0 0.0
        %3917 = vmatpush1.msra.mxu0 %v3530
        %3918 = vmatprep.subr.mxu0 0.0
        %3919 = vmatpush1.msra.mxu0 %v3531
        %3920 = vmatprep.subr.mxu0 0.0
        %3921 = vmatpush1.msra.mxu0 %v3532
        %3922 = vmatprep.subr.mxu0 0.0
        %3923 = vmatpush1.msra.mxu0 %v3533
        %3924 = vmatprep.subr.mxu0 0.0
        %3925 = vmatpush1.msra.mxu0 %v3534
        %3926 = vmatprep.subr.mxu0 0.0
        %3927 = vmatpush1.msra.mxu0 %v3535
        %3928 = vmatprep.subr.mxu0 0.0
        %3929 = vmatpush1.msra.mxu0 %v3536
        %3930 = vmatprep.subr.mxu0 0.0
        %3931 = vmatpush1.msra.mxu0 %v3537
        %3932 = vmatprep.subr.mxu0 0.0
        %3933 = vmatpush1.msra.mxu0 %v3538
        %3934 = vmatprep.subr.mxu0 0.0
        %3935 = vmatpush1.msra.mxu0 %v3539
        %3936 = vmatprep.subr.mxu0 0.0
        %3937 = vmatpush1.msra.mxu0 %v3540
        %3938 = vmatprep.subr.mxu0 0.0
        %3939 = vmatpush1.msra.mxu0 %v3541
        %3940 = vmatprep.subr.mxu0 0.0
        %3941 = vmatpush1.msra.mxu0 %v3542
        %3942 = vmatprep.subr.mxu0 0.0
        %3943 = vmatpush1.msra.mxu0 %v3543
        %3944 = vmatprep.subr.mxu0 0.0
        %3945 = vmatpush1.msra.mxu0 %v3544
        %3946 = vmatprep.subr.mxu0 0.0
        %3947 = vmatpush1.msra.mxu0 %v3545
        %3948 = vmatprep.subr.mxu0 0.0
        %3949 = vmatpush1.msra.mxu0 %v3546
        %3950 = vmatprep.subr.mxu0 0.0
        %3951 = vmatpush1.msra.mxu0 %v3547
        %3952 = vmatprep.subr.mxu0 0.0
        %3953 = vmatpush1.msra.mxu0 %v3548
        %3954 = vmatprep.subr.mxu0 0.0
        %3955 = vmatpush1.msra.mxu0 %v3549
        %3956 = vmatprep.subr.mxu0 0.0
        %3957 = vmatpush1.msra.mxu0 %v3550
        %3958 = vmatprep.subr.mxu0 0.0
        %3959 = vmatpush1.msra.mxu0 %v3551
        %3960 = vmatprep.subr.mxu0 0.0
        %3961 = vmatpush1.msra.mxu0 %v3552
        %3962 = vmatprep.subr.mxu0 0.0
        %3963 = vmatpush1.msra.mxu0 %v3553
        %3964 = vmatprep.subr.mxu0 0.0
        %3965 = vmatpush1.msra.mxu0 %v3554
        %3966 = vmatprep.subr.mxu0 0.0
        %3967 = vmatpush1.msra.mxu0 %v3555
        %3968 = vmatprep.subr.mxu0 0.0
        %3969 = vmatpush1.msra.mxu0 %v3556
        %3970 = vmatprep.subr.mxu0 0.0
        %3971 = vmatpush1.msra.mxu0 %v3557
        %3972 = vmatprep.subr.mxu0 0.0
        %3973 = vmatpush1.msra.mxu0 %v3558
        %3974 = vmatprep.subr.mxu0 0.0
        %3975 = vmatpush1.msra.mxu0 %v3559
        %3976 = vmatprep.subr.mxu0 0.0
        %3977 = vmatpush1.msra.mxu0 %v3560
        %3978 = vmatprep.subr.mxu0 0.0
        %3979 = vmatpush1.msra.mxu0 %v3561
        %3980 = vmatprep.mubr.f32.mxu0 %v3697
        %3981 = vmatmul.mubr.f32.gmra.mrb[0].mxu0 %v3696
        %v3982 = vpop.f32.mrb[0].mxu0
        %v3983 = vadd.f32 %v3913, %v3982
        %v3984 = vpop.f32.mrb[0].mxu0
        %3985 = vdwg.mxu0
        %3986 = vmatprep.subr.mxu0 0.0
        %3987 = vmatpush1.msra.mxu0 %v3562
        %3988 = vmatprep.subr.mxu0 0.0
        %3989 = vmatpush1.msra.mxu0 %v3563
        %3990 = vmatprep.subr.mxu0 0.0
        %3991 = vmatpush1.msra.mxu0 %v3564
        %3992 = vmatprep.subr.mxu0 0.0
        %3993 = vmatpush1.msra.mxu0 %v3565
        %3994 = vmatprep.subr.mxu0 0.0
        %3995 = vmatpush1.msra.mxu0 %v3566
        %3996 = vmatprep.subr.mxu0 0.0
        %3997 = vmatpush1.msra.mxu0 %v3567
        %3998 = vmatprep.subr.mxu0 0.0
        %3999 = vmatpush1.msra.mxu0 %v3568
        %4000 = vmatprep.subr.mxu0 0.0
        %4001 = vmatpush1.msra.mxu0 %v3569
        %4002 = vmatprep.subr.mxu0 0.0
        %4003 = vmatpush1.msra.mxu0 %v3570
        %4004 = vmatprep.subr.mxu0 0.0
        %4005 = vmatpush1.msra.mxu0 %v3571
        %4006 = vmatprep.subr.mxu0 0.0
        %4007 = vmatpush1.msra.mxu0 %v3572
        %4008 = vmatprep.subr.mxu0 0.0
        %4009 = vmatpush1.msra.mxu0 %v3573
        %4010 = vmatprep.subr.mxu0 0.0
        %4011 = vmatpush1.msra.mxu0 %v3574
        %4012 = vmatprep.subr.mxu0 0.0
        %4013 = vmatpush1.msra.mxu0 %v3575
        %4014 = vmatprep.subr.mxu0 0.0
        %4015 = vmatpush1.msra.mxu0 %v3576
        %4016 = vmatprep.subr.mxu0 0.0
        %4017 = vmatpush1.msra.mxu0 %v3577
        %4018 = vmatprep.subr.mxu0 0.0
        %4019 = vmatpush1.msra.mxu0 %v3578
        %4020 = vmatprep.subr.mxu0 0.0
        %4021 = vmatpush1.msra.mxu0 %v3579
        %4022 = vmatprep.subr.mxu0 0.0
        %4023 = vmatpush1.msra.mxu0 %v3580
        %4024 = vmatprep.subr.mxu0 0.0
        %4025 = vmatpush1.msra.mxu0 %v3581
        %4026 = vmatprep.subr.mxu0 0.0
        %4027 = vmatpush1.msra.mxu0 %v3582
        %4028 = vmatprep.subr.mxu0 0.0
        %4029 = vmatpush1.msra.mxu0 %v3583
        %4030 = vmatprep.subr.mxu0 0.0
        %4031 = vmatpush1.msra.mxu0 %v3584
        %4032 = vmatprep.subr.mxu0 0.0
        %4033 = vmatpush1.msra.mxu0 %v3585
        %4034 = vmatprep.subr.mxu0 0.0
        %4035 = vmatpush1.msra.mxu0 %v3586
        %4036 = vmatprep.subr.mxu0 0.0
        %4037 = vmatpush1.msra.mxu0 %v3587
        %4038 = vmatprep.subr.mxu0 0.0
        %4039 = vmatpush1.msra.mxu0 %v3588
        %4040 = vmatprep.subr.mxu0 0.0
        %4041 = vmatpush1.msra.mxu0 %v3589
        %4042 = vmatprep.subr.mxu0 0.0
        %4043 = vmatpush1.msra.mxu0 %v3590
        %4044 = vmatprep.subr.mxu0 0.0
        %4045 = vmatpush1.msra.mxu0 %v3591
        %4046 = vmatprep.subr.mxu0 0.0
        %4047 = vmatpush1.msra.mxu0 %v3592
        %4048 = vmatprep.subr.mxu0 0.0
        %4049 = vmatpush1.msra.mxu0 %v3593
        %4050 = vmatprep.mubr.f32.mxu0 %v3686
        %4051 = vmatmul.mubr.f32.gmra.mrb[0].mxu0 %v3684
        %v4052 = vpop.f32.mrb[0].mxu0
        %v4053 = vadd.f32 %v3983, %v4052
        %v4054 = vpop.f32.mrb[0].mxu0
        %4055 = vdwg.mxu0
        %vm4056 = vcmp.ge.f32.partialorder %v4053, 0.0
        %v4057 = vmul.f32 %v4053, 0.01
        %v4058 = vsel %vm4056, %v4053, %v4057
        %v4059 = vld [vmem:[%s13] sm:$0xff]
        %v4060 = vld [vmem:[%s13 + $0x8] sm:$0x3]
        %v4061 = vld [vmem:[%s14] sm:$0xff]
        %v4062 = vld [vmem:[%s14 + $0x8] sm:$0xff]
        %v4063 = vld [vmem:[%s14 + $0x10] sm:$0xff]
        %v4064 = vld [vmem:[%s14 + $0x18] sm:$0xff]
        %v4065 = vld [vmem:[%s14 + $0x20] sm:$0xff]
        %v4066 = vld [vmem:[%s14 + $0x28] sm:$0xff]
        %v4067 = vld [vmem:[%s14 + $0x30] sm:$0xff]
        %v4068 = vld [vmem:[%s14 + $0x38] sm:$0xff]
        %v4069 = vld [vmem:[%s14 + $0x40] sm:$0xff]
        %v4070 = vld [vmem:[%s14 + $0x48] sm:$0xff]
        %v4071 = vld [vmem:[%s14 + $0x50] sm:$0xff]
        %v4072 = vld [vmem:[%s14 + $0x58] sm:$0xff]
        %v4073 = vld [vmem:[%s14 + $0x60] sm:$0xff]
        %v4074 = vld [vmem:[%s14 + $0x68] sm:$0xff]
        %v4075 = vld [vmem:[%s14 + $0x70] sm:$0xff]
        %v4076 = vld [vmem:[%s14 + $0x78] sm:$0xff]
        %v4077 = vld [vmem:[%s14 + $0x80] sm:$0xff]
        %v4078 = vld [vmem:[%s14 + $0x88] sm:$0xff]
        %v4079 = vld [vmem:[%s14 + $0x90] sm:$0xff]
        %v4080 = vld [vmem:[%s14 + $0x98] sm:$0xff]
        %v4081 = vld [vmem:[%s14 + $0xa0] sm:$0xff]
        %v4082 = vld [vmem:[%s14 + $0xa8] sm:$0xff]
        %v4083 = vld [vmem:[%s14 + $0xb0] sm:$0xff]
        %v4084 = vld [vmem:[%s14 + $0xb8] sm:$0xff]
        %v4085 = vld [vmem:[%s14 + $0xc0] sm:$0xff]
        %v4086 = vld [vmem:[%s14 + $0xc8] sm:$0xff]
        %v4087 = vld [vmem:[%s14 + $0xd0] sm:$0xff]
        %v4088 = vld [vmem:[%s14 + $0xd8] sm:$0xff]
        %v4089 = vld [vmem:[%s14 + $0xe0] sm:$0xff]
        %v4090 = vld [vmem:[%s14 + $0xe8] sm:$0xff]
        %v4091 = vld [vmem:[%s14 + $0xf0] sm:$0xff]
        %v4092 = vld [vmem:[%s14 + $0xf8] sm:$0xff]
        %v4093 = vld [vmem:[%s14 + $0x100] sm:$0xff]
        %v4094 = vld [vmem:[%s14 + $0x108] sm:$0xff]
        %v4095 = vld [vmem:[%s14 + $0x110] sm:$0xff]
        %v4096 = vld [vmem:[%s14 + $0x118] sm:$0xff]
        %v4097 = vld [vmem:[%s14 + $0x120] sm:$0xff]
        %v4098 = vld [vmem:[%s14 + $0x128] sm:$0xff]
        %v4099 = vld [vmem:[%s14 + $0x130] sm:$0xff]
        %v4100 = vld [vmem:[%s14 + $0x138] sm:$0xff]
        %v4101 = vld [vmem:[%s14 + $0x140] sm:$0xff]
        %v4102 = vld [vmem:[%s14 + $0x148] sm:$0xff]
        %v4103 = vld [vmem:[%s14 + $0x150] sm:$0xff]
        %v4104 = vld [vmem:[%s14 + $0x158] sm:$0xff]
        %v4105 = vld [vmem:[%s14 + $0x160] sm:$0xff]
        %v4106 = vld [vmem:[%s14 + $0x168] sm:$0xff]
        %v4107 = vld [vmem:[%s14 + $0x170] sm:$0xff]
        %v4108 = vld [vmem:[%s14 + $0x178] sm:$0xff]
        %v4109 = vld [vmem:[%s14 + $0x180] sm:$0xff]
        %v4110 = vld [vmem:[%s14 + $0x188] sm:$0xff]
        %v4111 = vld [vmem:[%s14 + $0x190] sm:$0xff]
        %v4112 = vld [vmem:[%s14 + $0x198] sm:$0xff]
        %v4113 = vld [vmem:[%s14 + $0x1a0] sm:$0xff]
        %v4114 = vld [vmem:[%s14 + $0x1a8] sm:$0xff]
        %v4115 = vld [vmem:[%s14 + $0x1b0] sm:$0xff]
        %v4116 = vld [vmem:[%s14 + $0x1b8] sm:$0xff]
        %v4117 = vld [vmem:[%s14 + $0x1c0] sm:$0xff]
        %v4118 = vld [vmem:[%s14 + $0x1c8] sm:$0xff]
        %v4119 = vld [vmem:[%s14 + $0x1d0] sm:$0xff]
        %v4120 = vld [vmem:[%s14 + $0x1d8] sm:$0xff]
        %v4121 = vld [vmem:[%s14 + $0x1e0] sm:$0xff]
        %v4122 = vld [vmem:[%s14 + $0x1e8] sm:$0xff]
        %v4123 = vld [vmem:[%s14 + $0x1f0] sm:$0xff]
        %v4124 = vld [vmem:[%s14 + $0x1f8] sm:$0xff]
        %v4125 = vld [vmem:[%s14 + $0x200] sm:$0xff]
        %v4126 = vld [vmem:[%s14 + $0x208] sm:$0xff]
        %v4127 = vld [vmem:[%s14 + $0x210] sm:$0xff]
        %v4128 = vld [vmem:[%s14 + $0x218] sm:$0xff]
        %v4129 = vld [vmem:[%s14 + $0x220] sm:$0xff]
        %v4130 = vld [vmem:[%s14 + $0x228] sm:$0xff]
        %v4131 = vld [vmem:[%s14 + $0x230] sm:$0xff]
        %v4132 = vld [vmem:[%s14 + $0x238] sm:$0xff]
        %v4133 = vld [vmem:[%s14 + $0x240] sm:$0xff]
        %v4134 = vld [vmem:[%s14 + $0x248] sm:$0xff]
        %v4135 = vld [vmem:[%s14 + $0x250] sm:$0xff]
        %v4136 = vld [vmem:[%s14 + $0x258] sm:$0xff]
        %v4137 = vld [vmem:[%s14 + $0x260] sm:$0xff]
        %v4138 = vld [vmem:[%s14 + $0x268] sm:$0xff]
        %v4139 = vld [vmem:[%s14 + $0x270] sm:$0xff]
        %v4140 = vld [vmem:[%s14 + $0x278] sm:$0xff]
        %v4141 = vld [vmem:[%s15] sm:$0x1]
        %vm4142 = vcmask 31744
        %v4144 = vsel %vm4142, %v4059, 0
        %v4147 = vsel %vm4142, %v4060, 0
        %vm4149 = vcmask 1043456
        %v4151 = vsel %vm4149, %v4058, 0
        %4153 = vmatprep.subr.mxu0 0.0
        %4154 = vmatpush1.msra.mxu0 %v4151
        %4155 = vmatprep.subr.mxu0 0.0
        %4156 = vmatpush1.msra.mxu0 0.0
        %4157 = vmatprep.subr.mxu0 0.0
        %4158 = vmatpush1.msra.mxu0 0.0
        %4159 = vmatprep.subr.mxu0 0.0
        %4160 = vmatpush1.msra.mxu0 0.0
        %4161 = vmatprep.subr.mxu0 0.0
        %4162 = vmatpush1.msra.mxu0 0.0
        %4163 = vmatprep.subr.mxu0 0.0
        %4164 = vmatpush1.msra.mxu0 0.0
        %4165 = vmatprep.subr.mxu0 0.0
        %4166 = vmatpush1.msra.mxu0 0.0
        %4167 = vmatprep.subr.mxu0 0.0
        %4168 = vmatpush1.msra.mxu0 0.0
        %4169 = vmatprep.subr.mxu0 0.0
        %4170 = vmatpush1.msra.mxu0 0.0
        %4171 = vmatprep.subr.mxu0 0.0
        %4172 = vmatpush1.msra.mxu0 0.0
        %4173 = vmatprep.subr.mxu0 0.0
        %4174 = vmatpush1.msra.mxu0 0.0
        %4175 = vmatprep.subr.mxu0 0.0
        %4176 = vmatpush1.msra.mxu0 0.0
        %4177 = vmatprep.subr.mxu0 0.0
        %4178 = vmatpush1.msra.mxu0 0.0
        %4179 = vmatprep.subr.mxu0 0.0
        %4180 = vmatpush1.msra.mxu0 0.0
        %4181 = vmatprep.subr.mxu0 0.0
        %4182 = vmatpush1.msra.mxu0 0.0
        %4183 = vmatprep.subr.mxu0 0.0
        %4184 = vmatpush1.msra.mxu0 0.0
        %4185 = vmatprep.subr.mxu0 0.0
        %4186 = vmatpush1.msra.mxu0 0.0
        %4187 = vmatprep.subr.mxu0 0.0
        %4188 = vmatpush1.msra.mxu0 0.0
        %4189 = vmatprep.subr.mxu0 0.0
        %4190 = vmatpush1.msra.mxu0 0.0
        %4191 = vmatprep.subr.mxu0 0.0
        %4192 = vmatpush1.msra.mxu0 0.0
        %4193 = vmatprep.subr.mxu0 0.0
        %4194 = vmatpush1.msra.mxu0 0.0
        %4195 = vmatprep.subr.mxu0 0.0
        %4196 = vmatpush1.msra.mxu0 0.0
        %4197 = vmatprep.subr.mxu0 0.0
        %4198 = vmatpush1.msra.mxu0 0.0
        %4199 = vmatprep.subr.mxu0 0.0
        %4200 = vmatpush1.msra.mxu0 0.0
        %4201 = vmatprep.subr.mxu0 0.0
        %4202 = vmatpush1.msra.mxu0 0.0
        %4203 = vmatprep.subr.mxu0 0.0
        %4204 = vmatpush1.msra.mxu0 0.0
        %4205 = vmatprep.subr.mxu0 0.0
        %4206 = vmatpush1.msra.mxu0 0.0
        %4207 = vmatprep.subr.mxu0 0.0
        %4208 = vmatpush1.msra.mxu0 0.0
        %4209 = vmatprep.subr.mxu0 0.0
        %4210 = vmatpush1.msra.mxu0 0.0
        %4211 = vmatprep.subr.mxu0 0.0
        %4212 = vmatpush1.msra.mxu0 0.0
        %4213 = vmatprep.subr.mxu0 0.0
        %4214 = vmatpush1.msra.mxu0 0.0
        %4215 = vmatprep.subr.mxu0 0.0
        %4216 = vmatpush1.msra.mxu0 0.0
        %4217 = vmatprep.mubr.f32.mxu0 0.0
        %4218 = vmatmul.mubr.f32.gmra.mrb[0].mxu0 %v4144
        %v4219 = vpop.f32.mrb[0].mxu0
        %v4220 = vadd.f32 0.0, %v4219
        %v4221 = vpop.f32.mrb[0].mxu0
        %4222 = vmatprep.mubr.f32.mxu0 0.0
        %4223 = vmatmul.mubr.f32.gmra.mrb[0].mxu0 %v4147
        %v4224 = vpop.f32.mrb[0].mxu0
        %v4225 = vadd.f32 0.0, %v4224
        %v4226 = vpop.f32.mrb[0].mxu0
        %4227 = vdwg.mxu0
        %v4229 = vrot.slane %v4220, 2
        %v4231 = vrot.slane %v4220, 4
        %v4233 = vrot.slane %v4220, 6
        %v4236 = vlaneseq
        %v4237 = vshrl.u32 %v4236, 7
        %v4238 = vsub.s32 0, %v4237
        %v4239 = vrot.slane %v4141, %v4238
        %4241 = vmatprep.subr.mxu0 0.0
        %4242 = vmatpush1.msra.mxu0 %v4061
        %4243 = vmatprep.subr.mxu0 0.0
        %4244 = vmatpush1.msra.mxu0 %v4062
        %4245 = vmatprep.subr.mxu0 0.0
        %4246 = vmatpush1.msra.mxu0 %v4063
        %4247 = vmatprep.subr.mxu0 0.0
        %4248 = vmatpush1.msra.mxu0 %v4064
        %4249 = vmatprep.subr.mxu0 0.0
        %4250 = vmatpush1.msra.mxu0 %v4065
        %4251 = vmatprep.subr.mxu0 0.0
        %4252 = vmatpush1.msra.mxu0 %v4066
        %4253 = vmatprep.subr.mxu0 0.0
        %4254 = vmatpush1.msra.mxu0 %v4067
        %4255 = vmatprep.subr.mxu0 0.0
        %4256 = vmatpush1.msra.mxu0 %v4068
        %4257 = vmatprep.subr.mxu0 0.0
        %4258 = vmatpush1.msra.mxu0 %v4069
        %4259 = vmatprep.subr.mxu0 0.0
        %4260 = vmatpush1.msra.mxu0 %v4070
        %4261 = vmatprep.subr.mxu0 0.0
        %4262 = vmatpush1.msra.mxu0 %v4071
        %4263 = vmatprep.subr.mxu0 0.0
        %4264 = vmatpush1.msra.mxu0 %v4072
        %4265 = vmatprep.subr.mxu0 0.0
        %4266 = vmatpush1.msra.mxu0 %v4073
        %4267 = vmatprep.subr.mxu0 0.0
        %4268 = vmatpush1.msra.mxu0 %v4074
        %4269 = vmatprep.subr.mxu0 0.0
        %4270 = vmatpush1.msra.mxu0 %v4075
        %4271 = vmatprep.subr.mxu0 0.0
        %4272 = vmatpush1.msra.mxu0 %v4076
        %4273 = vmatprep.subr.mxu0 0.0
        %4274 = vmatpush1.msra.mxu0 %v4077
        %4275 = vmatprep.subr.mxu0 0.0
        %4276 = vmatpush1.msra.mxu0 %v4078
        %4277 = vmatprep.subr.mxu0 0.0
        %4278 = vmatpush1.msra.mxu0 %v4079
        %4279 = vmatprep.subr.mxu0 0.0
        %4280 = vmatpush1.msra.mxu0 %v4080
        %4281 = vmatprep.subr.mxu0 0.0
        %4282 = vmatpush1.msra.mxu0 %v4081
        %4283 = vmatprep.subr.mxu0 0.0
        %4284 = vmatpush1.msra.mxu0 %v4082
        %4285 = vmatprep.subr.mxu0 0.0
        %4286 = vmatpush1.msra.mxu0 %v4083
        %4287 = vmatprep.subr.mxu0 0.0
        %4288 = vmatpush1.msra.mxu0 %v4084
        %4289 = vmatprep.subr.mxu0 0.0
        %4290 = vmatpush1.msra.mxu0 %v4085
        %4291 = vmatprep.subr.mxu0 0.0
        %4292 = vmatpush1.msra.mxu0 %v4086
        %4293 = vmatprep.subr.mxu0 0.0
        %4294 = vmatpush1.msra.mxu0 %v4087
        %4295 = vmatprep.subr.mxu0 0.0
        %4296 = vmatpush1.msra.mxu0 %v4088
        %4297 = vmatprep.subr.mxu0 0.0
        %4298 = vmatpush1.msra.mxu0 %v4089
        %4299 = vmatprep.subr.mxu0 0.0
        %4300 = vmatpush1.msra.mxu0 %v4090
        %4301 = vmatprep.subr.mxu0 0.0
        %4302 = vmatpush1.msra.mxu0 %v4091
        %4303 = vmatprep.subr.mxu0 0.0
        %4304 = vmatpush1.msra.mxu0 %v4092
        %4305 = vmatprep.mubr.f32.mxu0 %v4229
        %4306 = vmatmul.mubr.f32.gmra.mrb[0].mxu0 %v4220
        %v4307 = vpop.f32.mrb[0].mxu0
        %v4308 = vadd.f32 %v4239, %v4307
        %v4309 = vpop.f32.mrb[0].mxu0
        %4310 = vdwg.mxu0
        %4311 = vmatprep.subr.mxu0 0.0
        %4312 = vmatpush1.msra.mxu0 %v4093
        %4313 = vmatprep.subr.mxu0 0.0
        %4314 = vmatpush1.msra.mxu0 %v4094
        %4315 = vmatprep.subr.mxu0 0.0
        %4316 = vmatpush1.msra.mxu0 %v4095
        %4317 = vmatprep.subr.mxu0 0.0
        %4318 = vmatpush1.msra.mxu0 %v4096
        %4319 = vmatprep.subr.mxu0 0.0
        %4320 = vmatpush1.msra.mxu0 %v4097
        %4321 = vmatprep.subr.mxu0 0.0
        %4322 = vmatpush1.msra.mxu0 %v4098
        %4323 = vmatprep.subr.mxu0 0.0
        %4324 = vmatpush1.msra.mxu0 %v4099
        %4325 = vmatprep.subr.mxu0 0.0
        %4326 = vmatpush1.msra.mxu0 %v4100
        %4327 = vmatprep.subr.mxu0 0.0
        %4328 = vmatpush1.msra.mxu0 %v4101
        %4329 = vmatprep.subr.mxu0 0.0
        %4330 = vmatpush1.msra.mxu0 %v4102
        %4331 = vmatprep.subr.mxu0 0.0
        %4332 = vmatpush1.msra.mxu0 %v4103
        %4333 = vmatprep.subr.mxu0 0.0
        %4334 = vmatpush1.msra.mxu0 %v4104
        %4335 = vmatprep.subr.mxu0 0.0
        %4336 = vmatpush1.msra.mxu0 %v4105
        %4337 = vmatprep.subr.mxu0 0.0
        %4338 = vmatpush1.msra.mxu0 %v4106
        %4339 = vmatprep.subr.mxu0 0.0
        %4340 = vmatpush1.msra.mxu0 %v4107
        %4341 = vmatprep.subr.mxu0 0.0
        %4342 = vmatpush1.msra.mxu0 %v4108
        %4343 = vmatprep.subr.mxu0 0.0
        %4344 = vmatpush1.msra.mxu0 %v4109
        %4345 = vmatprep.subr.mxu0 0.0
        %4346 = vmatpush1.msra.mxu0 %v4110
        %4347 = vmatprep.subr.mxu0 0.0
        %4348 = vmatpush1.msra.mxu0 %v4111
        %4349 = vmatprep.subr.mxu0 0.0
        %4350 = vmatpush1.msra.mxu0 %v4112
        %4351 = vmatprep.subr.mxu0 0.0
        %4352 = vmatpush1.msra.mxu0 %v4113
        %4353 = vmatprep.subr.mxu0 0.0
        %4354 = vmatpush1.msra.mxu0 %v4114
        %4355 = vmatprep.subr.mxu0 0.0
        %4356 = vmatpush1.msra.mxu0 %v4115
        %4357 = vmatprep.subr.mxu0 0.0
        %4358 = vmatpush1.msra.mxu0 %v4116
        %4359 = vmatprep.subr.mxu0 0.0
        %4360 = vmatpush1.msra.mxu0 %v4117
        %4361 = vmatprep.subr.mxu0 0.0
        %4362 = vmatpush1.msra.mxu0 %v4118
        %4363 = vmatprep.subr.mxu0 0.0
        %4364 = vmatpush1.msra.mxu0 %v4119
        %4365 = vmatprep.subr.mxu0 0.0
        %4366 = vmatpush1.msra.mxu0 %v4120
        %4367 = vmatprep.subr.mxu0 0.0
        %4368 = vmatpush1.msra.mxu0 %v4121
        %4369 = vmatprep.subr.mxu0 0.0
        %4370 = vmatpush1.msra.mxu0 %v4122
        %4371 = vmatprep.subr.mxu0 0.0
        %4372 = vmatpush1.msra.mxu0 %v4123
        %4373 = vmatprep.subr.mxu0 0.0
        %4374 = vmatpush1.msra.mxu0 %v4124
        %4375 = vmatprep.mubr.f32.mxu0 %v4233
        %4376 = vmatmul.mubr.f32.gmra.mrb[0].mxu0 %v4231
        %v4377 = vpop.f32.mrb[0].mxu0
        %v4378 = vadd.f32 %v4308, %v4377
        %v4379 = vpop.f32.mrb[0].mxu0
        %4380 = vdwg.mxu0
        %4381 = vmatprep.subr.mxu0 0.0
        %4382 = vmatpush1.msra.mxu0 %v4125
        %4383 = vmatprep.subr.mxu0 0.0
        %4384 = vmatpush1.msra.mxu0 %v4126
        %4385 = vmatprep.subr.mxu0 0.0
        %4386 = vmatpush1.msra.mxu0 %v4127
        %4387 = vmatprep.subr.mxu0 0.0
        %4388 = vmatpush1.msra.mxu0 %v4128
        %4389 = vmatprep.subr.mxu0 0.0
        %4390 = vmatpush1.msra.mxu0 %v4129
        %4391 = vmatprep.subr.mxu0 0.0
        %4392 = vmatpush1.msra.mxu0 %v4130
        %4393 = vmatprep.subr.mxu0 0.0
        %4394 = vmatpush1.msra.mxu0 %v4131
        %4395 = vmatprep.subr.mxu0 0.0
        %4396 = vmatpush1.msra.mxu0 %v4132
        %4397 = vmatprep.subr.mxu0 0.0
        %4398 = vmatpush1.msra.mxu0 %v4133
        %4399 = vmatprep.subr.mxu0 0.0
        %4400 = vmatpush1.msra.mxu0 %v4134
        %4401 = vmatprep.subr.mxu0 0.0
        %4402 = vmatpush1.msra.mxu0 %v4135
        %4403 = vmatprep.subr.mxu0 0.0
        %4404 = vmatpush1.msra.mxu0 %v4136
        %4405 = vmatprep.subr.mxu0 0.0
        %4406 = vmatpush1.msra.mxu0 %v4137
        %4407 = vmatprep.subr.mxu0 0.0
        %4408 = vmatpush1.msra.mxu0 %v4138
        %4409 = vmatprep.subr.mxu0 0.0
        %4410 = vmatpush1.msra.mxu0 %v4139
        %4411 = vmatprep.subr.mxu0 0.0
        %4412 = vmatpush1.msra.mxu0 %v4140
        %4413 = vmatprep.subr.mxu0 0.0
        %4414 = vmatpush1.msra.mxu0 0.0
        %4415 = vmatprep.subr.mxu0 0.0
        %4416 = vmatpush1.msra.mxu0 0.0
        %4417 = vmatprep.subr.mxu0 0.0
        %4418 = vmatpush1.msra.mxu0 0.0
        %4419 = vmatprep.subr.mxu0 0.0
        %4420 = vmatpush1.msra.mxu0 0.0
        %4421 = vmatprep.subr.mxu0 0.0
        %4422 = vmatpush1.msra.mxu0 0.0
        %4423 = vmatprep.subr.mxu0 0.0
        %4424 = vmatpush1.msra.mxu0 0.0
        %4425 = vmatprep.subr.mxu0 0.0
        %4426 = vmatpush1.msra.mxu0 0.0
        %4427 = vmatprep.subr.mxu0 0.0
        %4428 = vmatpush1.msra.mxu0 0.0
        %4429 = vmatprep.subr.mxu0 0.0
        %4430 = vmatpush1.msra.mxu0 0.0
        %4431 = vmatprep.subr.mxu0 0.0
        %4432 = vmatpush1.msra.mxu0 0.0
        %4433 = vmatprep.subr.mxu0 0.0
        %4434 = vmatpush1.msra.mxu0 0.0
        %4435 = vmatprep.subr.mxu0 0.0
        %4436 = vmatpush1.msra.mxu0 0.0
        %4437 = vmatprep.subr.mxu0 0.0
        %4438 = vmatpush1.msra.mxu0 0.0
        %4439 = vmatprep.subr.mxu0 0.0
        %4440 = vmatpush1.msra.mxu0 0.0
        %4441 = vmatprep.subr.mxu0 0.0
        %4442 = vmatpush1.msra.mxu0 0.0
        %4443 = vmatprep.subr.mxu0 0.0
        %4444 = vmatpush1.msra.mxu0 0.0
        %4445 = vmatprep.mubr.f32.mxu0 0.0
        %4446 = vmatmul.mubr.f32.gmra.mrb[0].mxu0 %v4225
        %v4447 = vpop.f32.mrb[0].mxu0
        %v4448 = vadd.f32 %v4378, %v4447
        %v4449 = vpop.f32.mrb[0].mxu0
        %4450 = vdwg.mxu0
        %vm4451 = vcmp.ge.f32.partialorder %v4448, 0.0
        %v4452 = vmul.f32 %v4448, 0.01
        %v4453 = vsel %vm4451, %v4448, %v4452
        %v4454 = vld [vmem:[%s16] sm:$0x1f]
        %v4455 = vld [vmem:[%s17] sm:$0xff]
        %v4456 = vld [vmem:[%s17 + $0x8] sm:$0xff]
        %v4457 = vld [vmem:[%s17 + $0x10] sm:$0xff]
        %v4458 = vld [vmem:[%s17 + $0x18] sm:$0xff]
        %v4459 = vld [vmem:[%s17 + $0x20] sm:$0xff]
        %v4460 = vld [vmem:[%s17 + $0x28] sm:$0xff]
        %v4461 = vld [vmem:[%s17 + $0x30] sm:$0xff]
        %v4462 = vld [vmem:[%s17 + $0x38] sm:$0xff]
        %v4463 = vld [vmem:[%s17 + $0x40] sm:$0xff]
        %v4464 = vld [vmem:[%s17 + $0x48] sm:$0xff]
        %v4465 = vld [vmem:[%s17 + $0x50] sm:$0xff]
        %v4466 = vld [vmem:[%s17 + $0x58] sm:$0xff]
        %v4467 = vld [vmem:[%s17 + $0x60] sm:$0xff]
        %v4468 = vld [vmem:[%s17 + $0x68] sm:$0xff]
        %v4469 = vld [vmem:[%s17 + $0x70] sm:$0xff]
        %v4470 = vld [vmem:[%s17 + $0x78] sm:$0xff]
        %v4471 = vld [vmem:[%s17 + $0x80] sm:$0xff]
        %v4472 = vld [vmem:[%s17 + $0x88] sm:$0xff]
        %v4473 = vld [vmem:[%s17 + $0x90] sm:$0xff]
        %v4474 = vld [vmem:[%s17 + $0x98] sm:$0xff]
        %v4475 = vld [vmem:[%s17 + $0xa0] sm:$0xff]
        %v4476 = vld [vmem:[%s17 + $0xa8] sm:$0xff]
        %v4477 = vld [vmem:[%s17 + $0xb0] sm:$0xff]
        %v4478 = vld [vmem:[%s17 + $0xb8] sm:$0xff]
        %v4479 = vld [vmem:[%s17 + $0xc0] sm:$0xff]
        %v4480 = vld [vmem:[%s17 + $0xc8] sm:$0xff]
        %v4481 = vld [vmem:[%s17 + $0xd0] sm:$0xff]
        %v4482 = vld [vmem:[%s17 + $0xd8] sm:$0xff]
        %v4483 = vld [vmem:[%s17 + $0xe0] sm:$0xff]
        %v4484 = vld [vmem:[%s17 + $0xe8] sm:$0xff]
        %v4485 = vld [vmem:[%s17 + $0xf0] sm:$0xff]
        %v4486 = vld [vmem:[%s17 + $0xf8] sm:$0xff]
        %v4487 = vld [vmem:[%s17 + $0x100] sm:$0xff]
        %v4488 = vld [vmem:[%s17 + $0x108] sm:$0xff]
        %v4489 = vld [vmem:[%s17 + $0x110] sm:$0xff]
        %v4490 = vld [vmem:[%s17 + $0x118] sm:$0xff]
        %v4491 = vld [vmem:[%s17 + $0x120] sm:$0xff]
        %v4492 = vld [vmem:[%s17 + $0x128] sm:$0xff]
        %v4493 = vld [vmem:[%s17 + $0x130] sm:$0xff]
        %v4494 = vld [vmem:[%s17 + $0x138] sm:$0xff]
        %v4495 = vld [vmem:[%s18] sm:$0x1]
        %vm4496 = vcmask 15360
        %v4498 = vsel %vm4496, %v4454, 0
        %vm4500 = vcmask 1041408
        %v4502 = vsel %vm4500, %v4453, 0
        %4504 = vmatprep.subr.mxu0 0.0
        %4505 = vmatpush1.msra.mxu0 %v4502
        %4506 = vmatprep.subr.mxu0 0.0
        %4507 = vmatpush1.msra.mxu0 0.0
        %4508 = vmatprep.subr.mxu0 0.0
        %4509 = vmatpush1.msra.mxu0 0.0
        %4510 = vmatprep.subr.mxu0 0.0
        %4511 = vmatpush1.msra.mxu0 0.0
        %4512 = vmatprep.subr.mxu0 0.0
        %4513 = vmatpush1.msra.mxu0 0.0
        %4514 = vmatprep.subr.mxu0 0.0
        %4515 = vmatpush1.msra.mxu0 0.0
        %4516 = vmatprep.subr.mxu0 0.0
        %4517 = vmatpush1.msra.mxu0 0.0
        %4518 = vmatprep.subr.mxu0 0.0
        %4519 = vmatpush1.msra.mxu0 0.0
        %4520 = vmatprep.subr.mxu0 0.0
        %4521 = vmatpush1.msra.mxu0 0.0
        %4522 = vmatprep.subr.mxu0 0.0
        %4523 = vmatpush1.msra.mxu0 0.0
        %4524 = vmatprep.subr.mxu0 0.0
        %4525 = vmatpush1.msra.mxu0 0.0
        %4526 = vmatprep.subr.mxu0 0.0
        %4527 = vmatpush1.msra.mxu0 0.0
        %4528 = vmatprep.subr.mxu0 0.0
        %4529 = vmatpush1.msra.mxu0 0.0
        %4530 = vmatprep.subr.mxu0 0.0
        %4531 = vmatpush1.msra.mxu0 0.0
        %4532 = vmatprep.subr.mxu0 0.0
        %4533 = vmatpush1.msra.mxu0 0.0
        %4534 = vmatprep.subr.mxu0 0.0
        %4535 = vmatpush1.msra.mxu0 0.0
        %4536 = vmatprep.subr.mxu0 0.0
        %4537 = vmatpush1.msra.mxu0 0.0
        %4538 = vmatprep.subr.mxu0 0.0
        %4539 = vmatpush1.msra.mxu0 0.0
        %4540 = vmatprep.subr.mxu0 0.0
        %4541 = vmatpush1.msra.mxu0 0.0
        %4542 = vmatprep.subr.mxu0 0.0
        %4543 = vmatpush1.msra.mxu0 0.0
        %4544 = vmatprep.subr.mxu0 0.0
        %4545 = vmatpush1.msra.mxu0 0.0
        %4546 = vmatprep.subr.mxu0 0.0
        %4547 = vmatpush1.msra.mxu0 0.0
        %4548 = vmatprep.subr.mxu0 0.0
        %4549 = vmatpush1.msra.mxu0 0.0
        %4550 = vmatprep.subr.mxu0 0.0
        %4551 = vmatpush1.msra.mxu0 0.0
        %4552 = vmatprep.subr.mxu0 0.0
        %4553 = vmatpush1.msra.mxu0 0.0
        %4554 = vmatprep.subr.mxu0 0.0
        %4555 = vmatpush1.msra.mxu0 0.0
        %4556 = vmatprep.subr.mxu0 0.0
        %4557 = vmatpush1.msra.mxu0 0.0
        %4558 = vmatprep.subr.mxu0 0.0
        %4559 = vmatpush1.msra.mxu0 0.0
        %4560 = vmatprep.subr.mxu0 0.0
        %4561 = vmatpush1.msra.mxu0 0.0
        %4562 = vmatprep.subr.mxu0 0.0
        %4563 = vmatpush1.msra.mxu0 0.0
        %4564 = vmatprep.subr.mxu0 0.0
        %4565 = vmatpush1.msra.mxu0 0.0
        %4566 = vmatprep.subr.mxu0 0.0
        %4567 = vmatpush1.msra.mxu0 0.0
        %4568 = vmatprep.mubr.f32.mxu0 0.0
        %4569 = vmatmul.mubr.f32.gmra.mrb[0].mxu0 %v4498
        %v4570 = vpop.f32.mrb[0].mxu0
        %v4571 = vadd.f32 0.0, %v4570
        %v4572 = vpop.f32.mrb[0].mxu0
        %4573 = vdwg.mxu0
        %v4575 = vrot.slane %v4571, 1
        %4576 = vrot.lane.b32.xlu0 %v4575, 64
        %v4577 = vpop.permute.xlu0 %4576
        %v4579 = vrot.slane %v4571, 2
        %v4581 = vrot.slane %v4571, 3
        %4582 = vrot.lane.b32.xlu0 %v4581, 64
        %v4583 = vpop.permute.xlu0 %4582
        %v4585 = vrot.slane %v4571, 4
        %v4586 = vsel %vm1001, %v4571, %v4577
        %v4587 = vsel %vm1001, %v4579, %v4583
        %v4588 = vsel %vm1001, %v4585, 0
        %4590 = vmatprep.subr.mxu0 0.0
        %4591 = vmatpush1.msra.mxu0 %v4455
        %4592 = vmatprep.subr.mxu0 0.0
        %4593 = vmatpush1.msra.mxu0 %v4456
        %4594 = vmatprep.subr.mxu0 0.0
        %4595 = vmatpush1.msra.mxu0 %v4457
        %4596 = vmatprep.subr.mxu0 0.0
        %4597 = vmatpush1.msra.mxu0 %v4458
        %4598 = vmatprep.subr.mxu0 0.0
        %4599 = vmatpush1.msra.mxu0 %v4459
        %4600 = vmatprep.subr.mxu0 0.0
        %4601 = vmatpush1.msra.mxu0 %v4460
        %4602 = vmatprep.subr.mxu0 0.0
        %4603 = vmatpush1.msra.mxu0 %v4461
        %4604 = vmatprep.subr.mxu0 0.0
        %4605 = vmatpush1.msra.mxu0 %v4462
        %4606 = vmatprep.subr.mxu0 0.0
        %4607 = vmatpush1.msra.mxu0 %v4463
        %4608 = vmatprep.subr.mxu0 0.0
        %4609 = vmatpush1.msra.mxu0 %v4464
        %4610 = vmatprep.subr.mxu0 0.0
        %4611 = vmatpush1.msra.mxu0 %v4465
        %4612 = vmatprep.subr.mxu0 0.0
        %4613 = vmatpush1.msra.mxu0 %v4466
        %4614 = vmatprep.subr.mxu0 0.0
        %4615 = vmatpush1.msra.mxu0 %v4467
        %4616 = vmatprep.subr.mxu0 0.0
        %4617 = vmatpush1.msra.mxu0 %v4468
        %4618 = vmatprep.subr.mxu0 0.0
        %4619 = vmatpush1.msra.mxu0 %v4469
        %4620 = vmatprep.subr.mxu0 0.0
        %4621 = vmatpush1.msra.mxu0 %v4470
        %4622 = vmatprep.subr.mxu0 0.0
        %4623 = vmatpush1.msra.mxu0 %v4471
        %4624 = vmatprep.subr.mxu0 0.0
        %4625 = vmatpush1.msra.mxu0 %v4472
        %4626 = vmatprep.subr.mxu0 0.0
        %4627 = vmatpush1.msra.mxu0 %v4473
        %4628 = vmatprep.subr.mxu0 0.0
        %4629 = vmatpush1.msra.mxu0 %v4474
        %4630 = vmatprep.subr.mxu0 0.0
        %4631 = vmatpush1.msra.mxu0 %v4475
        %4632 = vmatprep.subr.mxu0 0.0
        %4633 = vmatpush1.msra.mxu0 %v4476
        %4634 = vmatprep.subr.mxu0 0.0
        %4635 = vmatpush1.msra.mxu0 %v4477
        %4636 = vmatprep.subr.mxu0 0.0
        %4637 = vmatpush1.msra.mxu0 %v4478
        %4638 = vmatprep.subr.mxu0 0.0
        %4639 = vmatpush1.msra.mxu0 %v4479
        %4640 = vmatprep.subr.mxu0 0.0
        %4641 = vmatpush1.msra.mxu0 %v4480
        %4642 = vmatprep.subr.mxu0 0.0
        %4643 = vmatpush1.msra.mxu0 %v4481
        %4644 = vmatprep.subr.mxu0 0.0
        %4645 = vmatpush1.msra.mxu0 %v4482
        %4646 = vmatprep.subr.mxu0 0.0
        %4647 = vmatpush1.msra.mxu0 %v4483
        %4648 = vmatprep.subr.mxu0 0.0
        %4649 = vmatpush1.msra.mxu0 %v4484
        %4650 = vmatprep.subr.mxu0 0.0
        %4651 = vmatpush1.msra.mxu0 %v4485
        %4652 = vmatprep.subr.mxu0 0.0
        %4653 = vmatpush1.msra.mxu0 %v4486
        %4654 = vmatprep.mubr.f32.mxu0 %v4587
        %4655 = vmatmul.mubr.f32.gmra.mrb[0].mxu0 %v4586
        %v4656 = vpop.f32.mrb[0].mxu0
        %v4657 = vadd.f32 %v4495, %v4656
        %v4658 = vpop.f32.mrb[0].mxu0
        %4659 = vdwg.mxu0
        %4660 = vmatprep.subr.mxu0 0.0
        %4661 = vmatpush1.msra.mxu0 %v4487
        %4662 = vmatprep.subr.mxu0 0.0
        %4663 = vmatpush1.msra.mxu0 %v4488
        %4664 = vmatprep.subr.mxu0 0.0
        %4665 = vmatpush1.msra.mxu0 %v4489
        %4666 = vmatprep.subr.mxu0 0.0
        %4667 = vmatpush1.msra.mxu0 %v4490
        %4668 = vmatprep.subr.mxu0 0.0
        %4669 = vmatpush1.msra.mxu0 %v4491
        %4670 = vmatprep.subr.mxu0 0.0
        %4671 = vmatpush1.msra.mxu0 %v4492
        %4672 = vmatprep.subr.mxu0 0.0
        %4673 = vmatpush1.msra.mxu0 %v4493
        %4674 = vmatprep.subr.mxu0 0.0
        %4675 = vmatpush1.msra.mxu0 %v4494
        %4676 = vmatprep.subr.mxu0 0.0
        %4677 = vmatpush1.msra.mxu0 0.0
        %4678 = vmatprep.subr.mxu0 0.0
        %4679 = vmatpush1.msra.mxu0 0.0
        %4680 = vmatprep.subr.mxu0 0.0
        %4681 = vmatpush1.msra.mxu0 0.0
        %4682 = vmatprep.subr.mxu0 0.0
        %4683 = vmatpush1.msra.mxu0 0.0
        %4684 = vmatprep.subr.mxu0 0.0
        %4685 = vmatpush1.msra.mxu0 0.0
        %4686 = vmatprep.subr.mxu0 0.0
        %4687 = vmatpush1.msra.mxu0 0.0
        %4688 = vmatprep.subr.mxu0 0.0
        %4689 = vmatpush1.msra.mxu0 0.0
        %4690 = vmatprep.subr.mxu0 0.0
        %4691 = vmatpush1.msra.mxu0 0.0
        %4692 = vmatprep.subr.mxu0 0.0
        %4693 = vmatpush1.msra.mxu0 0.0
        %4694 = vmatprep.subr.mxu0 0.0
        %4695 = vmatpush1.msra.mxu0 0.0
        %4696 = vmatprep.subr.mxu0 0.0
        %4697 = vmatpush1.msra.mxu0 0.0
        %4698 = vmatprep.subr.mxu0 0.0
        %4699 = vmatpush1.msra.mxu0 0.0
        %4700 = vmatprep.subr.mxu0 0.0
        %4701 = vmatpush1.msra.mxu0 0.0
        %4702 = vmatprep.subr.mxu0 0.0
        %4703 = vmatpush1.msra.mxu0 0.0
        %4704 = vmatprep.subr.mxu0 0.0
        %4705 = vmatpush1.msra.mxu0 0.0
        %4706 = vmatprep.subr.mxu0 0.0
        %4707 = vmatpush1.msra.mxu0 0.0
        %4708 = vmatprep.subr.mxu0 0.0
        %4709 = vmatpush1.msra.mxu0 0.0
        %4710 = vmatprep.subr.mxu0 0.0
        %4711 = vmatpush1.msra.mxu0 0.0
        %4712 = vmatprep.subr.mxu0 0.0
        %4713 = vmatpush1.msra.mxu0 0.0
        %4714 = vmatprep.subr.mxu0 0.0
        %4715 = vmatpush1.msra.mxu0 0.0
        %4716 = vmatprep.subr.mxu0 0.0
        %4717 = vmatpush1.msra.mxu0 0.0
        %4718 = vmatprep.subr.mxu0 0.0
        %4719 = vmatpush1.msra.mxu0 0.0
        %4720 = vmatprep.subr.mxu0 0.0
        %4721 = vmatpush1.msra.mxu0 0.0
        %4722 = vmatprep.subr.mxu0 0.0
        %4723 = vmatpush1.msra.mxu0 0.0
        %4724 = vmatprep.mubr.f32.mxu0 0.0
        %4725 = vmatmul.mubr.f32.gmra.mrb[0].mxu0 %v4588
        %v4726 = vpop.f32.mrb[0].mxu0
        %v4727 = vadd.f32 %v4657, %v4726
        %v4728 = vpop.f32.mrb[0].mxu0
        %4729 = vdwg.mxu0
        %vm4730 = vcmp.ge.f32.partialorder %v4727, 0.0
        %v4731 = vmul.f32 %v4727, 0.01
        %v4732 = vsel %vm4730, %v4727, %v4731
        %vm4733 = vcmask 253952
        %4734 = vst.msk [vmem:[%s638] sm:$0x1] %vm4733, %v4732
        %s4735 = sand.u32 %s447, 1
        %s4736 = scalar_lea.sflag [#allocation4], %s4735
        %s4737 = sand.u32 %s447, 1
        %s4738 = scalar_lea.vmem [#allocation8], %s4737
        // Predicated region
        $region109: #{sn_patch_discriminator.1} parent=95 // pred_check
          %p4739 = pneg %p457
        $region110: #{sn_patch_discriminator.1} parent=95 // pred_check_branch
          %4741 = sbr.rel (%p4739) target = $region112
        $region111: #{sn_patch_discriminator.1} parent=95 // pred_region
          %s4743 = ssub.s32 16, 16
          %4744 = vsyncadd %s4736, %s4743
          %s4745 = smul.addr %s35, 16
          %s4746 = scalar_lea.hbm %s19, %s4745
          %s4748 = sshll.u32 %s4738, 4
          %s4749 = int_to_ptr.vmem [resolvable:$true] %s4748
          %4751 = dma.vmem_to_hbm [thread:$0]  %s4749, 16, %s4746, %s4736
        $region112: #{sn_patch_discriminator.1} parent=95 // pred_fallthru
          _
      $region96: #{sn_patch_discriminator.1} parent=5 // pred_fallthru
        _
      %p4752 = scmp.le.s32.totalorder 2, %s30
      // Predicated region
      $region113: #{sn_patch_discriminator.1} parent=5 // pred_check
        %p4753 = pneg %p4752
      $region114: #{sn_patch_discriminator.1} parent=5 // pred_check_branch
        %4755 = sbr.rel (%p4753) target = $region116
      $region115: #{sn_patch_discriminator.1} parent=5 // pred_region
        %s4756 = ssub.s32 %s30, 2
        // Predicated region
        $region117: #{sn_patch_discriminator.1} parent=115 // pred_check
          %p4757 = pneg %p463
        $region118: #{sn_patch_discriminator.1} parent=115 // pred_check_branch
          %4759 = sbr.rel (%p4757) target = $region120
        $region119: #{sn_patch_discriminator.1} parent=115 // pred_region
          %s4760 = sand.u32 %s448, 1
          %s4761 = scalar_lea.sflag [#allocation4], %s4760
          %s4762 = sand.u32 %s448, 1
          %s4763 = scalar_lea.vmem [#allocation8], %s4762
          %4764 = dma.done %s4761, 16
        $region120: #{sn_patch_discriminator.1} parent=115 // pred_fallthru
          _
      $region116: #{sn_patch_discriminator.1} parent=5 // pred_fallthru
        _
    $region6: #{sn_patch_discriminator.1} parent=1 // loop_footer
      %s34 = sadd.s32 1, %s30
    $region7: #{sn_patch_discriminator.1} parent=1 // loop_footer_branch
      %29 = sbr.rel target = $region3
    $region8: #{sn_patch_discriminator.1} parent=1 // loop_exit
      _
    %4765 = vsyncpa [#allocation3], 1
    %s4766 = scalar_lea.sflag [#allocation3], 1
    %4767 = vsyncpa %s4766, 1
    %4768 = vsyncpa [#allocation6], 1
    %4769 = vsyncpa [#allocation4], 1
    %s4770 = scalar_lea.sflag [#allocation4], 1
    %4771 = vsyncpa %s4770, 1

</llo_original>
